<compile_context>
chip_gen: v6e
topology: v6e:2x2x1
jax: 0.10.0
libtpu: 0.0.40
codegen_flags: <defaults>
</compile_context>

<pallas_src>
import numpy as np

import jax
import jax.numpy as jnp
from jax.experimental import pallas as pl
from jax.experimental.pallas import tpu as pltpu


# --------------------------------- the kernel ---------------------------------

def _lenet_kernel(x_ref, t1_ref, b1_ref, t2_ref, b2_ref,
                  w3_ref, b3_ref, w4_ref, b4_ref, w5_ref, b5_ref,
                  o_ref, p1_ref, p2_ref):
    f32 = jnp.float32
    bf16 = jnp.bfloat16
    TB = x_ref.shape[0]

    t1 = t1_ref[...]                      # [168, 336]  bf16
    b1 = b1_ref[...]                      # [1, 336]    f32
    t2 = t2_ref[...]                      # [1008, 320] bf16
    b2 = b2_ref[...]                      # [1, 320]    f32

    # --- conv1 (1->6, 5x5, pad=2) + ReLU + row half of AvgPool2d(2,2) --------
    # One dot per output row pair ph: LHS = 6 consecutive input image rows
    # (zero-extended at the border == the padding), RHS produces both rows of
    # the pair side by side in lanes.
    for ph in range(14):
        r_lo, r_hi = 2 * ph - 2, 2 * ph + 4           # wanted input rows
        lo, hi = max(r_lo, 0), min(r_hi, 28)
        win = x_ref[:, lo * 28:hi * 28].astype(bf16)  # [TB, <=168]
        parts = []
        if lo > r_lo:                                  # top padding rows
            parts.append(jnp.zeros((TB, (lo - r_lo) * 28), bf16))
        parts.append(win)
        if hi < r_hi:                                  # bottom padding rows
            parts.append(jnp.zeros((TB, (r_hi - hi) * 28), bf16))
        if len(parts) > 1:
            win = jnp.concatenate(parts, axis=1)       # [TB, 168]
        y = jnp.dot(win, t1, preferred_element_type=f32)   # [TB, 336]
        y = jnp.maximum(y + b1, 0.0)
        # rows 2*ph / 2*ph+1 are the two lane halves -> pool row average.
        p1_ref[:, ph * 168:(ph + 1) * 168] = 0.5 * (y[:, :168] + y[:, 168:])

    # --- conv2 (6->16, 5x5, valid) + ReLU + row half of pool2 ----------------
    # pool1's column average is folded into t2, so conv2 reads 6 consecutive
    # row-pooled (column-unpooled) pool1 rows per output row pair.
    for ph in range(5):
        win = p1_ref[:, (2 * ph) * 168:(2 * ph + 6) * 168].astype(bf16)  # [TB,1008]
        y = jnp.dot(win, t2, preferred_element_type=f32)                 # [TB,320]
        y = jnp.maximum(y + b2, 0.0)
        p2_ref[:, ph * 160:(ph + 1) * 160] = 0.5 * (y[:, :160] + y[:, 160:])

    # --- fc1 (+ folded pool2 column average) -> sigmoid -> fc2 -> sigmoid -> fc3
    h = jnp.dot(p2_ref[...].astype(bf16), w3_ref[...],
                preferred_element_type=f32) + b3_ref[...]
    h = jax.nn.sigmoid(h)
    h = jnp.dot(h.astype(bf16), w4_ref[...],
                preferred_element_type=f32) + b4_ref[...]
    h = jax.nn.sigmoid(h)
    o_ref[...] = jnp.dot(h.astype(bf16), w5_ref[...],
                         preferred_element_type=f32) + b5_ref[...]


# ------------------------- one-time weight repacking ---------------------------

def prepare_params(params):
    """Repack PyTorch-layout LeNet weights into the fused matrices used by the
    kernel.  Pure numpy, call ONCE outside the jitted forward."""
    w1 = np.asarray(params["conv1_w"], np.float32)     # [6, 1, 5, 5]
    b1 = np.asarray(params["conv1_b"], np.float32)     # [6]
    w2 = np.asarray(params["conv2_w"], np.float32)     # [16, 6, 5, 5]
    b2 = np.asarray(params["conv2_b"], np.float32)     # [16]
    f1 = np.asarray(params["fc1_w"], np.float32)       # [400, 120]
    f2 = np.asarray(params["fc2_w"], np.float32)       # [120, 84]
    f3 = np.asarray(params["fc3_w"], np.float32)       # [84, 10]

    # conv1 row-pair matrix: rows (dp, wi), cols (parity, c1, ow).
    t1 = np.zeros((6, 28, 2, 6, 28), np.float32)
    for dp in range(6):
        for p in range(2):
            i = dp - p
            if not 0 <= i <= 4:
                continue
            for ow in range(28):
                for j in range(5):
                    wi = ow + j - 2
                    if 0 <= wi < 28:
                        t1[dp, wi, p, :, ow] = w1[:, 0, i, j]
    t1 = t1.reshape(168, 336)
    b1p = np.tile(np.repeat(b1, 28), 2)[None, :]                  # [1, 336]

    # conv2 row-pair matrix with pool1's column average folded in:
    # rows (dp, c1, ow1 unpooled), cols (parity, c2, ow2).
    t2 = np.zeros((6, 6, 28, 2, 16, 10), np.float32)
    for dp in range(6):
        for p2 in range(2):
            i = dp - p2
            if not 0 <= i <= 4:
                continue
            for ow1 in range(28):
                for ow2 in range(10):
                    j = ow1 // 2 - ow2
                    if 0 <= j <= 4:
                        t2[dp, :, ow1, p2, :, ow2] = 0.5 * w2[:, :, i, j].T
    t2 = t2.reshape(1008, 320)
    b2p = np.tile(np.repeat(b2, 10), 2)[None, :]                  # [1, 320]

    # fc1 with pool2's column average folded in; kernel p2 lanes are
    # (ph2, c2, ow2) with ow2 the un-column-pooled conv2 column.
    w3 = np.zeros((5, 16, 10, 120), np.float32)
    for ph2 in range(5):
        for c2 in range(16):
            for ow2 in range(10):
                w3[ph2, c2, ow2] = 0.5 * f1[c2 * 25 + ph2 * 5 + ow2 // 2]
    w3 = w3.reshape(800, 120)

    bf16 = jnp.bfloat16
    return {
        "t1": jnp.asarray(t1, bf16), "b1": jnp.asarray(b1p),
        "t2": jnp.asarray(t2, bf16), "b2": jnp.asarray(b2p),
        "w3": jnp.asarray(w3, bf16),
        "b3": jnp.asarray(np.asarray(params["fc1_b"], np.float32)[None, :]),
        "w4": jnp.asarray(f2, bf16),
        "b4": jnp.asarray(np.asarray(params["fc2_b"], np.float32)[None, :]),
        "w5": jnp.asarray(f3, bf16),
        "b5": jnp.asarray(np.asarray(params["fc3_b"], np.float32)[None, :]),
    }


# --------------------------------- wrapper -------------------------------------

def lenet_forward_impl(packed, img):
    B = img.shape[0]
    TB = B if B <= 128 else 128                 # batch tile (fits every gen)
    steps = pl.cdiv(B, TB)
    Bp = steps * TB

    x = img.reshape(B, 28 * 28).astype(jnp.float32)   # free, contiguous reshape
    if Bp != B:
        x = jnp.pad(x, ((0, Bp - B), (0, 0)))

    def const_spec(shape):
        return pl.BlockSpec(shape, lambda b, _s=len(shape): (0,) * _s)

    out = pl.pallas_call(
        _lenet_kernel,
        out_shape=jax.ShapeDtypeStruct((Bp, 10), jnp.float32),
        grid=(steps,),
        in_specs=[
            pl.BlockSpec((TB, 784), lambda b: (b, 0)),      # image tile
            const_spec((168, 336)), const_spec((1, 336)),   # conv1 pair mat
            const_spec((1008, 320)), const_spec((1, 320)),  # conv2(+pool1) mat
            const_spec((800, 120)), const_spec((1, 120)),   # fc1(+pool2)
            const_spec((120, 84)), const_spec((1, 84)),     # fc2
            const_spec((84, 10)), const_spec((1, 10)),      # fc3
        ],
        out_specs=pl.BlockSpec((TB, 10), lambda b: (b, 0)),
        scratch_shapes=[
            pltpu.VMEM((TB, 14 * 168), jnp.float32),   # row-pooled relu(conv1)
            pltpu.VMEM((TB, 5 * 160), jnp.float32),    # row-pooled relu(conv2)
        ],
        compiler_params=pltpu.CompilerParams(
            dimension_semantics=("parallel",)),
    )(x, packed["t1"], packed["b1"], packed["t2"], packed["b2"],
      packed["w3"], packed["b3"], packed["w4"], packed["b4"],
      packed["w5"], packed["b5"])
    return out[:B]


lenet_forward = jax.jit(lenet_forward_impl)


# ------------------------------ params & reference ------------------------------

def init_params(key):
    def uniform(key, shape, fan_in):
        bound = 1.0 / jnp.sqrt(float(fan_in))
        return jax.random.uniform(key, shape, jnp.float32, -bound, bound)

    ks = jax.random.split(key, 10)
    p = {}
    p["conv1_w"] = uniform(ks[0], (6, 1, 5, 5), 1 * 5 * 5)
    p["conv1_b"] = uniform(ks[1], (6,), 1 * 5 * 5)
    p["conv2_w"] = uniform(ks[2], (16, 6, 5, 5), 6 * 5 * 5)
    p["conv2_b"] = uniform(ks[3], (16,), 6 * 5 * 5)
    p["fc1_w"] = uniform(ks[4], (400, 120), 400)
    p["fc1_b"] = uniform(ks[5], (120,), 400)
    p["fc2_w"] = uniform(ks[6], (120, 84), 120)
    p["fc2_b"] = uniform(ks[7], (84,), 120)
    p["fc3_w"] = uniform(ks[8], (84, 10), 84)
    p["fc3_b"] = uniform(ks[9], (10,), 84)
    return p


def lenet_reference(params, img):
    """Pure-JAX reference mirroring the PyTorch module, for validation."""
    def conv(x, w, b, pad):
        y = jax.lax.conv_general_dilated(
            x, w, window_strides=(1, 1),
            padding=[(pad, pad), (pad, pad)],
            dimension_numbers=("NCHW", "OIHW", "NCHW"))
        return jax.nn.relu(y + b[None, :, None, None])

    def pool(x):
        B, C, H, W = x.shape
        return x.reshape(B, C, H // 2, 2, W // 2, 2).mean(axis=(3, 5))

    x = pool(conv(img, params["conv1_w"], params["conv1_b"], 2))
    x = pool(conv(x, params["conv2_w"], params["conv2_b"], 0))
    h = x.reshape(img.shape[0], -1)
    h = jax.nn.sigmoid(h @ params["fc1_w"] + params["fc1_b"])
    h = jax.nn.sigmoid(h @ params["fc2_w"] + params["fc2_b"])
    return h @ params["fc3_w"] + params["fc3_b"]


if __name__ == "__main__":
    key = jax.random.PRNGKey(0)
    k_param, k_img = jax.random.split(key)
    params = init_params(k_param)
    # LeNet's fc layer (16*5*5 = 400) implies 28x28 single-channel input.
    img = jax.random.normal(k_img, (8, 1, 28, 28), jnp.float32)

    packed = prepare_params(params)            # one-time weight repacking
    out = jax.block_until_ready(lenet_forward(packed, img))
    assert out.shape == (8, 10) and out.dtype == jnp.float32

    ref = lenet_reference(params, img)
    err = float(jnp.max(jnp.abs(out - ref)))
    # bf16 MXU operands with f32 accumulation -> slightly looser tolerance.
    assert jnp.allclose(out, ref, rtol=2e-2, atol=2e-2), \
        f"mismatch vs JAX reference (max abs err {err:.5f})"
    print("KERNEL_OK")
</pallas_src>

<mosaic_0001>
module attributes {stable_mosaic.version = 11 : i64} {
  func.func @_lenet_kernel(%arg0: i32, %arg1: memref<8x784xf32, #tpu.memory_space<vmem>>, %arg2: memref<168x336xbf16, #tpu.memory_space<vmem>>, %arg3: memref<1x336xf32, #tpu.memory_space<vmem>>, %arg4: memref<1008x320xbf16, #tpu.memory_space<vmem>>, %arg5: memref<1x320xf32, #tpu.memory_space<vmem>>, %arg6: memref<800x120xbf16, #tpu.memory_space<vmem>>, %arg7: memref<1x120xf32, #tpu.memory_space<vmem>>, %arg8: memref<120x84xbf16, #tpu.memory_space<vmem>>, %arg9: memref<1x84xf32, #tpu.memory_space<vmem>>, %arg10: memref<84x10xbf16, #tpu.memory_space<vmem>>, %arg11: memref<1x10xf32, #tpu.memory_space<vmem>>, %arg12: memref<8x10xf32, #tpu.memory_space<vmem>>, %arg13: memref<8x2352xf32, #tpu.memory_space<vmem>>, %arg14: memref<8x800xf32, #tpu.memory_space<vmem>>) attributes {dimension_semantics = [#tpu.dimension_semantics<parallel>], iteration_bounds = array<i64: 1>, scalar_prefetch = 0 : i64, scratch_operands = 2 : i64, tpu.core_type = #tpu.core_type<tc>, window_params = [{transform_indices = @transform_0, window_bounds = array<i64: 8, 784>}, {pipeline_mode = #tpu.pipeline_mode<synchronous>, transform_indices = @transform_1, window_bounds = array<i64: 168, 336>}, {pipeline_mode = #tpu.pipeline_mode<synchronous>, transform_indices = @transform_2, window_bounds = array<i64: 1, 336>}, {pipeline_mode = #tpu.pipeline_mode<synchronous>, transform_indices = @transform_3, window_bounds = array<i64: 1008, 320>}, {pipeline_mode = #tpu.pipeline_mode<synchronous>, transform_indices = @transform_4, window_bounds = array<i64: 1, 320>}, {pipeline_mode = #tpu.pipeline_mode<synchronous>, transform_indices = @transform_5, window_bounds = array<i64: 800, 120>}, {pipeline_mode = #tpu.pipeline_mode<synchronous>, transform_indices = @transform_6, window_bounds = array<i64: 1, 120>}, {pipeline_mode = #tpu.pipeline_mode<synchronous>, transform_indices = @transform_7, window_bounds = array<i64: 120, 84>}, {pipeline_mode = #tpu.pipeline_mode<synchronous>, transform_indices = @transform_8, window_bounds = array<i64: 1, 84>}, {pipeline_mode = #tpu.pipeline_mode<synchronous>, transform_indices = @transform_9, window_bounds = array<i64: 84, 10>}, {pipeline_mode = #tpu.pipeline_mode<synchronous>, transform_indices = @transform_10, window_bounds = array<i64: 1, 10>}, {transform_indices = @transform_11, window_bounds = array<i64: 8, 10>}]} {
    %c0 = arith.constant 0 : index
    %c0_0 = arith.constant 0 : index
    %0 = vector.load %arg2[%c0, %c0_0] : memref<168x336xbf16, #tpu.memory_space<vmem>>, vector<168x336xbf16>
    %c0_1 = arith.constant 0 : index
    %c0_2 = arith.constant 0 : index
    %1 = vector.load %arg3[%c0_1, %c0_2] : memref<1x336xf32, #tpu.memory_space<vmem>>, vector<1x336xf32>
    %c0_3 = arith.constant 0 : index
    %c0_4 = arith.constant 0 : index
    %2 = vector.load %arg4[%c0_3, %c0_4] : memref<1008x320xbf16, #tpu.memory_space<vmem>>, vector<1008x320xbf16>
    %c0_5 = arith.constant 0 : index
    %c0_6 = arith.constant 0 : index
    %3 = vector.load %arg5[%c0_5, %c0_6] : memref<1x320xf32, #tpu.memory_space<vmem>>, vector<1x320xf32>
    %c0_7 = arith.constant 0 : index
    %c0_8 = arith.constant 0 : index
    %4 = vector.load %arg1[%c0_7, %c0_8] : memref<8x784xf32, #tpu.memory_space<vmem>>, vector<8x112xf32>
    %5 = arith.truncf %4 : vector<8x112xf32> to vector<8x112xbf16>
    %cst = arith.constant 0.000000e+00 : bf16
    %6 = vector.broadcast %cst : bf16 to vector<8x56xbf16>
    %7 = tpu.concatenate %6, %5 in 1 : vector<8x56xbf16>, vector<8x112xbf16> -> vector<8x168xbf16>
    %cst_9 = arith.constant dense<0.000000e+00> : vector<8x336xf32>
    %8 = tpu.matmul %7, %0, %cst_9 {dimension_numbers = #tpu.dot_dimension_numbers<[1], [0], [0], [1], [0, 0, 1, 1], [], []>} : vector<8x168xbf16>, vector<168x336xbf16>, vector<8x336xf32> -> vector<8x336xf32>
    %9 = vector.broadcast %1 : vector<1x336xf32> to vector<8x336xf32>
    %10 = arith.addf %8, %9 : vector<8x336xf32>
    %cst_10 = arith.constant 0.000000e+00 : f32
    %11 = vector.broadcast %cst_10 : f32 to vector<8x336xf32>
    %12 = arith.maximumf %10, %11 : vector<8x336xf32>
    %13 = vector.extract_strided_slice %12 {offsets = [0, 0], sizes = [8, 168], strides = [1, 1]} : vector<8x336xf32> to vector<8x168xf32>
    %14 = vector.extract_strided_slice %12 {offsets = [0, 168], sizes = [8, 168], strides = [1, 1]} : vector<8x336xf32> to vector<8x168xf32>
    %15 = arith.addf %13, %14 : vector<8x168xf32>
    %cst_11 = arith.constant 5.000000e-01 : f32
    %16 = vector.broadcast %cst_11 : f32 to vector<8x168xf32>
    %17 = arith.mulf %16, %15 : vector<8x168xf32>
    %c0_12 = arith.constant 0 : index
    %c0_13 = arith.constant 0 : index
    %18 = vector.load %arg13[%c0_12, %c0_13] : memref<8x2352xf32, #tpu.memory_space<vmem>>, vector<8x168xf32>
    tpu.vector_store %arg13[%c0_12, %c0_13], %17 {strides = array<i32>} : memref<8x2352xf32, #tpu.memory_space<vmem>>, vector<8x168xf32>,
    %c0_14 = arith.constant 0 : index
    %c0_15 = arith.constant 0 : index
    %19 = vector.load %arg1[%c0_14, %c0_15] : memref<8x784xf32, #tpu.memory_space<vmem>>, vector<8x168xf32>
    %20 = arith.truncf %19 : vector<8x168xf32> to vector<8x168xbf16>
    %cst_16 = arith.constant dense<0.000000e+00> : vector<8x336xf32>
    %21 = tpu.matmul %20, %0, %cst_16 {dimension_numbers = #tpu.dot_dimension_numbers<[1], [0], [0], [1], [0, 0, 1, 1], [], []>} : vector<8x168xbf16>, vector<168x336xbf16>, vector<8x336xf32> -> vector<8x336xf32>
    %22 = vector.broadcast %1 : vector<1x336xf32> to vector<8x336xf32>
    %23 = arith.addf %21, %22 : vector<8x336xf32>
    %cst_17 = arith.constant 0.000000e+00 : f32
    %24 = vector.broadcast %cst_17 : f32 to vector<8x336xf32>
    %25 = arith.maximumf %23, %24 : vector<8x336xf32>
    %26 = vector.extract_strided_slice %25 {offsets = [0, 0], sizes = [8, 168], strides = [1, 1]} : vector<8x336xf32> to vector<8x168xf32>
    %27 = vector.extract_strided_slice %25 {offsets = [0, 168], sizes = [8, 168], strides = [1, 1]} : vector<8x336xf32> to vector<8x168xf32>
    %28 = arith.addf %26, %27 : vector<8x168xf32>
    %cst_18 = arith.constant 5.000000e-01 : f32
    %29 = vector.broadcast %cst_18 : f32 to vector<8x168xf32>
    %30 = arith.mulf %29, %28 : vector<8x168xf32>
    %c0_19 = arith.constant 0 : index
    %c168 = arith.constant 168 : index
    %31 = vector.load %arg13[%c0_19, %c168] : memref<8x2352xf32, #tpu.memory_space<vmem>>, vector<8x168xf32>
    tpu.vector_store %arg13[%c0_19, %c168], %30 {strides = array<i32>} : memref<8x2352xf32, #tpu.memory_space<vmem>>, vector<8x168xf32>,
    %c0_20 = arith.constant 0 : index
    %c56 = arith.constant 56 : index
    %32 = vector.load %arg1[%c0_20, %c56] : memref<8x784xf32, #tpu.memory_space<vmem>>, vector<8x168xf32>
    %33 = arith.truncf %32 : vector<8x168xf32> to vector<8x168xbf16>
    %cst_21 = arith.constant dense<0.000000e+00> : vector<8x336xf32>
    %34 = tpu.matmul %33, %0, %cst_21 {dimension_numbers = #tpu.dot_dimension_numbers<[1], [0], [0], [1], [0, 0, 1, 1], [], []>} : vector<8x168xbf16>, vector<168x336xbf16>, vector<8x336xf32> -> vector<8x336xf32>
    %35 = vector.broadcast %1 : vector<1x336xf32> to vector<8x336xf32>
    %36 = arith.addf %34, %35 : vector<8x336xf32>
    %cst_22 = arith.constant 0.000000e+00 : f32
    %37 = vector.broadcast %cst_22 : f32 to vector<8x336xf32>
    %38 = arith.maximumf %36, %37 : vector<8x336xf32>
    %39 = vector.extract_strided_slice %38 {offsets = [0, 0], sizes = [8, 168], strides = [1, 1]} : vector<8x336xf32> to vector<8x168xf32>
    %40 = vector.extract_strided_slice %38 {offsets = [0, 168], sizes = [8, 168], strides = [1, 1]} : vector<8x336xf32> to vector<8x168xf32>
    %41 = arith.addf %39, %40 : vector<8x168xf32>
    %cst_23 = arith.constant 5.000000e-01 : f32
    %42 = vector.broadcast %cst_23 : f32 to vector<8x168xf32>
    %43 = arith.mulf %42, %41 : vector<8x168xf32>
    %c0_24 = arith.constant 0 : index
    %c336 = arith.constant 336 : index
    %44 = vector.load %arg13[%c0_24, %c336] : memref<8x2352xf32, #tpu.memory_space<vmem>>, vector<8x168xf32>
    tpu.vector_store %arg13[%c0_24, %c336], %43 {strides = array<i32>} : memref<8x2352xf32, #tpu.memory_space<vmem>>, vector<8x168xf32>,
    %c0_25 = arith.constant 0 : index
    %c112 = arith.constant 112 : index
    %45 = vector.load %arg1[%c0_25, %c112] : memref<8x784xf32, #tpu.memory_space<vmem>>, vector<8x168xf32>
    %46 = arith.truncf %45 : vector<8x168xf32> to vector<8x168xbf16>
    %cst_26 = arith.constant dense<0.000000e+00> : vector<8x336xf32>
    %47 = tpu.matmul %46, %0, %cst_26 {dimension_numbers = #tpu.dot_dimension_numbers<[1], [0], [0], [1], [0, 0, 1, 1], [], []>} : vector<8x168xbf16>, vector<168x336xbf16>, vector<8x336xf32> -> vector<8x336xf32>
    %48 = vector.broadcast %1 : vector<1x336xf32> to vector<8x336xf32>
    %49 = arith.addf %47, %48 : vector<8x336xf32>
    %cst_27 = arith.constant 0.000000e+00 : f32
    %50 = vector.broadcast %cst_27 : f32 to vector<8x336xf32>
    %51 = arith.maximumf %49, %50 : vector<8x336xf32>
    %52 = vector.extract_strided_slice %51 {offsets = [0, 0], sizes = [8, 168], strides = [1, 1]} : vector<8x336xf32> to vector<8x168xf32>
    %53 = vector.extract_strided_slice %51 {offsets = [0, 168], sizes = [8, 168], strides = [1, 1]} : vector<8x336xf32> to vector<8x168xf32>
    %54 = arith.addf %52, %53 : vector<8x168xf32>
    %cst_28 = arith.constant 5.000000e-01 : f32
    %55 = vector.broadcast %cst_28 : f32 to vector<8x168xf32>
    %56 = arith.mulf %55, %54 : vector<8x168xf32>
    %c0_29 = arith.constant 0 : index
    %c504 = arith.constant 504 : index
    %57 = vector.load %arg13[%c0_29, %c504] : memref<8x2352xf32, #tpu.memory_space<vmem>>, vector<8x168xf32>
    tpu.vector_store %arg13[%c0_29, %c504], %56 {strides = array<i32>} : memref<8x2352xf32, #tpu.memory_space<vmem>>, vector<8x168xf32>,
    %c0_30 = arith.constant 0 : index
    %c168_31 = arith.constant 168 : index
    %58 = vector.load %arg1[%c0_30, %c168_31] : memref<8x784xf32, #tpu.memory_space<vmem>>, vector<8x168xf32>
    %59 = arith.truncf %58 : vector<8x168xf32> to vector<8x168xbf16>
    %cst_32 = arith.constant dense<0.000000e+00> : vector<8x336xf32>
    %60 = tpu.matmul %59, %0, %cst_32 {dimension_numbers = #tpu.dot_dimension_numbers<[1], [0], [0], [1], [0, 0, 1, 1], [], []>} : vector<8x168xbf16>, vector<168x336xbf16>, vector<8x336xf32> -> vector<8x336xf32>
    %61 = vector.broadcast %1 : vector<1x336xf32> to vector<8x336xf32>
    %62 = arith.addf %60, %61 : vector<8x336xf32>
    %cst_33 = arith.constant 0.000000e+00 : f32
    %63 = vector.broadcast %cst_33 : f32 to vector<8x336xf32>
    %64 = arith.maximumf %62, %63 : vector<8x336xf32>
    %65 = vector.extract_strided_slice %64 {offsets = [0, 0], sizes = [8, 168], strides = [1, 1]} : vector<8x336xf32> to vector<8x168xf32>
    %66 = vector.extract_strided_slice %64 {offsets = [0, 168], sizes = [8, 168], strides = [1, 1]} : vector<8x336xf32> to vector<8x168xf32>
    %67 = arith.addf %65, %66 : vector<8x168xf32>
    %cst_34 = arith.constant 5.000000e-01 : f32
    %68 = vector.broadcast %cst_34 : f32 to vector<8x168xf32>
    %69 = arith.mulf %68, %67 : vector<8x168xf32>
    %c0_35 = arith.constant 0 : index
    %c672 = arith.constant 672 : index
    %70 = vector.load %arg13[%c0_35, %c672] : memref<8x2352xf32, #tpu.memory_space<vmem>>, vector<8x168xf32>
    tpu.vector_store %arg13[%c0_35, %c672], %69 {strides = array<i32>} : memref<8x2352xf32, #tpu.memory_space<vmem>>, vector<8x168xf32>,
    %c0_36 = arith.constant 0 : index
    %c224 = arith.constant 224 : index
    %71 = vector.load %arg1[%c0_36, %c224] : memref<8x784xf32, #tpu.memory_space<vmem>>, vector<8x168xf32>
    %72 = arith.truncf %71 : vector<8x168xf32> to vector<8x168xbf16>
    %cst_37 = arith.constant dense<0.000000e+00> : vector<8x336xf32>
    %73 = tpu.matmul %72, %0, %cst_37 {dimension_numbers = #tpu.dot_dimension_numbers<[1], [0], [0], [1], [0, 0, 1, 1], [], []>} : vector<8x168xbf16>, vector<168x336xbf16>, vector<8x336xf32> -> vector<8x336xf32>
    %74 = vector.broadcast %1 : vector<1x336xf32> to vector<8x336xf32>
    %75 = arith.addf %73, %74 : vector<8x336xf32>
    %cst_38 = arith.constant 0.000000e+00 : f32
    %76 = vector.broadcast %cst_38 : f32 to vector<8x336xf32>
    %77 = arith.maximumf %75, %76 : vector<8x336xf32>
    %78 = vector.extract_strided_slice %77 {offsets = [0, 0], sizes = [8, 168], strides = [1, 1]} : vector<8x336xf32> to vector<8x168xf32>
    %79 = vector.extract_strided_slice %77 {offsets = [0, 168], sizes = [8, 168], strides = [1, 1]} : vector<8x336xf32> to vector<8x168xf32>
    %80 = arith.addf %78, %79 : vector<8x168xf32>
    %cst_39 = arith.constant 5.000000e-01 : f32
    %81 = vector.broadcast %cst_39 : f32 to vector<8x168xf32>
    %82 = arith.mulf %81, %80 : vector<8x168xf32>
    %c0_40 = arith.constant 0 : index
    %c840 = arith.constant 840 : index
    %83 = vector.load %arg13[%c0_40, %c840] : memref<8x2352xf32, #tpu.memory_space<vmem>>, vector<8x168xf32>
    tpu.vector_store %arg13[%c0_40, %c840], %82 {strides = array<i32>} : memref<8x2352xf32, #tpu.memory_space<vmem>>, vector<8x168xf32>,
    %c0_41 = arith.constant 0 : index
    %c280 = arith.constant 280 : index
    %84 = vector.load %arg1[%c0_41, %c280] : memref<8x784xf32, #tpu.memory_space<vmem>>, vector<8x168xf32>
    %85 = arith.truncf %84 : vector<8x168xf32> to vector<8x168xbf16>
    %cst_42 = arith.constant dense<0.000000e+00> : vector<8x336xf32>
    %86 = tpu.matmul %85, %0, %cst_42 {dimension_numbers = #tpu.dot_dimension_numbers<[1], [0], [0], [1], [0, 0, 1, 1], [], []>} : vector<8x168xbf16>, vector<168x336xbf16>, vector<8x336xf32> -> vector<8x336xf32>
    %87 = vector.broadcast %1 : vector<1x336xf32> to vector<8x336xf32>
    %88 = arith.addf %86, %87 : vector<8x336xf32>
    %cst_43 = arith.constant 0.000000e+00 : f32
    %89 = vector.broadcast %cst_43 : f32 to vector<8x336xf32>
    %90 = arith.maximumf %88, %89 : vector<8x336xf32>
    %91 = vector.extract_strided_slice %90 {offsets = [0, 0], sizes = [8, 168], strides = [1, 1]} : vector<8x336xf32> to vector<8x168xf32>
    %92 = vector.extract_strided_slice %90 {offsets = [0, 168], sizes = [8, 168], strides = [1, 1]} : vector<8x336xf32> to vector<8x168xf32>
    %93 = arith.addf %91, %92 : vector<8x168xf32>
    %cst_44 = arith.constant 5.000000e-01 : f32
    %94 = vector.broadcast %cst_44 : f32 to vector<8x168xf32>
    %95 = arith.mulf %94, %93 : vector<8x168xf32>
    %c0_45 = arith.constant 0 : index
    %c1008 = arith.constant 1008 : index
    %96 = vector.load %arg13[%c0_45, %c1008] : memref<8x2352xf32, #tpu.memory_space<vmem>>, vector<8x168xf32>
    tpu.vector_store %arg13[%c0_45, %c1008], %95 {strides = array<i32>} : memref<8x2352xf32, #tpu.memory_space<vmem>>, vector<8x168xf32>,
    %c0_46 = arith.constant 0 : index
    %c336_47 = arith.constant 336 : index
    %97 = vector.load %arg1[%c0_46, %c336_47] : memref<8x784xf32, #tpu.memory_space<vmem>>, vector<8x168xf32>
    %98 = arith.truncf %97 : vector<8x168xf32> to vector<8x168xbf16>
    %cst_48 = arith.constant dense<0.000000e+00> : vector<8x336xf32>
    %99 = tpu.matmul %98, %0, %cst_48 {dimension_numbers = #tpu.dot_dimension_numbers<[1], [0], [0], [1], [0, 0, 1, 1], [], []>} : vector<8x168xbf16>, vector<168x336xbf16>, vector<8x336xf32> -> vector<8x336xf32>
    %100 = vector.broadcast %1 : vector<1x336xf32> to vector<8x336xf32>
    %101 = arith.addf %99, %100 : vector<8x336xf32>
    %cst_49 = arith.constant 0.000000e+00 : f32
    %102 = vector.broadcast %cst_49 : f32 to vector<8x336xf32>
    %103 = arith.maximumf %101, %102 : vector<8x336xf32>
    %104 = vector.extract_strided_slice %103 {offsets = [0, 0], sizes = [8, 168], strides = [1, 1]} : vector<8x336xf32> to vector<8x168xf32>
    %105 = vector.extract_strided_slice %103 {offsets = [0, 168], sizes = [8, 168], strides = [1, 1]} : vector<8x336xf32> to vector<8x168xf32>
    %106 = arith.addf %104, %105 : vector<8x168xf32>
    %cst_50 = arith.constant 5.000000e-01 : f32
    %107 = vector.broadcast %cst_50 : f32 to vector<8x168xf32>
    %108 = arith.mulf %107, %106 : vector<8x168xf32>
    %c0_51 = arith.constant 0 : index
    %c1176 = arith.constant 1176 : index
    %109 = vector.load %arg13[%c0_51, %c1176] : memref<8x2352xf32, #tpu.memory_space<vmem>>, vector<8x168xf32>
    tpu.vector_store %arg13[%c0_51, %c1176], %108 {strides = array<i32>} : memref<8x2352xf32, #tpu.memory_space<vmem>>, vector<8x168xf32>,
    %c0_52 = arith.constant 0 : index
    %c392 = arith.constant 392 : index
    %110 = vector.load %arg1[%c0_52, %c392] : memref<8x784xf32, #tpu.memory_space<vmem>>, vector<8x168xf32>
    %111 = arith.truncf %110 : vector<8x168xf32> to vector<8x168xbf16>
    %cst_53 = arith.constant dense<0.000000e+00> : vector<8x336xf32>
    %112 = tpu.matmul %111, %0, %cst_53 {dimension_numbers = #tpu.dot_dimension_numbers<[1], [0], [0], [1], [0, 0, 1, 1], [], []>} : vector<8x168xbf16>, vector<168x336xbf16>, vector<8x336xf32> -> vector<8x336xf32>
    %113 = vector.broadcast %1 : vector<1x336xf32> to vector<8x336xf32>
    %114 = arith.addf %112, %113 : vector<8x336xf32>
    %cst_54 = arith.constant 0.000000e+00 : f32
    %115 = vector.broadcast %cst_54 : f32 to vector<8x336xf32>
    %116 = arith.maximumf %114, %115 : vector<8x336xf32>
    %117 = vector.extract_strided_slice %116 {offsets = [0, 0], sizes = [8, 168], strides = [1, 1]} : vector<8x336xf32> to vector<8x168xf32>
    %118 = vector.extract_strided_slice %116 {offsets = [0, 168], sizes = [8, 168], strides = [1, 1]} : vector<8x336xf32> to vector<8x168xf32>
    %119 = arith.addf %117, %118 : vector<8x168xf32>
    %cst_55 = arith.constant 5.000000e-01 : f32
    %120 = vector.broadcast %cst_55 : f32 to vector<8x168xf32>
    %121 = arith.mulf %120, %119 : vector<8x168xf32>
    %c0_56 = arith.constant 0 : index
    %c1344 = arith.constant 1344 : index
    %122 = vector.load %arg13[%c0_56, %c1344] : memref<8x2352xf32, #tpu.memory_space<vmem>>, vector<8x168xf32>
    tpu.vector_store %arg13[%c0_56, %c1344], %121 {strides = array<i32>} : memref<8x2352xf32, #tpu.memory_space<vmem>>, vector<8x168xf32>,
    %c0_57 = arith.constant 0 : index
    %c448 = arith.constant 448 : index
    %123 = vector.load %arg1[%c0_57, %c448] : memref<8x784xf32, #tpu.memory_space<vmem>>, vector<8x168xf32>
    %124 = arith.truncf %123 : vector<8x168xf32> to vector<8x168xbf16>
    %cst_58 = arith.constant dense<0.000000e+00> : vector<8x336xf32>
    %125 = tpu.matmul %124, %0, %cst_58 {dimension_numbers = #tpu.dot_dimension_numbers<[1], [0], [0], [1], [0, 0, 1, 1], [], []>} : vector<8x168xbf16>, vector<168x336xbf16>, vector<8x336xf32> -> vector<8x336xf32>
    %126 = vector.broadcast %1 : vector<1x336xf32> to vector<8x336xf32>
    %127 = arith.addf %125, %126 : vector<8x336xf32>
    %cst_59 = arith.constant 0.000000e+00 : f32
    %128 = vector.broadcast %cst_59 : f32 to vector<8x336xf32>
    %129 = arith.maximumf %127, %128 : vector<8x336xf32>
    %130 = vector.extract_strided_slice %129 {offsets = [0, 0], sizes = [8, 168], strides = [1, 1]} : vector<8x336xf32> to vector<8x168xf32>
    %131 = vector.extract_strided_slice %129 {offsets = [0, 168], sizes = [8, 168], strides = [1, 1]} : vector<8x336xf32> to vector<8x168xf32>
    %132 = arith.addf %130, %131 : vector<8x168xf32>
    %cst_60 = arith.constant 5.000000e-01 : f32
    %133 = vector.broadcast %cst_60 : f32 to vector<8x168xf32>
    %134 = arith.mulf %133, %132 : vector<8x168xf32>
    %c0_61 = arith.constant 0 : index
    %c1512 = arith.constant 1512 : index
    %135 = vector.load %arg13[%c0_61, %c1512] : memref<8x2352xf32, #tpu.memory_space<vmem>>, vector<8x168xf32>
    tpu.vector_store %arg13[%c0_61, %c1512], %134 {strides = array<i32>} : memref<8x2352xf32, #tpu.memory_space<vmem>>, vector<8x168xf32>,
    %c0_62 = arith.constant 0 : index
    %c504_63 = arith.constant 504 : index
    %136 = vector.load %arg1[%c0_62, %c504_63] : memref<8x784xf32, #tpu.memory_space<vmem>>, vector<8x168xf32>
    %137 = arith.truncf %136 : vector<8x168xf32> to vector<8x168xbf16>
    %cst_64 = arith.constant dense<0.000000e+00> : vector<8x336xf32>
    %138 = tpu.matmul %137, %0, %cst_64 {dimension_numbers = #tpu.dot_dimension_numbers<[1], [0], [0], [1], [0, 0, 1, 1], [], []>} : vector<8x168xbf16>, vector<168x336xbf16>, vector<8x336xf32> -> vector<8x336xf32>
    %139 = vector.broadcast %1 : vector<1x336xf32> to vector<8x336xf32>
    %140 = arith.addf %138, %139 : vector<8x336xf32>
    %cst_65 = arith.constant 0.000000e+00 : f32
    %141 = vector.broadcast %cst_65 : f32 to vector<8x336xf32>
    %142 = arith.maximumf %140, %141 : vector<8x336xf32>
    %143 = vector.extract_strided_slice %142 {offsets = [0, 0], sizes = [8, 168], strides = [1, 1]} : vector<8x336xf32> to vector<8x168xf32>
    %144 = vector.extract_strided_slice %142 {offsets = [0, 168], sizes = [8, 168], strides = [1, 1]} : vector<8x336xf32> to vector<8x168xf32>
    %145 = arith.addf %143, %144 : vector<8x168xf32>
    %cst_66 = arith.constant 5.000000e-01 : f32
    %146 = vector.broadcast %cst_66 : f32 to vector<8x168xf32>
    %147 = arith.mulf %146, %145 : vector<8x168xf32>
    %c0_67 = arith.constant 0 : index
    %c1680 = arith.constant 1680 : index
    %148 = vector.load %arg13[%c0_67, %c1680] : memref<8x2352xf32, #tpu.memory_space<vmem>>, vector<8x168xf32>
    tpu.vector_store %arg13[%c0_67, %c1680], %147 {strides = array<i32>} : memref<8x2352xf32, #tpu.memory_space<vmem>>, vector<8x168xf32>,
    %c0_68 = arith.constant 0 : index
    %c560 = arith.constant 560 : index
    %149 = vector.load %arg1[%c0_68, %c560] : memref<8x784xf32, #tpu.memory_space<vmem>>, vector<8x168xf32>
    %150 = arith.truncf %149 : vector<8x168xf32> to vector<8x168xbf16>
    %cst_69 = arith.constant dense<0.000000e+00> : vector<8x336xf32>
    %151 = tpu.matmul %150, %0, %cst_69 {dimension_numbers = #tpu.dot_dimension_numbers<[1], [0], [0], [1], [0, 0, 1, 1], [], []>} : vector<8x168xbf16>, vector<168x336xbf16>, vector<8x336xf32> -> vector<8x336xf32>
    %152 = vector.broadcast %1 : vector<1x336xf32> to vector<8x336xf32>
    %153 = arith.addf %151, %152 : vector<8x336xf32>
    %cst_70 = arith.constant 0.000000e+00 : f32
    %154 = vector.broadcast %cst_70 : f32 to vector<8x336xf32>
    %155 = arith.maximumf %153, %154 : vector<8x336xf32>
    %156 = vector.extract_strided_slice %155 {offsets = [0, 0], sizes = [8, 168], strides = [1, 1]} : vector<8x336xf32> to vector<8x168xf32>
    %157 = vector.extract_strided_slice %155 {offsets = [0, 168], sizes = [8, 168], strides = [1, 1]} : vector<8x336xf32> to vector<8x168xf32>
    %158 = arith.addf %156, %157 : vector<8x168xf32>
    %cst_71 = arith.constant 5.000000e-01 : f32
    %159 = vector.broadcast %cst_71 : f32 to vector<8x168xf32>
    %160 = arith.mulf %159, %158 : vector<8x168xf32>
    %c0_72 = arith.constant 0 : index
    %c1848 = arith.constant 1848 : index
    %161 = vector.load %arg13[%c0_72, %c1848] : memref<8x2352xf32, #tpu.memory_space<vmem>>, vector<8x168xf32>
    tpu.vector_store %arg13[%c0_72, %c1848], %160 {strides = array<i32>} : memref<8x2352xf32, #tpu.memory_space<vmem>>, vector<8x168xf32>,
    %c0_73 = arith.constant 0 : index
    %c616 = arith.constant 616 : index
    %162 = vector.load %arg1[%c0_73, %c616] : memref<8x784xf32, #tpu.memory_space<vmem>>, vector<8x168xf32>
    %163 = arith.truncf %162 : vector<8x168xf32> to vector<8x168xbf16>
    %cst_74 = arith.constant dense<0.000000e+00> : vector<8x336xf32>
    %164 = tpu.matmul %163, %0, %cst_74 {dimension_numbers = #tpu.dot_dimension_numbers<[1], [0], [0], [1], [0, 0, 1, 1], [], []>} : vector<8x168xbf16>, vector<168x336xbf16>, vector<8x336xf32> -> vector<8x336xf32>
    %165 = vector.broadcast %1 : vector<1x336xf32> to vector<8x336xf32>
    %166 = arith.addf %164, %165 : vector<8x336xf32>
    %cst_75 = arith.constant 0.000000e+00 : f32
    %167 = vector.broadcast %cst_75 : f32 to vector<8x336xf32>
    %168 = arith.maximumf %166, %167 : vector<8x336xf32>
    %169 = vector.extract_strided_slice %168 {offsets = [0, 0], sizes = [8, 168], strides = [1, 1]} : vector<8x336xf32> to vector<8x168xf32>
    %170 = vector.extract_strided_slice %168 {offsets = [0, 168], sizes = [8, 168], strides = [1, 1]} : vector<8x336xf32> to vector<8x168xf32>
    %171 = arith.addf %169, %170 : vector<8x168xf32>
    %cst_76 = arith.constant 5.000000e-01 : f32
    %172 = vector.broadcast %cst_76 : f32 to vector<8x168xf32>
    %173 = arith.mulf %172, %171 : vector<8x168xf32>
    %c0_77 = arith.constant 0 : index
    %c2016 = arith.constant 2016 : index
    %174 = vector.load %arg13[%c0_77, %c2016] : memref<8x2352xf32, #tpu.memory_space<vmem>>, vector<8x168xf32>
    tpu.vector_store %arg13[%c0_77, %c2016], %173 {strides = array<i32>} : memref<8x2352xf32, #tpu.memory_space<vmem>>, vector<8x168xf32>,
    %c0_78 = arith.constant 0 : index
    %c672_79 = arith.constant 672 : index
    %175 = vector.load %arg1[%c0_78, %c672_79] : memref<8x784xf32, #tpu.memory_space<vmem>>, vector<8x112xf32>
    %176 = arith.truncf %175 : vector<8x112xf32> to vector<8x112xbf16>
    %cst_80 = arith.constant 0.000000e+00 : bf16
    %177 = vector.broadcast %cst_80 : bf16 to vector<8x56xbf16>
    %178 = tpu.concatenate %176, %177 in 1 : vector<8x112xbf16>, vector<8x56xbf16> -> vector<8x168xbf16>
    %cst_81 = arith.constant dense<0.000000e+00> : vector<8x336xf32>
    %179 = tpu.matmul %178, %0, %cst_81 {dimension_numbers = #tpu.dot_dimension_numbers<[1], [0], [0], [1], [0, 0, 1, 1], [], []>} : vector<8x168xbf16>, vector<168x336xbf16>, vector<8x336xf32> -> vector<8x336xf32>
    %180 = vector.broadcast %1 : vector<1x336xf32> to vector<8x336xf32>
    %181 = arith.addf %179, %180 : vector<8x336xf32>
    %cst_82 = arith.constant 0.000000e+00 : f32
    %182 = vector.broadcast %cst_82 : f32 to vector<8x336xf32>
    %183 = arith.maximumf %181, %182 : vector<8x336xf32>
    %184 = vector.extract_strided_slice %183 {offsets = [0, 0], sizes = [8, 168], strides = [1, 1]} : vector<8x336xf32> to vector<8x168xf32>
    %185 = vector.extract_strided_slice %183 {offsets = [0, 168], sizes = [8, 168], strides = [1, 1]} : vector<8x336xf32> to vector<8x168xf32>
    %186 = arith.addf %184, %185 : vector<8x168xf32>
    %cst_83 = arith.constant 5.000000e-01 : f32
    %187 = vector.broadcast %cst_83 : f32 to vector<8x168xf32>
    %188 = arith.mulf %187, %186 : vector<8x168xf32>
    %c0_84 = arith.constant 0 : index
    %c2184 = arith.constant 2184 : index
    %189 = vector.load %arg13[%c0_84, %c2184] : memref<8x2352xf32, #tpu.memory_space<vmem>>, vector<8x168xf32>
    tpu.vector_store %arg13[%c0_84, %c2184], %188 {strides = array<i32>} : memref<8x2352xf32, #tpu.memory_space<vmem>>, vector<8x168xf32>,
    %c0_85 = arith.constant 0 : index
    %c0_86 = arith.constant 0 : index
    %190 = vector.load %arg13[%c0_85, %c0_86] : memref<8x2352xf32, #tpu.memory_space<vmem>>, vector<8x1008xf32>
    %191 = arith.truncf %190 : vector<8x1008xf32> to vector<8x1008xbf16>
    %cst_87 = arith.constant dense<0.000000e+00> : vector<8x320xf32>
    %192 = tpu.matmul %191, %2, %cst_87 {dimension_numbers = #tpu.dot_dimension_numbers<[1], [0], [0], [1], [0, 0, 1, 1], [], []>} : vector<8x1008xbf16>, vector<1008x320xbf16>, vector<8x320xf32> -> vector<8x320xf32>
    %193 = vector.broadcast %3 : vector<1x320xf32> to vector<8x320xf32>
    %194 = arith.addf %192, %193 : vector<8x320xf32>
    %cst_88 = arith.constant 0.000000e+00 : f32
    %195 = vector.broadcast %cst_88 : f32 to vector<8x320xf32>
    %196 = arith.maximumf %194, %195 : vector<8x320xf32>
    %197 = vector.extract_strided_slice %196 {offsets = [0, 0], sizes = [8, 160], strides = [1, 1]} : vector<8x320xf32> to vector<8x160xf32>
    %198 = vector.extract_strided_slice %196 {offsets = [0, 160], sizes = [8, 160], strides = [1, 1]} : vector<8x320xf32> to vector<8x160xf32>
    %199 = arith.addf %197, %198 : vector<8x160xf32>
    %cst_89 = arith.constant 5.000000e-01 : f32
    %200 = vector.broadcast %cst_89 : f32 to vector<8x160xf32>
    %201 = arith.mulf %200, %199 : vector<8x160xf32>
    %c0_90 = arith.constant 0 : index
    %c0_91 = arith.constant 0 : index
    %202 = vector.load %arg14[%c0_90, %c0_91] : memref<8x800xf32, #tpu.memory_space<vmem>>, vector<8x160xf32>
    tpu.vector_store %arg14[%c0_90, %c0_91], %201 {strides = array<i32>} : memref<8x800xf32, #tpu.memory_space<vmem>>, vector<8x160xf32>,
    %c0_92 = arith.constant 0 : index
    %c336_93 = arith.constant 336 : index
    %203 = vector.load %arg13[%c0_92, %c336_93] : memref<8x2352xf32, #tpu.memory_space<vmem>>, vector<8x1008xf32>
    %204 = arith.truncf %203 : vector<8x1008xf32> to vector<8x1008xbf16>
    %cst_94 = arith.constant dense<0.000000e+00> : vector<8x320xf32>
    %205 = tpu.matmul %204, %2, %cst_94 {dimension_numbers = #tpu.dot_dimension_numbers<[1], [0], [0], [1], [0, 0, 1, 1], [], []>} : vector<8x1008xbf16>, vector<1008x320xbf16>, vector<8x320xf32> -> vector<8x320xf32>
    %206 = vector.broadcast %3 : vector<1x320xf32> to vector<8x320xf32>
    %207 = arith.addf %205, %206 : vector<8x320xf32>
    %cst_95 = arith.constant 0.000000e+00 : f32
    %208 = vector.broadcast %cst_95 : f32 to vector<8x320xf32>
    %209 = arith.maximumf %207, %208 : vector<8x320xf32>
    %210 = vector.extract_strided_slice %209 {offsets = [0, 0], sizes = [8, 160], strides = [1, 1]} : vector<8x320xf32> to vector<8x160xf32>
    %211 = vector.extract_strided_slice %209 {offsets = [0, 160], sizes = [8, 160], strides = [1, 1]} : vector<8x320xf32> to vector<8x160xf32>
    %212 = arith.addf %210, %211 : vector<8x160xf32>
    %cst_96 = arith.constant 5.000000e-01 : f32
    %213 = vector.broadcast %cst_96 : f32 to vector<8x160xf32>
    %214 = arith.mulf %213, %212 : vector<8x160xf32>
    %c0_97 = arith.constant 0 : index
    %c160 = arith.constant 160 : index
    %215 = vector.load %arg14[%c0_97, %c160] : memref<8x800xf32, #tpu.memory_space<vmem>>, vector<8x160xf32>
    tpu.vector_store %arg14[%c0_97, %c160], %214 {strides = array<i32>} : memref<8x800xf32, #tpu.memory_space<vmem>>, vector<8x160xf32>,
    %c0_98 = arith.constant 0 : index
    %c672_99 = arith.constant 672 : index
    %216 = vector.load %arg13[%c0_98, %c672_99] : memref<8x2352xf32, #tpu.memory_space<vmem>>, vector<8x1008xf32>
    %217 = arith.truncf %216 : vector<8x1008xf32> to vector<8x1008xbf16>
    %cst_100 = arith.constant dense<0.000000e+00> : vector<8x320xf32>
    %218 = tpu.matmul %217, %2, %cst_100 {dimension_numbers = #tpu.dot_dimension_numbers<[1], [0], [0], [1], [0, 0, 1, 1], [], []>} : vector<8x1008xbf16>, vector<1008x320xbf16>, vector<8x320xf32> -> vector<8x320xf32>
    %219 = vector.broadcast %3 : vector<1x320xf32> to vector<8x320xf32>
    %220 = arith.addf %218, %219 : vector<8x320xf32>
    %cst_101 = arith.constant 0.000000e+00 : f32
    %221 = vector.broadcast %cst_101 : f32 to vector<8x320xf32>
    %222 = arith.maximumf %220, %221 : vector<8x320xf32>
    %223 = vector.extract_strided_slice %222 {offsets = [0, 0], sizes = [8, 160], strides = [1, 1]} : vector<8x320xf32> to vector<8x160xf32>
    %224 = vector.extract_strided_slice %222 {offsets = [0, 160], sizes = [8, 160], strides = [1, 1]} : vector<8x320xf32> to vector<8x160xf32>
    %225 = arith.addf %223, %224 : vector<8x160xf32>
    %cst_102 = arith.constant 5.000000e-01 : f32
    %226 = vector.broadcast %cst_102 : f32 to vector<8x160xf32>
    %227 = arith.mulf %226, %225 : vector<8x160xf32>
    %c0_103 = arith.constant 0 : index
    %c320 = arith.constant 320 : index
    %228 = vector.load %arg14[%c0_103, %c320] : memref<8x800xf32, #tpu.memory_space<vmem>>, vector<8x160xf32>
    tpu.vector_store %arg14[%c0_103, %c320], %227 {strides = array<i32>} : memref<8x800xf32, #tpu.memory_space<vmem>>, vector<8x160xf32>,
    %c0_104 = arith.constant 0 : index
    %c1008_105 = arith.constant 1008 : index
    %229 = vector.load %arg13[%c0_104, %c1008_105] : memref<8x2352xf32, #tpu.memory_space<vmem>>, vector<8x1008xf32>
    %230 = arith.truncf %229 : vector<8x1008xf32> to vector<8x1008xbf16>
    %cst_106 = arith.constant dense<0.000000e+00> : vector<8x320xf32>
    %231 = tpu.matmul %230, %2, %cst_106 {dimension_numbers = #tpu.dot_dimension_numbers<[1], [0], [0], [1], [0, 0, 1, 1], [], []>} : vector<8x1008xbf16>, vector<1008x320xbf16>, vector<8x320xf32> -> vector<8x320xf32>
    %232 = vector.broadcast %3 : vector<1x320xf32> to vector<8x320xf32>
    %233 = arith.addf %231, %232 : vector<8x320xf32>
    %cst_107 = arith.constant 0.000000e+00 : f32
    %234 = vector.broadcast %cst_107 : f32 to vector<8x320xf32>
    %235 = arith.maximumf %233, %234 : vector<8x320xf32>
    %236 = vector.extract_strided_slice %235 {offsets = [0, 0], sizes = [8, 160], strides = [1, 1]} : vector<8x320xf32> to vector<8x160xf32>
    %237 = vector.extract_strided_slice %235 {offsets = [0, 160], sizes = [8, 160], strides = [1, 1]} : vector<8x320xf32> to vector<8x160xf32>
    %238 = arith.addf %236, %237 : vector<8x160xf32>
    %cst_108 = arith.constant 5.000000e-01 : f32
    %239 = vector.broadcast %cst_108 : f32 to vector<8x160xf32>
    %240 = arith.mulf %239, %238 : vector<8x160xf32>
    %c0_109 = arith.constant 0 : index
    %c480 = arith.constant 480 : index
    %241 = vector.load %arg14[%c0_109, %c480] : memref<8x800xf32, #tpu.memory_space<vmem>>, vector<8x160xf32>
    tpu.vector_store %arg14[%c0_109, %c480], %240 {strides = array<i32>} : memref<8x800xf32, #tpu.memory_space<vmem>>, vector<8x160xf32>,
    %c0_110 = arith.constant 0 : index
    %c1344_111 = arith.constant 1344 : index
    %242 = vector.load %arg13[%c0_110, %c1344_111] : memref<8x2352xf32, #tpu.memory_space<vmem>>, vector<8x1008xf32>
    %243 = arith.truncf %242 : vector<8x1008xf32> to vector<8x1008xbf16>
    %cst_112 = arith.constant dense<0.000000e+00> : vector<8x320xf32>
    %244 = tpu.matmul %243, %2, %cst_112 {dimension_numbers = #tpu.dot_dimension_numbers<[1], [0], [0], [1], [0, 0, 1, 1], [], []>} : vector<8x1008xbf16>, vector<1008x320xbf16>, vector<8x320xf32> -> vector<8x320xf32>
    %245 = vector.broadcast %3 : vector<1x320xf32> to vector<8x320xf32>
    %246 = arith.addf %244, %245 : vector<8x320xf32>
    %cst_113 = arith.constant 0.000000e+00 : f32
    %247 = vector.broadcast %cst_113 : f32 to vector<8x320xf32>
    %248 = arith.maximumf %246, %247 : vector<8x320xf32>
    %249 = vector.extract_strided_slice %248 {offsets = [0, 0], sizes = [8, 160], strides = [1, 1]} : vector<8x320xf32> to vector<8x160xf32>
    %250 = vector.extract_strided_slice %248 {offsets = [0, 160], sizes = [8, 160], strides = [1, 1]} : vector<8x320xf32> to vector<8x160xf32>
    %251 = arith.addf %249, %250 : vector<8x160xf32>
    %cst_114 = arith.constant 5.000000e-01 : f32
    %252 = vector.broadcast %cst_114 : f32 to vector<8x160xf32>
    %253 = arith.mulf %252, %251 : vector<8x160xf32>
    %c0_115 = arith.constant 0 : index
    %c640 = arith.constant 640 : index
    %254 = vector.load %arg14[%c0_115, %c640] : memref<8x800xf32, #tpu.memory_space<vmem>>, vector<8x160xf32>
    tpu.vector_store %arg14[%c0_115, %c640], %253 {strides = array<i32>} : memref<8x800xf32, #tpu.memory_space<vmem>>, vector<8x160xf32>,
    %c0_116 = arith.constant 0 : index
    %c0_117 = arith.constant 0 : index
    %255 = vector.load %arg14[%c0_116, %c0_117] : memref<8x800xf32, #tpu.memory_space<vmem>>, vector<8x800xf32>
    %256 = arith.truncf %255 : vector<8x800xf32> to vector<8x800xbf16>
    %c0_118 = arith.constant 0 : index
    %c0_119 = arith.constant 0 : index
    %257 = vector.load %arg6[%c0_118, %c0_119] : memref<800x120xbf16, #tpu.memory_space<vmem>>, vector<800x120xbf16>
    %cst_120 = arith.constant dense<0.000000e+00> : vector<8x120xf32>
    %258 = tpu.matmul %256, %257, %cst_120 {dimension_numbers = #tpu.dot_dimension_numbers<[1], [0], [0], [1], [0, 0, 1, 1], [], []>} : vector<8x800xbf16>, vector<800x120xbf16>, vector<8x120xf32> -> vector<8x120xf32>
    %c0_121 = arith.constant 0 : index
    %c0_122 = arith.constant 0 : index
    %259 = vector.load %arg7[%c0_121, %c0_122] : memref<1x120xf32, #tpu.memory_space<vmem>>, vector<1x120xf32>
    %260 = vector.broadcast %259 : vector<1x120xf32> to vector<8x120xf32>
    %261 = arith.addf %258, %260 : vector<8x120xf32>
    %262 = arith.negf %261 : vector<8x120xf32>
    %263 = math.exp %262 : vector<8x120xf32>
    %cst_123 = arith.constant 1.000000e+00 : f32
    %264 = vector.broadcast %cst_123 : f32 to vector<8x120xf32>
    %265 = arith.addf %264, %263 : vector<8x120xf32>
    %266 = arith.divf %264, %265 : vector<8x120xf32>
    %267 = arith.truncf %266 : vector<8x120xf32> to vector<8x120xbf16>
    %c0_124 = arith.constant 0 : index
    %c0_125 = arith.constant 0 : index
    %268 = vector.load %arg8[%c0_124, %c0_125] : memref<120x84xbf16, #tpu.memory_space<vmem>>, vector<120x84xbf16>
    %cst_126 = arith.constant dense<0.000000e+00> : vector<8x84xf32>
    %269 = tpu.matmul %267, %268, %cst_126 {dimension_numbers = #tpu.dot_dimension_numbers<[1], [0], [0], [1], [0, 0, 1, 1], [], []>} : vector<8x120xbf16>, vector<120x84xbf16>, vector<8x84xf32> -> vector<8x84xf32>
    %c0_127 = arith.constant 0 : index
    %c0_128 = arith.constant 0 : index
    %270 = vector.load %arg9[%c0_127, %c0_128] : memref<1x84xf32, #tpu.memory_space<vmem>>, vector<1x84xf32>
    %271 = vector.broadcast %270 : vector<1x84xf32> to vector<8x84xf32>
    %272 = arith.addf %269, %271 : vector<8x84xf32>
    %273 = arith.negf %272 : vector<8x84xf32>
    %274 = math.exp %273 : vector<8x84xf32>
    %cst_129 = arith.constant 1.000000e+00 : f32
    %275 = vector.broadcast %cst_129 : f32 to vector<8x84xf32>
    %276 = arith.addf %275, %274 : vector<8x84xf32>
    %277 = arith.divf %275, %276 : vector<8x84xf32>
    %278 = arith.truncf %277 : vector<8x84xf32> to vector<8x84xbf16>
    %c0_130 = arith.constant 0 : index
    %c0_131 = arith.constant 0 : index
    %279 = vector.load %arg10[%c0_130, %c0_131] : memref<84x10xbf16, #tpu.memory_space<vmem>>, vector<84x10xbf16>
    %cst_132 = arith.constant dense<0.000000e+00> : vector<8x10xf32>
    %280 = tpu.matmul %278, %279, %cst_132 {dimension_numbers = #tpu.dot_dimension_numbers<[1], [0], [0], [1], [0, 0, 1, 1], [], []>} : vector<8x84xbf16>, vector<84x10xbf16>, vector<8x10xf32> -> vector<8x10xf32>
    %c0_133 = arith.constant 0 : index
    %c0_134 = arith.constant 0 : index
    %281 = vector.load %arg11[%c0_133, %c0_134] : memref<1x10xf32, #tpu.memory_space<vmem>>, vector<1x10xf32>
    %282 = vector.broadcast %281 : vector<1x10xf32> to vector<8x10xf32>
    %283 = arith.addf %280, %282 : vector<8x10xf32>
    %c0_135 = arith.constant 0 : index
    %c0_136 = arith.constant 0 : index
    %284 = vector.load %arg12[%c0_135, %c0_136] : memref<8x10xf32, #tpu.memory_space<vmem>>, vector<8x10xf32>
    tpu.vector_store %arg12[%c0_135, %c0_136], %283 {strides = array<i32>} : memref<8x10xf32, #tpu.memory_space<vmem>>, vector<8x10xf32>,
    return
  }
  func.func @transform_0(%arg0: i32) -> (i32, i32) {
    %c0_i32 = arith.constant 0 : i32
    %c0_i32_0 = arith.constant 0 : i32
    return %arg0, %c0_i32 : i32, i32
  }
  func.func @transform_1(%arg0: i32) -> (i32, i32) {
    %c0_i32 = arith.constant 0 : i32
    %c0_i32_0 = arith.constant 0 : i32
    %c0_i32_1 = arith.constant 0 : i32
    return %c0_i32, %c0_i32_0 : i32, i32
  }
  func.func @transform_2(%arg0: i32) -> (i32, i32) {
    %c0_i32 = arith.constant 0 : i32
    %c0_i32_0 = arith.constant 0 : i32
    %c0_i32_1 = arith.constant 0 : i32
    return %c0_i32, %c0_i32_0 : i32, i32
  }
  func.func @transform_3(%arg0: i32) -> (i32, i32) {
    %c0_i32 = arith.constant 0 : i32
    %c0_i32_0 = arith.constant 0 : i32
    %c0_i32_1 = arith.constant 0 : i32
    return %c0_i32, %c0_i32_0 : i32, i32
  }
  func.func @transform_4(%arg0: i32) -> (i32, i32) {
    %c0_i32 = arith.constant 0 : i32
    %c0_i32_0 = arith.constant 0 : i32
    %c0_i32_1 = arith.constant 0 : i32
    return %c0_i32, %c0_i32_0 : i32, i32
  }
  func.func @transform_5(%arg0: i32) -> (i32, i32) {
    %c0_i32 = arith.constant 0 : i32
    %c0_i32_0 = arith.constant 0 : i32
    %c0_i32_1 = arith.constant 0 : i32
    return %c0_i32, %c0_i32_0 : i32, i32
  }
  func.func @transform_6(%arg0: i32) -> (i32, i32) {
    %c0_i32 = arith.constant 0 : i32
    %c0_i32_0 = arith.constant 0 : i32
    %c0_i32_1 = arith.constant 0 : i32
    return %c0_i32, %c0_i32_0 : i32, i32
  }
  func.func @transform_7(%arg0: i32) -> (i32, i32) {
    %c0_i32 = arith.constant 0 : i32
    %c0_i32_0 = arith.constant 0 : i32
    %c0_i32_1 = arith.constant 0 : i32
    return %c0_i32, %c0_i32_0 : i32, i32
  }
  func.func @transform_8(%arg0: i32) -> (i32, i32) {
    %c0_i32 = arith.constant 0 : i32
    %c0_i32_0 = arith.constant 0 : i32
    %c0_i32_1 = arith.constant 0 : i32
    return %c0_i32, %c0_i32_0 : i32, i32
  }
  func.func @transform_9(%arg0: i32) -> (i32, i32) {
    %c0_i32 = arith.constant 0 : i32
    %c0_i32_0 = arith.constant 0 : i32
    %c0_i32_1 = arith.constant 0 : i32
    return %c0_i32, %c0_i32_0 : i32, i32
  }
  func.func @transform_10(%arg0: i32) -> (i32, i32) {
    %c0_i32 = arith.constant 0 : i32
    %c0_i32_0 = arith.constant 0 : i32
    %c0_i32_1 = arith.constant 0 : i32
    return %c0_i32, %c0_i32_0 : i32, i32
  }
  func.func @transform_11(%arg0: i32) -> (i32, i32) {
    %c0_i32 = arith.constant 0 : i32
    %c0_i32_0 = arith.constant 0 : i32
    return %arg0, %c0_i32 : i32, i32
  }
}

</mosaic_0001>

<llo_original>
// kernel: lenet_forward_impl.1
$region0: #{lenet_forward_impl.1}
  #allocation0 [shape = 'u32[]', space=smem, size = 0x4, offset = 0x4, fixed_abs, tag = 'smem constant byte address 0x4 - core index']
  #allocation1 [shape = 'u32[144,128]{1,0:T(1,128)}', space=vmem, size = 0x12000, scoped, tag = 'internal scratch']
  #allocation2 [shape = 'f32[8,2352]{1,0:T(8,128)}', space=vmem, size = 0x13000, scoped, tag = 'scratch operand']
  #allocation3 [shape = 'f32[8,800]{1,0:T(8,128)}', space=vmem, size = 0x7000, scoped, tag = 'scratch operand']
  %s0 = inlined_call_operand.vmem [shape: f32[8,784], index: 0, kind: input, shape index: {}]
  %s1 = inlined_call_operand.vmem [shape: bf16[168,336], index: 1, kind: input, shape index: {}]
  %s2 = inlined_call_operand.vmem [shape: f32[1,336], index: 2, kind: input, shape index: {}]
  %s3 = inlined_call_operand.vmem [shape: bf16[1008,320], index: 3, kind: input, shape index: {}]
  %s4 = inlined_call_operand.vmem [shape: f32[1,320], index: 4, kind: input, shape index: {}]
  %s5 = inlined_call_operand.vmem [shape: bf16[800,120], index: 5, kind: input, shape index: {}]
  %s6 = inlined_call_operand.vmem [shape: f32[1,120], index: 6, kind: input, shape index: {}]
  %s7 = inlined_call_operand.vmem [shape: bf16[120,84], index: 7, kind: input, shape index: {}]
  %s8 = inlined_call_operand.vmem [shape: f32[1,84], index: 8, kind: input, shape index: {}]
  %s9 = inlined_call_operand.vmem [shape: bf16[84,10], index: 9, kind: input, shape index: {}]
  %s10 = inlined_call_operand.vmem [shape: f32[1,10], index: 10, kind: input, shape index: {}]
  %s11 = inlined_call_operand.hbm [shape: f32[8,10], index: 11, kind: output, shape index: {}]
  %s12 = sld [smem:[#allocation0]]
  $region54: #{lenet_forward_impl.1} parent=0
    _
  %s14 = ssub.s32 1, %s12
  %s15 = scalar_select 0, %s14, %s12
  $region1: #{lenet_forward_impl.1} parent=0
    #allocation4 [shape = 'u8[4096]{0}', space=vmem, size = 0x1000, scoped, tag = 'output window, operand 0, single buffered']
    #allocation5 [shape = 's32[1]{0}', space=sflag, size = 0x4, scoped, tag = 'scoped memory for lenet_forward_impl.1']
    %16 = vsyncpa [#allocation5], 0
    // Predicated region
    $region2: #{lenet_forward_impl.1} parent=1 // pred_check
      _
    $region3: #{lenet_forward_impl.1} parent=1 // pred_check_branch
      %18 = sbr.rel (0) target = $region5
    $region4: #{lenet_forward_impl.1} parent=1 // pred_region
      _
    $region5: #{lenet_forward_impl.1} parent=1 // pred_fallthru
      _
    // Predicated region
    $region6: #{lenet_forward_impl.1} parent=1 // pred_check
      _
    $region7: #{lenet_forward_impl.1} parent=1 // pred_check_branch
      %20 = sbr.rel (0) target = $region9
    $region8: #{lenet_forward_impl.1} parent=1 // pred_region
      _
    $region9: #{lenet_forward_impl.1} parent=1 // pred_fallthru
      _
    // Predicated region
    $region10: #{lenet_forward_impl.1} parent=1 // pred_check
      _
    $region11: #{lenet_forward_impl.1} parent=1 // pred_check_branch
      %22 = sbr.rel (0) target = $region13
    $region12: #{lenet_forward_impl.1} parent=1 // pred_region
      _
    $region13: #{lenet_forward_impl.1} parent=1 // pred_fallthru
      _
    // Predicated region
    $region14: #{lenet_forward_impl.1} parent=1 // pred_check
      _
    $region15: #{lenet_forward_impl.1} parent=1 // pred_check_branch
      %24 = sbr.rel (0) target = $region17
    $region16: #{lenet_forward_impl.1} parent=1 // pred_region
      _
    $region17: #{lenet_forward_impl.1} parent=1 // pred_fallthru
      _
    // Predicated region
    $region18: #{lenet_forward_impl.1} parent=1 // pred_check
      _
    $region19: #{lenet_forward_impl.1} parent=1 // pred_check_branch
      %26 = sbr.rel (0) target = $region21
    $region20: #{lenet_forward_impl.1} parent=1 // pred_region
      _
    $region21: #{lenet_forward_impl.1} parent=1 // pred_fallthru
      _
    // Predicated region
    $region22: #{lenet_forward_impl.1} parent=1 // pred_check
      _
    $region23: #{lenet_forward_impl.1} parent=1 // pred_check_branch
      %28 = sbr.rel (0) target = $region25
    $region24: #{lenet_forward_impl.1} parent=1 // pred_region
      _
    $region25: #{lenet_forward_impl.1} parent=1 // pred_fallthru
      _
    // Predicated region
    $region26: #{lenet_forward_impl.1} parent=1 // pred_check
      _
    $region27: #{lenet_forward_impl.1} parent=1 // pred_check_branch
      %30 = sbr.rel (0) target = $region29
    $region28: #{lenet_forward_impl.1} parent=1 // pred_region
      _
    $region29: #{lenet_forward_impl.1} parent=1 // pred_fallthru
      _
    // Predicated region
    $region30: #{lenet_forward_impl.1} parent=1 // pred_check
      _
    $region31: #{lenet_forward_impl.1} parent=1 // pred_check_branch
      %32 = sbr.rel (0) target = $region33
    $region32: #{lenet_forward_impl.1} parent=1 // pred_region
      _
    $region33: #{lenet_forward_impl.1} parent=1 // pred_fallthru
      _
    // Predicated region
    $region34: #{lenet_forward_impl.1} parent=1 // pred_check
      _
    $region35: #{lenet_forward_impl.1} parent=1 // pred_check_branch
      %34 = sbr.rel (0) target = $region37
    $region36: #{lenet_forward_impl.1} parent=1 // pred_region
      _
    $region37: #{lenet_forward_impl.1} parent=1 // pred_fallthru
      _
    // Predicated region
    $region38: #{lenet_forward_impl.1} parent=1 // pred_check
      _
    $region39: #{lenet_forward_impl.1} parent=1 // pred_check_branch
      %36 = sbr.rel (0) target = $region41
    $region40: #{lenet_forward_impl.1} parent=1 // pred_region
      _
    $region41: #{lenet_forward_impl.1} parent=1 // pred_fallthru
      _
    // Predicated region
    $region42: #{lenet_forward_impl.1} parent=1 // pred_check
      _
    $region43: #{lenet_forward_impl.1} parent=1 // pred_check_branch
      %38 = sbr.rel (0) target = $region45
    $region44: #{lenet_forward_impl.1} parent=1 // pred_region
      _
    $region45: #{lenet_forward_impl.1} parent=1 // pred_fallthru
      _
    %v40 = vld [vmem:[%s1] sm:$0xff]
    %v41 = vld [vmem:[%s1 + $0x8] sm:$0xf]
    %v42 = vld [vmem:[%s1 + $0xc] sm:$0xff]
    %v43 = vld [vmem:[%s1 + $0x14] sm:$0xf]
    %v44 = vld [vmem:[%s1 + $0x18] sm:$0xff]
    %v45 = vld [vmem:[%s1 + $0x20] sm:$0xf]
    %v46 = vld [vmem:[%s1 + $0x24] sm:$0xff]
    %v47 = vld [vmem:[%s1 + $0x2c] sm:$0xf]
    %v48 = vld [vmem:[%s1 + $0x30] sm:$0xff]
    %v49 = vld [vmem:[%s1 + $0x38] sm:$0xf]
    %v50 = vld [vmem:[%s1 + $0x3c] sm:$0xff]
    %v51 = vld [vmem:[%s1 + $0x44] sm:$0xf]
    %v52 = vld [vmem:[%s1 + $0x48] sm:$0xff]
    %v53 = vld [vmem:[%s1 + $0x50] sm:$0xf]
    %v54 = vld [vmem:[%s1 + $0x54] sm:$0xff]
    %v55 = vld [vmem:[%s1 + $0x5c] sm:$0xf]
    %v56 = vld [vmem:[%s1 + $0x60] sm:$0xff]
    %v57 = vld [vmem:[%s1 + $0x68] sm:$0xf]
    %v58 = vld [vmem:[%s1 + $0x6c] sm:$0xff]
    %v59 = vld [vmem:[%s1 + $0x74] sm:$0xf]
    %v60 = vld [vmem:[%s1 + $0x78] sm:$0xff]
    %v61 = vld [vmem:[%s1 + $0x80] sm:$0xf]
    %v62 = vld [vmem:[%s1 + $0x84] sm:$0xff]
    %v63 = vld [vmem:[%s1 + $0x8c] sm:$0xf]
    %v64 = vld [vmem:[%s1 + $0x90] sm:$0xff]
    %v65 = vld [vmem:[%s1 + $0x98] sm:$0xf]
    %v66 = vld [vmem:[%s1 + $0x9c] sm:$0xff]
    %v67 = vld [vmem:[%s1 + $0xa4] sm:$0xf]
    %v68 = vld [vmem:[%s1 + $0xa8] sm:$0xff]
    %v69 = vld [vmem:[%s1 + $0xb0] sm:$0xf]
    %v70 = vld [vmem:[%s1 + $0xb4] sm:$0xff]
    %v71 = vld [vmem:[%s1 + $0xbc] sm:$0xf]
    %v72 = vld [vmem:[%s1 + $0xc0] sm:$0xff]
    %v73 = vld [vmem:[%s1 + $0xc8] sm:$0xf]
    %v74 = vld [vmem:[%s1 + $0xcc] sm:$0xff]
    %v75 = vld [vmem:[%s1 + $0xd4] sm:$0xf]
    %v76 = vld [vmem:[%s1 + $0xd8] sm:$0xff]
    %v77 = vld [vmem:[%s1 + $0xe0] sm:$0xf]
    %v78 = vld [vmem:[%s1 + $0xe4] sm:$0xff]
    %v79 = vld [vmem:[%s1 + $0xec] sm:$0xf]
    %v80 = vld [vmem:[%s1 + $0xf0] sm:$0xff]
    %v81 = vld [vmem:[%s1 + $0xf8] sm:$0xf]
    %v82 = vld [vmem:[%s2] sm:$0x7]
    %v83 = vld [vmem:[%s3] sm:$0xff]
    %v84 = vld [vmem:[%s3 + $0x8] sm:$0xf]
    %v85 = vld [vmem:[%s3 + $0xc] sm:$0xff]
    %v86 = vld [vmem:[%s3 + $0x14] sm:$0xf]
    %v87 = vld [vmem:[%s3 + $0x18] sm:$0xff]
    %v88 = vld [vmem:[%s3 + $0x20] sm:$0xf]
    %v89 = vld [vmem:[%s3 + $0x24] sm:$0xff]
    %v90 = vld [vmem:[%s3 + $0x2c] sm:$0xf]
    %v91 = vld [vmem:[%s3 + $0x30] sm:$0xff]
    %v92 = vld [vmem:[%s3 + $0x38] sm:$0xf]
    %v93 = vld [vmem:[%s3 + $0x3c] sm:$0xff]
    %v94 = vld [vmem:[%s3 + $0x44] sm:$0xf]
    %v95 = vld [vmem:[%s3 + $0x48] sm:$0xff]
    %v96 = vld [vmem:[%s3 + $0x50] sm:$0xf]
    %v97 = vld [vmem:[%s3 + $0x54] sm:$0xff]
    %v98 = vld [vmem:[%s3 + $0x5c] sm:$0xf]
    %v99 = vld [vmem:[%s3 + $0x60] sm:$0xff]
    %v100 = vld [vmem:[%s3 + $0x68] sm:$0xf]
    %v101 = vld [vmem:[%s3 + $0x6c] sm:$0xff]
    %v102 = vld [vmem:[%s3 + $0x74] sm:$0xf]
    %v103 = vld [vmem:[%s3 + $0x78] sm:$0xff]
    %v104 = vld [vmem:[%s3 + $0x80] sm:$0xf]
    %v105 = vld [vmem:[%s3 + $0x84] sm:$0xff]
    %v106 = vld [vmem:[%s3 + $0x8c] sm:$0xf]
    %v107 = vld [vmem:[%s3 + $0x90] sm:$0xff]
    %v108 = vld [vmem:[%s3 + $0x98] sm:$0xf]
    %v109 = vld [vmem:[%s3 + $0x9c] sm:$0xff]
    %v110 = vld [vmem:[%s3 + $0xa4] sm:$0xf]
    %v111 = vld [vmem:[%s3 + $0xa8] sm:$0xff]
    %v112 = vld [vmem:[%s3 + $0xb0] sm:$0xf]
    %v113 = vld [vmem:[%s3 + $0xb4] sm:$0xff]
    %v114 = vld [vmem:[%s3 + $0xbc] sm:$0xf]
    %v115 = vld [vmem:[%s3 + $0xc0] sm:$0xff]
    %v116 = vld [vmem:[%s3 + $0xc8] sm:$0xf]
    %v117 = vld [vmem:[%s3 + $0xcc] sm:$0xff]
    %v118 = vld [vmem:[%s3 + $0xd4] sm:$0xf]
    %v119 = vld [vmem:[%s3 + $0xd8] sm:$0xff]
    %v120 = vld [vmem:[%s3 + $0xe0] sm:$0xf]
    %v121 = vld [vmem:[%s3 + $0xe4] sm:$0xff]
    %v122 = vld [vmem:[%s3 + $0xec] sm:$0xf]
    %v123 = vld [vmem:[%s3 + $0xf0] sm:$0xff]
    %v124 = vld [vmem:[%s3 + $0xf8] sm:$0xf]
    %v125 = vld [vmem:[%s3 + $0xfc] sm:$0xff]
    %v126 = vld [vmem:[%s3 + $0x104] sm:$0xf]
    %v127 = vld [vmem:[%s3 + $0x108] sm:$0xff]
    %v128 = vld [vmem:[%s3 + $0x110] sm:$0xf]
    %v129 = vld [vmem:[%s3 + $0x114] sm:$0xff]
    %v130 = vld [vmem:[%s3 + $0x11c] sm:$0xf]
    %v131 = vld [vmem:[%s3 + $0x120] sm:$0xff]
    %v132 = vld [vmem:[%s3 + $0x128] sm:$0xf]
    %v133 = vld [vmem:[%s3 + $0x12c] sm:$0xff]
    %v134 = vld [vmem:[%s3 + $0x134] sm:$0xf]
    %v135 = vld [vmem:[%s3 + $0x138] sm:$0xff]
    %v136 = vld [vmem:[%s3 + $0x140] sm:$0xf]
    %v137 = vld [vmem:[%s3 + $0x144] sm:$0xff]
    %v138 = vld [vmem:[%s3 + $0x14c] sm:$0xf]
    %v139 = vld [vmem:[%s3 + $0x150] sm:$0xff]
    %v140 = vld [vmem:[%s3 + $0x158] sm:$0xf]
    %v141 = vld [vmem:[%s3 + $0x15c] sm:$0xff]
    %v142 = vld [vmem:[%s3 + $0x164] sm:$0xf]
    %v143 = vld [vmem:[%s3 + $0x168] sm:$0xff]
    %v144 = vld [vmem:[%s3 + $0x170] sm:$0xf]
    %v145 = vld [vmem:[%s3 + $0x174] sm:$0xff]
    %v146 = vld [vmem:[%s3 + $0x17c] sm:$0xf]
    %v147 = vld [vmem:[%s3 + $0x180] sm:$0xff]
    %v148 = vld [vmem:[%s3 + $0x188] sm:$0xf]
    %v149 = vld [vmem:[%s3 + $0x18c] sm:$0xff]
    %v150 = vld [vmem:[%s3 + $0x194] sm:$0xf]
    %v151 = vld [vmem:[%s3 + $0x198] sm:$0xff]
    %v152 = vld [vmem:[%s3 + $0x1a0] sm:$0xf]
    %v153 = vld [vmem:[%s3 + $0x1a4] sm:$0xff]
    %v154 = vld [vmem:[%s3 + $0x1ac] sm:$0xf]
    %v155 = vld [vmem:[%s3 + $0x1b0] sm:$0xff]
    %v156 = vld [vmem:[%s3 + $0x1b8] sm:$0xf]
    %v157 = vld [vmem:[%s3 + $0x1bc] sm:$0xff]
    %v158 = vld [vmem:[%s3 + $0x1c4] sm:$0xf]
    %v159 = vld [vmem:[%s3 + $0x1c8] sm:$0xff]
    %v160 = vld [vmem:[%s3 + $0x1d0] sm:$0xf]
    %v161 = vld [vmem:[%s3 + $0x1d4] sm:$0xff]
    %v162 = vld [vmem:[%s3 + $0x1dc] sm:$0xf]
    %v163 = vld [vmem:[%s3 + $0x1e0] sm:$0xff]
    %v164 = vld [vmem:[%s3 + $0x1e8] sm:$0xf]
    %v165 = vld [vmem:[%s3 + $0x1ec] sm:$0xff]
    %v166 = vld [vmem:[%s3 + $0x1f4] sm:$0xf]
    %v167 = vld [vmem:[%s3 + $0x1f8] sm:$0xff]
    %v168 = vld [vmem:[%s3 + $0x200] sm:$0xf]
    %v169 = vld [vmem:[%s3 + $0x204] sm:$0xff]
    %v170 = vld [vmem:[%s3 + $0x20c] sm:$0xf]
    %v171 = vld [vmem:[%s3 + $0x210] sm:$0xff]
    %v172 = vld [vmem:[%s3 + $0x218] sm:$0xf]
    %v173 = vld [vmem:[%s3 + $0x21c] sm:$0xff]
    %v174 = vld [vmem:[%s3 + $0x224] sm:$0xf]
    %v175 = vld [vmem:[%s3 + $0x228] sm:$0xff]
    %v176 = vld [vmem:[%s3 + $0x230] sm:$0xf]
    %v177 = vld [vmem:[%s3 + $0x234] sm:$0xff]
    %v178 = vld [vmem:[%s3 + $0x23c] sm:$0xf]
    %v179 = vld [vmem:[%s3 + $0x240] sm:$0xff]
    %v180 = vld [vmem:[%s3 + $0x248] sm:$0xf]
    %v181 = vld [vmem:[%s3 + $0x24c] sm:$0xff]
    %v182 = vld [vmem:[%s3 + $0x254] sm:$0xf]
    %v183 = vld [vmem:[%s3 + $0x258] sm:$0xff]
    %v184 = vld [vmem:[%s3 + $0x260] sm:$0xf]
    %v185 = vld [vmem:[%s3 + $0x264] sm:$0xff]
    %v186 = vld [vmem:[%s3 + $0x26c] sm:$0xf]
    %v187 = vld [vmem:[%s3 + $0x270] sm:$0xff]
    %v188 = vld [vmem:[%s3 + $0x278] sm:$0xf]
    %v189 = vld [vmem:[%s3 + $0x27c] sm:$0xff]
    %v190 = vld [vmem:[%s3 + $0x284] sm:$0xf]
    %v191 = vld [vmem:[%s3 + $0x288] sm:$0xff]
    %v192 = vld [vmem:[%s3 + $0x290] sm:$0xf]
    %v193 = vld [vmem:[%s3 + $0x294] sm:$0xff]
    %v194 = vld [vmem:[%s3 + $0x29c] sm:$0xf]
    %v195 = vld [vmem:[%s3 + $0x2a0] sm:$0xff]
    %v196 = vld [vmem:[%s3 + $0x2a8] sm:$0xf]
    %v197 = vld [vmem:[%s3 + $0x2ac] sm:$0xff]
    %v198 = vld [vmem:[%s3 + $0x2b4] sm:$0xf]
    %v199 = vld [vmem:[%s3 + $0x2b8] sm:$0xff]
    %v200 = vld [vmem:[%s3 + $0x2c0] sm:$0xf]
    %v201 = vld [vmem:[%s3 + $0x2c4] sm:$0xff]
    %v202 = vld [vmem:[%s3 + $0x2cc] sm:$0xf]
    %v203 = vld [vmem:[%s3 + $0x2d0] sm:$0xff]
    %v204 = vld [vmem:[%s3 + $0x2d8] sm:$0xf]
    %v205 = vld [vmem:[%s3 + $0x2dc] sm:$0xff]
    %v206 = vld [vmem:[%s3 + $0x2e4] sm:$0xf]
    %v207 = vld [vmem:[%s3 + $0x2e8] sm:$0xff]
    %v208 = vld [vmem:[%s3 + $0x2f0] sm:$0xf]
    %v209 = vld [vmem:[%s3 + $0x2f4] sm:$0xff]
    %v210 = vld [vmem:[%s3 + $0x2fc] sm:$0xf]
    %v211 = vld [vmem:[%s3 + $0x300] sm:$0xff]
    %v212 = vld [vmem:[%s3 + $0x308] sm:$0xf]
    %v213 = vld [vmem:[%s3 + $0x30c] sm:$0xff]
    %v214 = vld [vmem:[%s3 + $0x314] sm:$0xf]
    %v215 = vld [vmem:[%s3 + $0x318] sm:$0xff]
    %v216 = vld [vmem:[%s3 + $0x320] sm:$0xf]
    %v217 = vld [vmem:[%s3 + $0x324] sm:$0xff]
    %v218 = vld [vmem:[%s3 + $0x32c] sm:$0xf]
    %v219 = vld [vmem:[%s3 + $0x330] sm:$0xff]
    %v220 = vld [vmem:[%s3 + $0x338] sm:$0xf]
    %v221 = vld [vmem:[%s3 + $0x33c] sm:$0xff]
    %v222 = vld [vmem:[%s3 + $0x344] sm:$0xf]
    %v223 = vld [vmem:[%s3 + $0x348] sm:$0xff]
    %v224 = vld [vmem:[%s3 + $0x350] sm:$0xf]
    %v225 = vld [vmem:[%s3 + $0x354] sm:$0xff]
    %v226 = vld [vmem:[%s3 + $0x35c] sm:$0xf]
    %v227 = vld [vmem:[%s3 + $0x360] sm:$0xff]
    %v228 = vld [vmem:[%s3 + $0x368] sm:$0xf]
    %v229 = vld [vmem:[%s3 + $0x36c] sm:$0xff]
    %v230 = vld [vmem:[%s3 + $0x374] sm:$0xf]
    %v231 = vld [vmem:[%s3 + $0x378] sm:$0xff]
    %v232 = vld [vmem:[%s3 + $0x380] sm:$0xf]
    %v233 = vld [vmem:[%s3 + $0x384] sm:$0xff]
    %v234 = vld [vmem:[%s3 + $0x38c] sm:$0xf]
    %v235 = vld [vmem:[%s3 + $0x390] sm:$0xff]
    %v236 = vld [vmem:[%s3 + $0x398] sm:$0xf]
    %v237 = vld [vmem:[%s3 + $0x39c] sm:$0xff]
    %v238 = vld [vmem:[%s3 + $0x3a4] sm:$0xf]
    %v239 = vld [vmem:[%s3 + $0x3a8] sm:$0xff]
    %v240 = vld [vmem:[%s3 + $0x3b0] sm:$0xf]
    %v241 = vld [vmem:[%s3 + $0x3b4] sm:$0xff]
    %v242 = vld [vmem:[%s3 + $0x3bc] sm:$0xf]
    %v243 = vld [vmem:[%s3 + $0x3c0] sm:$0xff]
    %v244 = vld [vmem:[%s3 + $0x3c8] sm:$0xf]
    %v245 = vld [vmem:[%s3 + $0x3cc] sm:$0xff]
    %v246 = vld [vmem:[%s3 + $0x3d4] sm:$0xf]
    %v247 = vld [vmem:[%s3 + $0x3d8] sm:$0xff]
    %v248 = vld [vmem:[%s3 + $0x3e0] sm:$0xf]
    %v249 = vld [vmem:[%s3 + $0x3e4] sm:$0xff]
    %v250 = vld [vmem:[%s3 + $0x3ec] sm:$0xf]
    %v251 = vld [vmem:[%s3 + $0x3f0] sm:$0xff]
    %v252 = vld [vmem:[%s3 + $0x3f8] sm:$0xf]
    %v253 = vld [vmem:[%s3 + $0x3fc] sm:$0xff]
    %v254 = vld [vmem:[%s3 + $0x404] sm:$0xf]
    %v255 = vld [vmem:[%s3 + $0x408] sm:$0xff]
    %v256 = vld [vmem:[%s3 + $0x410] sm:$0xf]
    %v257 = vld [vmem:[%s3 + $0x414] sm:$0xff]
    %v258 = vld [vmem:[%s3 + $0x41c] sm:$0xf]
    %v259 = vld [vmem:[%s3 + $0x420] sm:$0xff]
    %v260 = vld [vmem:[%s3 + $0x428] sm:$0xf]
    %v261 = vld [vmem:[%s3 + $0x42c] sm:$0xff]
    %v262 = vld [vmem:[%s3 + $0x434] sm:$0xf]
    %v263 = vld [vmem:[%s3 + $0x438] sm:$0xff]
    %v264 = vld [vmem:[%s3 + $0x440] sm:$0xf]
    %v265 = vld [vmem:[%s3 + $0x444] sm:$0xff]
    %v266 = vld [vmem:[%s3 + $0x44c] sm:$0xf]
    %v267 = vld [vmem:[%s3 + $0x450] sm:$0xff]
    %v268 = vld [vmem:[%s3 + $0x458] sm:$0xf]
    %v269 = vld [vmem:[%s3 + $0x45c] sm:$0xff]
    %v270 = vld [vmem:[%s3 + $0x464] sm:$0xf]
    %v271 = vld [vmem:[%s3 + $0x468] sm:$0xff]
    %v272 = vld [vmem:[%s3 + $0x470] sm:$0xf]
    %v273 = vld [vmem:[%s3 + $0x474] sm:$0xff]
    %v274 = vld [vmem:[%s3 + $0x47c] sm:$0xf]
    %v275 = vld [vmem:[%s3 + $0x480] sm:$0xff]
    %v276 = vld [vmem:[%s3 + $0x488] sm:$0xf]
    %v277 = vld [vmem:[%s3 + $0x48c] sm:$0xff]
    %v278 = vld [vmem:[%s3 + $0x494] sm:$0xf]
    %v279 = vld [vmem:[%s3 + $0x498] sm:$0xff]
    %v280 = vld [vmem:[%s3 + $0x4a0] sm:$0xf]
    %v281 = vld [vmem:[%s3 + $0x4a4] sm:$0xff]
    %v282 = vld [vmem:[%s3 + $0x4ac] sm:$0xf]
    %v283 = vld [vmem:[%s3 + $0x4b0] sm:$0xff]
    %v284 = vld [vmem:[%s3 + $0x4b8] sm:$0xf]
    %v285 = vld [vmem:[%s3 + $0x4bc] sm:$0xff]
    %v286 = vld [vmem:[%s3 + $0x4c4] sm:$0xf]
    %v287 = vld [vmem:[%s3 + $0x4c8] sm:$0xff]
    %v288 = vld [vmem:[%s3 + $0x4d0] sm:$0xf]
    %v289 = vld [vmem:[%s3 + $0x4d4] sm:$0xff]
    %v290 = vld [vmem:[%s3 + $0x4dc] sm:$0xf]
    %v291 = vld [vmem:[%s3 + $0x4e0] sm:$0xff]
    %v292 = vld [vmem:[%s3 + $0x4e8] sm:$0xf]
    %v293 = vld [vmem:[%s3 + $0x4ec] sm:$0xff]
    %v294 = vld [vmem:[%s3 + $0x4f4] sm:$0xf]
    %v295 = vld [vmem:[%s3 + $0x4f8] sm:$0xff]
    %v296 = vld [vmem:[%s3 + $0x500] sm:$0xf]
    %v297 = vld [vmem:[%s3 + $0x504] sm:$0xff]
    %v298 = vld [vmem:[%s3 + $0x50c] sm:$0xf]
    %v299 = vld [vmem:[%s3 + $0x510] sm:$0xff]
    %v300 = vld [vmem:[%s3 + $0x518] sm:$0xf]
    %v301 = vld [vmem:[%s3 + $0x51c] sm:$0xff]
    %v302 = vld [vmem:[%s3 + $0x524] sm:$0xf]
    %v303 = vld [vmem:[%s3 + $0x528] sm:$0xff]
    %v304 = vld [vmem:[%s3 + $0x530] sm:$0xf]
    %v305 = vld [vmem:[%s3 + $0x534] sm:$0xff]
    %v306 = vld [vmem:[%s3 + $0x53c] sm:$0xf]
    %v307 = vld [vmem:[%s3 + $0x540] sm:$0xff]
    %v308 = vld [vmem:[%s3 + $0x548] sm:$0xf]
    %v309 = vld [vmem:[%s3 + $0x54c] sm:$0xff]
    %v310 = vld [vmem:[%s3 + $0x554] sm:$0xf]
    %v311 = vld [vmem:[%s3 + $0x558] sm:$0xff]
    %v312 = vld [vmem:[%s3 + $0x560] sm:$0xf]
    %v313 = vld [vmem:[%s3 + $0x564] sm:$0xff]
    %v314 = vld [vmem:[%s3 + $0x56c] sm:$0xf]
    %v315 = vld [vmem:[%s3 + $0x570] sm:$0xff]
    %v316 = vld [vmem:[%s3 + $0x578] sm:$0xf]
    %v317 = vld [vmem:[%s3 + $0x57c] sm:$0xff]
    %v318 = vld [vmem:[%s3 + $0x584] sm:$0xf]
    %v319 = vld [vmem:[%s3 + $0x588] sm:$0xff]
    %v320 = vld [vmem:[%s3 + $0x590] sm:$0xf]
    %v321 = vld [vmem:[%s3 + $0x594] sm:$0xff]
    %v322 = vld [vmem:[%s3 + $0x59c] sm:$0xf]
    %v323 = vld [vmem:[%s3 + $0x5a0] sm:$0xff]
    %v324 = vld [vmem:[%s3 + $0x5a8] sm:$0xf]
    %v325 = vld [vmem:[%s3 + $0x5ac] sm:$0xff]
    %v326 = vld [vmem:[%s3 + $0x5b4] sm:$0xf]
    %v327 = vld [vmem:[%s3 + $0x5b8] sm:$0xff]
    %v328 = vld [vmem:[%s3 + $0x5c0] sm:$0xf]
    %v329 = vld [vmem:[%s3 + $0x5c4] sm:$0xff]
    %v330 = vld [vmem:[%s3 + $0x5cc] sm:$0xf]
    %v331 = vld [vmem:[%s3 + $0x5d0] sm:$0xff]
    %v332 = vld [vmem:[%s3 + $0x5d8] sm:$0xf]
    %v333 = vld [vmem:[%s3 + $0x5dc] sm:$0xff]
    %v334 = vld [vmem:[%s3 + $0x5e4] sm:$0xf]
    %v335 = vld [vmem:[%s4] sm:$0x7]
    %v336 = vld [vmem:[%s0] sm:$0xff]
    %v337 = vpack.c.bf16 %v336, %v336
    %339 = vrot.lane.b32.xlu0 %v337, 56
    %v340 = vpop.permute.xlu0 %339
    %vm341 = vcmask 457728
    %v344 = vsel %vm341, 0, %v340
    %v347 = vlaneseq
    %v348 = vshrl.u32 %v347, 7
    %v349 = vsub.s32 0, %v348
    %v350 = vrot.slane %v82, %v349
    %v351 = vlaneseq
    %v352 = vshrl.u32 %v351, 7
    %v353 = vsub.s32 1, %v352
    %v354 = vrot.slane %v82, %v353
    %v355 = vlaneseq
    %v356 = vshrl.u32 %v355, 7
    %v357 = vsub.s32 2, %v356
    %v358 = vrot.slane %v82, %v357
    %v404 = vunpack.c.l.b16 %v40
    %v405 = vunpack.c.h.b16 %v40
    %v406 = vunpack.c.l.b16 %v41
    %v407 = vunpack.c.l.b16 %v42
    %v408 = vunpack.c.h.b16 %v42
    %v409 = vunpack.c.l.b16 %v43
    %v410 = vunpack.c.l.b16 %v44
    %v411 = vunpack.c.h.b16 %v44
    %v412 = vunpack.c.l.b16 %v45
    %v413 = vunpack.c.l.b16 %v46
    %v414 = vunpack.c.h.b16 %v46
    %v415 = vunpack.c.l.b16 %v47
    %v416 = vunpack.c.l.b16 %v48
    %v417 = vunpack.c.h.b16 %v48
    %v418 = vunpack.c.l.b16 %v49
    %v419 = vunpack.c.l.b16 %v50
    %v420 = vunpack.c.h.b16 %v50
    %v421 = vunpack.c.l.b16 %v51
    %v422 = vunpack.c.l.b16 %v52
    %v423 = vunpack.c.h.b16 %v52
    %v424 = vunpack.c.l.b16 %v53
    %v425 = vunpack.c.l.b16 %v54
    %v426 = vunpack.c.h.b16 %v54
    %v427 = vunpack.c.l.b16 %v55
    %v428 = vunpack.c.l.b16 %v56
    %v429 = vunpack.c.h.b16 %v56
    %v430 = vunpack.c.l.b16 %v57
    %v431 = vunpack.c.l.b16 %v58
    %v432 = vunpack.c.h.b16 %v58
    %v433 = vunpack.c.l.b16 %v59
    %v434 = vunpack.c.l.b16 %v60
    %v435 = vunpack.c.h.b16 %v60
    %v436 = vunpack.c.l.b16 %v61
    %v437 = vunpack.c.l.b16 %v62
    %v438 = vunpack.c.h.b16 %v62
    %v439 = vunpack.c.l.b16 %v63
    %v440 = vunpack.c.l.b16 %v64
    %v441 = vunpack.c.h.b16 %v64
    %v442 = vunpack.c.l.b16 %v65
    %v443 = vunpack.c.l.b16 %v66
    %v444 = vunpack.c.h.b16 %v66
    %v445 = vunpack.c.l.b16 %v67
    %v446 = vunpack.c.l.b16 %v68
    %v447 = vunpack.c.h.b16 %v68
    %v448 = vunpack.c.l.b16 %v69
    %v449 = vunpack.c.l.b16 %v70
    %v450 = vunpack.c.h.b16 %v70
    %v451 = vunpack.c.l.b16 %v71
    %v452 = vunpack.c.l.b16 %v72
    %v453 = vunpack.c.h.b16 %v72
    %v454 = vunpack.c.l.b16 %v73
    %v455 = vunpack.c.l.b16 %v74
    %v456 = vunpack.c.h.b16 %v74
    %v457 = vunpack.c.l.b16 %v75
    %v458 = vunpack.c.l.b16 %v76
    %v459 = vunpack.c.h.b16 %v76
    %v460 = vunpack.c.l.b16 %v77
    %v461 = vunpack.c.l.b16 %v78
    %v462 = vunpack.c.h.b16 %v78
    %v463 = vunpack.c.l.b16 %v79
    %v464 = vunpack.c.l.b16 %v80
    %v465 = vunpack.c.h.b16 %v80
    %v466 = vunpack.c.l.b16 %v81
    %v467 = vpack.c.b16 %v407, %v404
    %v468 = vpack.c.b16 %v408, %v405
    %v469 = vpack.c.b16 %v409, %v406
    %v470 = vpack.c.b16 %v413, %v410
    %v471 = vpack.c.b16 %v414, %v411
    %v472 = vpack.c.b16 %v415, %v412
    %v473 = vpack.c.b16 %v419, %v416
    %v474 = vpack.c.b16 %v420, %v417
    %v475 = vpack.c.b16 %v421, %v418
    %v476 = vpack.c.b16 %v425, %v422
    %v477 = vpack.c.b16 %v426, %v423
    %v478 = vpack.c.b16 %v427, %v424
    %v479 = vpack.c.b16 %v431, %v428
    %v480 = vpack.c.b16 %v432, %v429
    %v481 = vpack.c.b16 %v433, %v430
    %v482 = vpack.c.b16 %v437, %v434
    %v483 = vpack.c.b16 %v438, %v435
    %v484 = vpack.c.b16 %v439, %v436
    %v485 = vpack.c.b16 %v443, %v440
    %v486 = vpack.c.b16 %v444, %v441
    %v487 = vpack.c.b16 %v445, %v442
    %v488 = vpack.c.b16 %v449, %v446
    %v489 = vpack.c.b16 %v450, %v447
    %v490 = vpack.c.b16 %v451, %v448
    %v491 = vpack.c.b16 %v455, %v452
    %v492 = vpack.c.b16 %v456, %v453
    %v493 = vpack.c.b16 %v457, %v454
    %v494 = vpack.c.b16 %v461, %v458
    %v495 = vpack.c.b16 %v462, %v459
    %v496 = vpack.c.b16 %v463, %v460
    %v497 = vpack.c.b16 %v464, %v464
    %v498 = vpack.c.b16 %v465, %v465
    %v499 = vpack.c.b16 %v466, %v466
    %vm530 = vcmask 326656
    %v531 = vsel %vm530, %v340, 0
    %vm533 = vcmask 1043456
    %v535 = vsel %vm533, %v497, 0
    %v538 = vsel %vm533, %v498, 0
    %v541 = vsel %vm533, %v499, 0
    %543 = vmatprep.subr.bf16.mxu0 %v489
    %544 = vmatpush1.bf16.msra.mxu0 %v488
    %545 = vmatprep.subr.bf16.mxu0 %v486
    %546 = vmatpush1.bf16.msra.mxu0 %v485
    %547 = vmatprep.subr.bf16.mxu0 %v483
    %548 = vmatpush1.bf16.msra.mxu0 %v482
    %549 = vmatprep.subr.bf16.mxu0 %v480
    %550 = vmatpush1.bf16.msra.mxu0 %v479
    %551 = vmatprep.subr.bf16.mxu0 %v477
    %552 = vmatpush1.bf16.msra.mxu0 %v476
    %553 = vmatprep.subr.bf16.mxu0 %v474
    %554 = vmatpush1.bf16.msra.mxu0 %v473
    %555 = vmatprep.subr.bf16.mxu0 %v471
    %556 = vmatpush1.bf16.msra.mxu0 %v470
    %557 = vmatprep.subr.bf16.mxu0 %v468
    %558 = vmatpush1.bf16.msra.mxu0 %v467
    %559 = vmatprep.subr.bf16.mxu0 0
    %560 = vmatpush2.bf16.msra.mxu0 0
    %561 = vmatprep.subr.bf16.mxu0 0
    %562 = vmatpush2.bf16.msra.mxu0 0
    %563 = vmatprep.subr.bf16.mxu0 0
    %564 = vmatpush2.bf16.msra.mxu0 0
    %565 = vmatprep.subr.bf16.mxu0 0
    %566 = vmatpush2.bf16.msra.mxu0 0
    %567 = vmatprep.subr.bf16.mxu0 0
    %568 = vmatpush2.bf16.msra.mxu0 0
    %569 = vmatprep.subr.bf16.mxu0 %v538
    %570 = vmatpush2.bf16.msra.mxu0 %v535
    %571 = vmatprep.subr.bf16.mxu0 %v495
    %572 = vmatpush2.bf16.msra.mxu0 %v494
    %573 = vmatprep.subr.bf16.mxu0 %v492
    %574 = vmatpush2.bf16.msra.mxu0 %v491
    %575 = vmatprep.mubr.bf16.mxu0 %v531
    %576 = vmatmul.mubr.bf16.gmra.mxu0 %v344
    %v577 = vpop.f32.mrf.mxu0
    %v578 = vadd.f32 %v350, %v577
    %v579 = vpop.f32.mrf.mxu0
    %v580 = vadd.f32 %v354, %v579
    %v581 = vpop.f32.mrf.mxu0
    %v582 = vpop.f32.mrf.mxu0
    %583 = vdwg.mxu0
    %584 = vmatprep.subr.bf16.mxu0 0
    %585 = vmatpush1.bf16.msra.mxu0 %v490
    %586 = vmatprep.subr.bf16.mxu0 0
    %587 = vmatpush1.bf16.msra.mxu0 %v487
    %588 = vmatprep.subr.bf16.mxu0 0
    %589 = vmatpush1.bf16.msra.mxu0 %v484
    %590 = vmatprep.subr.bf16.mxu0 0
    %591 = vmatpush1.bf16.msra.mxu0 %v481
    %592 = vmatprep.subr.bf16.mxu0 0
    %593 = vmatpush1.bf16.msra.mxu0 %v478
    %594 = vmatprep.subr.bf16.mxu0 0
    %595 = vmatpush1.bf16.msra.mxu0 %v475
    %596 = vmatprep.subr.bf16.mxu0 0
    %597 = vmatpush1.bf16.msra.mxu0 %v472
    %598 = vmatprep.subr.bf16.mxu0 0
    %599 = vmatpush1.bf16.msra.mxu0 %v469
    %600 = vmatprep.subr.bf16.mxu0 0
    %601 = vmatpush2.bf16.msra.mxu0 0
    %602 = vmatprep.subr.bf16.mxu0 0
    %603 = vmatpush2.bf16.msra.mxu0 0
    %604 = vmatprep.subr.bf16.mxu0 0
    %605 = vmatpush2.bf16.msra.mxu0 0
    %606 = vmatprep.subr.bf16.mxu0 0
    %607 = vmatpush2.bf16.msra.mxu0 0
    %608 = vmatprep.subr.bf16.mxu0 0
    %609 = vmatpush2.bf16.msra.mxu0 0
    %610 = vmatprep.subr.bf16.mxu0 0
    %611 = vmatpush2.bf16.msra.mxu0 %v541
    %612 = vmatprep.subr.bf16.mxu0 0
    %613 = vmatpush2.bf16.msra.mxu0 %v496
    %614 = vmatprep.subr.bf16.mxu0 0
    %615 = vmatpush2.bf16.msra.mxu0 %v493
    %616 = vmatprep.mubr.bf16.mxu0 %v531
    %617 = vmatmul.mubr.bf16.gmra.mxu0 %v344
    %v618 = vpop.f32.mrf.mxu0
    %v619 = vadd.f32 %v358, %v618
    %v620 = vpop.f32.mrf.mxu0
    %v621 = vpop.f32.mrf.mxu0
    %v622 = vpop.f32.mrf.mxu0
    %623 = vdwg.mxu0
    %v624 = vmax.f32 %v578, 0.0
    %v625 = vmax.f32 %v580, 0.0
    %v626 = vmax.f32 %v619, 0.0
    %629 = vrot.lane.b32.xlu0 %v625, 88
    %v630 = vpop.permute.xlu0 %629
    %631 = vrot.lane.b32.xlu0 %v626, 88
    %v632 = vpop.permute.xlu0 %631
    %vm633 = vcmask 719872
    %v634 = vsel %vm633, %v630, %v632
    %v637 = vadd.f32 %v624, %v634
    %v638 = vadd.f32 %v625, %v632
    %v639 = vmul.f32 %v637, 0.5
    %v640 = vmul.f32 %v638, 0.5
    %641 = vst [vmem:[#allocation2] sm:$0xff] %v639
    %642 = vst.msk [vmem:[#allocation2 + $0x8] sm:$0xff] %vm530, %v640
    %v643 = vld [vmem:[%s0] sm:$0xff]
    %v644 = vld [vmem:[%s0 + $0x8] sm:$0xff]
    %v645 = vpack.c.bf16 %v643, %v643
    %v646 = vpack.c.bf16 %v644, %v644
    %v648 = vsel %vm530, %v646, 0
    %650 = vmatprep.subr.bf16.mxu0 %v489
    %651 = vmatpush1.bf16.msra.mxu0 %v488
    %652 = vmatprep.subr.bf16.mxu0 %v486
    %653 = vmatpush1.bf16.msra.mxu0 %v485
    %654 = vmatprep.subr.bf16.mxu0 %v483
    %655 = vmatpush1.bf16.msra.mxu0 %v482
    %656 = vmatprep.subr.bf16.mxu0 %v480
    %657 = vmatpush1.bf16.msra.mxu0 %v479
    %658 = vmatprep.subr.bf16.mxu0 %v477
    %659 = vmatpush1.bf16.msra.mxu0 %v476
    %660 = vmatprep.subr.bf16.mxu0 %v474
    %661 = vmatpush1.bf16.msra.mxu0 %v473
    %662 = vmatprep.subr.bf16.mxu0 %v471
    %663 = vmatpush1.bf16.msra.mxu0 %v470
    %664 = vmatprep.subr.bf16.mxu0 %v468
    %665 = vmatpush1.bf16.msra.mxu0 %v467
    %666 = vmatprep.subr.bf16.mxu0 0
    %667 = vmatpush2.bf16.msra.mxu0 0
    %668 = vmatprep.subr.bf16.mxu0 0
    %669 = vmatpush2.bf16.msra.mxu0 0
    %670 = vmatprep.subr.bf16.mxu0 0
    %671 = vmatpush2.bf16.msra.mxu0 0
    %672 = vmatprep.subr.bf16.mxu0 0
    %673 = vmatpush2.bf16.msra.mxu0 0
    %674 = vmatprep.subr.bf16.mxu0 0
    %675 = vmatpush2.bf16.msra.mxu0 0
    %676 = vmatprep.subr.bf16.mxu0 %v538
    %677 = vmatpush2.bf16.msra.mxu0 %v535
    %678 = vmatprep.subr.bf16.mxu0 %v495
    %679 = vmatpush2.bf16.msra.mxu0 %v494
    %680 = vmatprep.subr.bf16.mxu0 %v492
    %681 = vmatpush2.bf16.msra.mxu0 %v491
    %682 = vmatprep.mubr.bf16.mxu0 %v648
    %683 = vmatmul.mubr.bf16.gmra.mxu0 %v645
    %v684 = vpop.f32.mrf.mxu0
    %v685 = vadd.f32 %v350, %v684
    %v686 = vpop.f32.mrf.mxu0
    %v687 = vadd.f32 %v354, %v686
    %v688 = vpop.f32.mrf.mxu0
    %v689 = vpop.f32.mrf.mxu0
    %690 = vdwg.mxu0
    %691 = vmatprep.subr.bf16.mxu0 0
    %692 = vmatpush1.bf16.msra.mxu0 %v490
    %693 = vmatprep.subr.bf16.mxu0 0
    %694 = vmatpush1.bf16.msra.mxu0 %v487
    %695 = vmatprep.subr.bf16.mxu0 0
    %696 = vmatpush1.bf16.msra.mxu0 %v484
    %697 = vmatprep.subr.bf16.mxu0 0
    %698 = vmatpush1.bf16.msra.mxu0 %v481
    %699 = vmatprep.subr.bf16.mxu0 0
    %700 = vmatpush1.bf16.msra.mxu0 %v478
    %701 = vmatprep.subr.bf16.mxu0 0
    %702 = vmatpush1.bf16.msra.mxu0 %v475
    %703 = vmatprep.subr.bf16.mxu0 0
    %704 = vmatpush1.bf16.msra.mxu0 %v472
    %705 = vmatprep.subr.bf16.mxu0 0
    %706 = vmatpush1.bf16.msra.mxu0 %v469
    %707 = vmatprep.subr.bf16.mxu0 0
    %708 = vmatpush2.bf16.msra.mxu0 0
    %709 = vmatprep.subr.bf16.mxu0 0
    %710 = vmatpush2.bf16.msra.mxu0 0
    %711 = vmatprep.subr.bf16.mxu0 0
    %712 = vmatpush2.bf16.msra.mxu0 0
    %713 = vmatprep.subr.bf16.mxu0 0
    %714 = vmatpush2.bf16.msra.mxu0 0
    %715 = vmatprep.subr.bf16.mxu0 0
    %716 = vmatpush2.bf16.msra.mxu0 0
    %717 = vmatprep.subr.bf16.mxu0 0
    %718 = vmatpush2.bf16.msra.mxu0 %v541
    %719 = vmatprep.subr.bf16.mxu0 0
    %720 = vmatpush2.bf16.msra.mxu0 %v496
    %721 = vmatprep.subr.bf16.mxu0 0
    %722 = vmatpush2.bf16.msra.mxu0 %v493
    %723 = vmatprep.mubr.bf16.mxu0 %v648
    %724 = vmatmul.mubr.bf16.gmra.mxu0 %v645
    %v725 = vpop.f32.mrf.mxu0
    %v726 = vadd.f32 %v358, %v725
    %v727 = vpop.f32.mrf.mxu0
    %v728 = vpop.f32.mrf.mxu0
    %v729 = vpop.f32.mrf.mxu0
    %730 = vdwg.mxu0
    %v731 = vmax.f32 %v685, 0.0
    %v732 = vmax.f32 %v687, 0.0
    %v733 = vmax.f32 %v726, 0.0
    %736 = vrot.lane.b32.xlu0 %v732, 88
    %v737 = vpop.permute.xlu0 %736
    %738 = vrot.lane.b32.xlu0 %v733, 88
    %v739 = vpop.permute.xlu0 %738
    %v740 = vsel %vm633, %v737, %v739
    %v743 = vadd.f32 %v731, %v740
    %v744 = vadd.f32 %v732, %v739
    %v745 = vmul.f32 %v743, 0.5
    %v746 = vmul.f32 %v744, 0.5
    %749 = vrot.lane.b32.xlu0 %v745, 40
    %v750 = vpop.permute.xlu0 %749
    %751 = vrot.lane.b32.xlu0 %v746, 40
    %v752 = vpop.permute.xlu0 %751
    %v753 = vsel %vm530, %v750, %v752
    %vm756 = vcmask 1047872
    %757 = vst.msk [vmem:[#allocation2 + $0x8] sm:$0xff] %vm756, %v750
    %vm758 = vcmask 654336
    %759 = vst.msk [vmem:[#allocation2 + $0x10] sm:$0xff] %vm758, %v753
    %v760 = vld [vmem:[%s0] sm:$0xff]
    %v761 = vld [vmem:[%s0 + $0x8] sm:$0xff]
    %v762 = vpack.c.bf16 %v760, %v760
    %v763 = vpack.c.bf16 %v761, %v761
    %766 = vrot.lane.b32.xlu0 %v762, 72
    %v767 = vpop.permute.xlu0 %766
    %768 = vrot.lane.b32.xlu0 %v763, 72
    %v769 = vpop.permute.xlu0 %768
    %vm770 = vcmask 588800
    %v771 = vsel %vm770, %v767, %v769
    %v774 = vsel %vm530, %v769, 0
    %776 = vmatprep.subr.bf16.mxu0 %v489
    %777 = vmatpush1.bf16.msra.mxu0 %v488
    %778 = vmatprep.subr.bf16.mxu0 %v486
    %779 = vmatpush1.bf16.msra.mxu0 %v485
    %780 = vmatprep.subr.bf16.mxu0 %v483
    %781 = vmatpush1.bf16.msra.mxu0 %v482
    %782 = vmatprep.subr.bf16.mxu0 %v480
    %783 = vmatpush1.bf16.msra.mxu0 %v479
    %784 = vmatprep.subr.bf16.mxu0 %v477
    %785 = vmatpush1.bf16.msra.mxu0 %v476
    %786 = vmatprep.subr.bf16.mxu0 %v474
    %787 = vmatpush1.bf16.msra.mxu0 %v473
    %788 = vmatprep.subr.bf16.mxu0 %v471
    %789 = vmatpush1.bf16.msra.mxu0 %v470
    %790 = vmatprep.subr.bf16.mxu0 %v468
    %791 = vmatpush1.bf16.msra.mxu0 %v467
    %792 = vmatprep.subr.bf16.mxu0 0
    %793 = vmatpush2.bf16.msra.mxu0 0
    %794 = vmatprep.subr.bf16.mxu0 0
    %795 = vmatpush2.bf16.msra.mxu0 0
    %796 = vmatprep.subr.bf16.mxu0 0
    %797 = vmatpush2.bf16.msra.mxu0 0
    %798 = vmatprep.subr.bf16.mxu0 0
    %799 = vmatpush2.bf16.msra.mxu0 0
    %800 = vmatprep.subr.bf16.mxu0 0
    %801 = vmatpush2.bf16.msra.mxu0 0
    %802 = vmatprep.subr.bf16.mxu0 %v538
    %803 = vmatpush2.bf16.msra.mxu0 %v535
    %804 = vmatprep.subr.bf16.mxu0 %v495
    %805 = vmatpush2.bf16.msra.mxu0 %v494
    %806 = vmatprep.subr.bf16.mxu0 %v492
    %807 = vmatpush2.bf16.msra.mxu0 %v491
    %808 = vmatprep.mubr.bf16.mxu0 %v774
    %809 = vmatmul.mubr.bf16.gmra.mxu0 %v771
    %v810 = vpop.f32.mrf.mxu0
    %v811 = vadd.f32 %v350, %v810
    %v812 = vpop.f32.mrf.mxu0
    %v813 = vadd.f32 %v354, %v812
    %v814 = vpop.f32.mrf.mxu0
    %v815 = vpop.f32.mrf.mxu0
    %816 = vdwg.mxu0
    %817 = vmatprep.subr.bf16.mxu0 0
    %818 = vmatpush1.bf16.msra.mxu0 %v490
    %819 = vmatprep.subr.bf16.mxu0 0
    %820 = vmatpush1.bf16.msra.mxu0 %v487
    %821 = vmatprep.subr.bf16.mxu0 0
    %822 = vmatpush1.bf16.msra.mxu0 %v484
    %823 = vmatprep.subr.bf16.mxu0 0
    %824 = vmatpush1.bf16.msra.mxu0 %v481
    %825 = vmatprep.subr.bf16.mxu0 0
    %826 = vmatpush1.bf16.msra.mxu0 %v478
    %827 = vmatprep.subr.bf16.mxu0 0
    %828 = vmatpush1.bf16.msra.mxu0 %v475
    %829 = vmatprep.subr.bf16.mxu0 0
    %830 = vmatpush1.bf16.msra.mxu0 %v472
    %831 = vmatprep.subr.bf16.mxu0 0
    %832 = vmatpush1.bf16.msra.mxu0 %v469
    %833 = vmatprep.subr.bf16.mxu0 0
    %834 = vmatpush2.bf16.msra.mxu0 0
    %835 = vmatprep.subr.bf16.mxu0 0
    %836 = vmatpush2.bf16.msra.mxu0 0
    %837 = vmatprep.subr.bf16.mxu0 0
    %838 = vmatpush2.bf16.msra.mxu0 0
    %839 = vmatprep.subr.bf16.mxu0 0
    %840 = vmatpush2.bf16.msra.mxu0 0
    %841 = vmatprep.subr.bf16.mxu0 0
    %842 = vmatpush2.bf16.msra.mxu0 0
    %843 = vmatprep.subr.bf16.mxu0 0
    %844 = vmatpush2.bf16.msra.mxu0 %v541
    %845 = vmatprep.subr.bf16.mxu0 0
    %846 = vmatpush2.bf16.msra.mxu0 %v496
    %847 = vmatprep.subr.bf16.mxu0 0
    %848 = vmatpush2.bf16.msra.mxu0 %v493
    %849 = vmatprep.mubr.bf16.mxu0 %v774
    %850 = vmatmul.mubr.bf16.gmra.mxu0 %v771
    %v851 = vpop.f32.mrf.mxu0
    %v852 = vadd.f32 %v358, %v851
    %v853 = vpop.f32.mrf.mxu0
    %v854 = vpop.f32.mrf.mxu0
    %v855 = vpop.f32.mrf.mxu0
    %856 = vdwg.mxu0
    %v857 = vmax.f32 %v811, 0.0
    %v858 = vmax.f32 %v813, 0.0
    %v859 = vmax.f32 %v852, 0.0
    %862 = vrot.lane.b32.xlu0 %v858, 88
    %v863 = vpop.permute.xlu0 %862
    %864 = vrot.lane.b32.xlu0 %v859, 88
    %v865 = vpop.permute.xlu0 %864
    %v866 = vsel %vm633, %v863, %v865
    %v869 = vadd.f32 %v857, %v866
    %v870 = vadd.f32 %v858, %v865
    %v871 = vmul.f32 %v869, 0.5
    %v872 = vmul.f32 %v870, 0.5
    %875 = vrot.lane.b32.xlu0 %v871, 80
    %v876 = vpop.permute.xlu0 %875
    %877 = vrot.lane.b32.xlu0 %v872, 80
    %v878 = vpop.permute.xlu0 %877
    %v879 = vsel %vm758, %v876, %v878
    %vm882 = vcmask 1048192
    %883 = vst.msk [vmem:[#allocation2 + $0x10] sm:$0xff] %vm882, %v876
    %vm884 = vcmask 982016
    %885 = vst.msk [vmem:[#allocation2 + $0x18] sm:$0xff] %vm884, %v879
    %v886 = vld [vmem:[%s0] sm:$0xff]
    %v887 = vld [vmem:[%s0 + $0x8] sm:$0xff]
    %v888 = vld [vmem:[%s0 + $0x10] sm:$0xff]
    %v889 = vpack.c.bf16 %v886, %v886
    %v890 = vpack.c.bf16 %v887, %v887
    %v891 = vpack.c.bf16 %v888, %v888
    %895 = vrot.lane.b32.xlu0 %v889, 16
    %v896 = vpop.permute.xlu0 %895
    %897 = vrot.lane.b32.xlu0 %v890, 16
    %v898 = vpop.permute.xlu0 %897
    %899 = vrot.lane.b32.xlu0 %v891, 16
    %v900 = vpop.permute.xlu0 %899
    %vm901 = vcmask 130048
    %v902 = vsel %vm901, %v896, %v898
    %v903 = vsel %vm901, %v898, %v900
    %v906 = vsel %vm530, %v903, 0
    %908 = vmatprep.subr.bf16.mxu0 %v489
    %909 = vmatpush1.bf16.msra.mxu0 %v488
    %910 = vmatprep.subr.bf16.mxu0 %v486
    %911 = vmatpush1.bf16.msra.mxu0 %v485
    %912 = vmatprep.subr.bf16.mxu0 %v483
    %913 = vmatpush1.bf16.msra.mxu0 %v482
    %914 = vmatprep.subr.bf16.mxu0 %v480
    %915 = vmatpush1.bf16.msra.mxu0 %v479
    %916 = vmatprep.subr.bf16.mxu0 %v477
    %917 = vmatpush1.bf16.msra.mxu0 %v476
    %918 = vmatprep.subr.bf16.mxu0 %v474
    %919 = vmatpush1.bf16.msra.mxu0 %v473
    %920 = vmatprep.subr.bf16.mxu0 %v471
    %921 = vmatpush1.bf16.msra.mxu0 %v470
    %922 = vmatprep.subr.bf16.mxu0 %v468
    %923 = vmatpush1.bf16.msra.mxu0 %v467
    %924 = vmatprep.subr.bf16.mxu0 0
    %925 = vmatpush2.bf16.msra.mxu0 0
    %926 = vmatprep.subr.bf16.mxu0 0
    %927 = vmatpush2.bf16.msra.mxu0 0
    %928 = vmatprep.subr.bf16.mxu0 0
    %929 = vmatpush2.bf16.msra.mxu0 0
    %930 = vmatprep.subr.bf16.mxu0 0
    %931 = vmatpush2.bf16.msra.mxu0 0
    %932 = vmatprep.subr.bf16.mxu0 0
    %933 = vmatpush2.bf16.msra.mxu0 0
    %934 = vmatprep.subr.bf16.mxu0 %v538
    %935 = vmatpush2.bf16.msra.mxu0 %v535
    %936 = vmatprep.subr.bf16.mxu0 %v495
    %937 = vmatpush2.bf16.msra.mxu0 %v494
    %938 = vmatprep.subr.bf16.mxu0 %v492
    %939 = vmatpush2.bf16.msra.mxu0 %v491
    %940 = vmatprep.mubr.bf16.mxu0 %v906
    %941 = vmatmul.mubr.bf16.gmra.mxu0 %v902
    %v942 = vpop.f32.mrf.mxu0
    %v943 = vadd.f32 %v350, %v942
    %v944 = vpop.f32.mrf.mxu0
    %v945 = vadd.f32 %v354, %v944
    %v946 = vpop.f32.mrf.mxu0
    %v947 = vpop.f32.mrf.mxu0
    %948 = vdwg.mxu0
    %949 = vmatprep.subr.bf16.mxu0 0
    %950 = vmatpush1.bf16.msra.mxu0 %v490
    %951 = vmatprep.subr.bf16.mxu0 0
    %952 = vmatpush1.bf16.msra.mxu0 %v487
    %953 = vmatprep.subr.bf16.mxu0 0
    %954 = vmatpush1.bf16.msra.mxu0 %v484
    %955 = vmatprep.subr.bf16.mxu0 0
    %956 = vmatpush1.bf16.msra.mxu0 %v481
    %957 = vmatprep.subr.bf16.mxu0 0
    %958 = vmatpush1.bf16.msra.mxu0 %v478
    %959 = vmatprep.subr.bf16.mxu0 0
    %960 = vmatpush1.bf16.msra.mxu0 %v475
    %961 = vmatprep.subr.bf16.mxu0 0
    %962 = vmatpush1.bf16.msra.mxu0 %v472
    %963 = vmatprep.subr.bf16.mxu0 0
    %964 = vmatpush1.bf16.msra.mxu0 %v469
    %965 = vmatprep.subr.bf16.mxu0 0
    %966 = vmatpush2.bf16.msra.mxu0 0
    %967 = vmatprep.subr.bf16.mxu0 0
    %968 = vmatpush2.bf16.msra.mxu0 0
    %969 = vmatprep.subr.bf16.mxu0 0
    %970 = vmatpush2.bf16.msra.mxu0 0
    %971 = vmatprep.subr.bf16.mxu0 0
    %972 = vmatpush2.bf16.msra.mxu0 0
    %973 = vmatprep.subr.bf16.mxu0 0
    %974 = vmatpush2.bf16.msra.mxu0 0
    %975 = vmatprep.subr.bf16.mxu0 0
    %976 = vmatpush2.bf16.msra.mxu0 %v541
    %977 = vmatprep.subr.bf16.mxu0 0
    %978 = vmatpush2.bf16.msra.mxu0 %v496
    %979 = vmatprep.subr.bf16.mxu0 0
    %980 = vmatpush2.bf16.msra.mxu0 %v493
    %981 = vmatprep.mubr.bf16.mxu0 %v906
    %982 = vmatmul.mubr.bf16.gmra.mxu0 %v902
    %v983 = vpop.f32.mrf.mxu0
    %v984 = vadd.f32 %v358, %v983
    %v985 = vpop.f32.mrf.mxu0
    %v986 = vpop.f32.mrf.mxu0
    %v987 = vpop.f32.mrf.mxu0
    %988 = vdwg.mxu0
    %v989 = vmax.f32 %v943, 0.0
    %v990 = vmax.f32 %v945, 0.0
    %v991 = vmax.f32 %v984, 0.0
    %994 = vrot.lane.b32.xlu0 %v990, 88
    %v995 = vpop.permute.xlu0 %994
    %996 = vrot.lane.b32.xlu0 %v991, 88
    %v997 = vpop.permute.xlu0 %996
    %v998 = vsel %vm633, %v995, %v997
    %v1001 = vadd.f32 %v989, %v998
    %v1002 = vadd.f32 %v990, %v997
    %v1003 = vmul.f32 %v1001, 0.5
    %v1004 = vmul.f32 %v1002, 0.5
    %1007 = vrot.lane.b32.xlu0 %v1003, 120
    %v1008 = vpop.permute.xlu0 %1007
    %1009 = vrot.lane.b32.xlu0 %v1004, 120
    %v1010 = vpop.permute.xlu0 %1009
    %v1011 = vsel %vm884, %v1008, %v1010
    %vm1015 = vcmask 1048512
    %1016 = vst.msk [vmem:[#allocation2 + $0x18] sm:$0xff] %vm1015, %v1008
    %1017 = vst [vmem:[#allocation2 + $0x20] sm:$0xff] %v1011
    %vm1018 = vcmask 261120
    %1019 = vst.msk [vmem:[#allocation2 + $0x28] sm:$0xff] %vm1018, %v1010
    %v1020 = vld [vmem:[%s0 + $0x8] sm:$0xff]
    %v1021 = vld [vmem:[%s0 + $0x10] sm:$0xff]
    %v1022 = vpack.c.bf16 %v1020, %v1020
    %v1023 = vpack.c.bf16 %v1021, %v1021
    %1026 = vrot.lane.b32.xlu0 %v1022, 88
    %v1027 = vpop.permute.xlu0 %1026
    %1028 = vrot.lane.b32.xlu0 %v1023, 88
    %v1029 = vpop.permute.xlu0 %1028
    %vm1030 = vcmask 719872
    %v1031 = vsel %vm1030, %v1027, %v1029
    %v1034 = vsel %vm530, %v1029, 0
    %1036 = vmatprep.subr.bf16.mxu0 %v489
    %1037 = vmatpush1.bf16.msra.mxu0 %v488
    %1038 = vmatprep.subr.bf16.mxu0 %v486
    %1039 = vmatpush1.bf16.msra.mxu0 %v485
    %1040 = vmatprep.subr.bf16.mxu0 %v483
    %1041 = vmatpush1.bf16.msra.mxu0 %v482
    %1042 = vmatprep.subr.bf16.mxu0 %v480
    %1043 = vmatpush1.bf16.msra.mxu0 %v479
    %1044 = vmatprep.subr.bf16.mxu0 %v477
    %1045 = vmatpush1.bf16.msra.mxu0 %v476
    %1046 = vmatprep.subr.bf16.mxu0 %v474
    %1047 = vmatpush1.bf16.msra.mxu0 %v473
    %1048 = vmatprep.subr.bf16.mxu0 %v471
    %1049 = vmatpush1.bf16.msra.mxu0 %v470
    %1050 = vmatprep.subr.bf16.mxu0 %v468
    %1051 = vmatpush1.bf16.msra.mxu0 %v467
    %1052 = vmatprep.subr.bf16.mxu0 0
    %1053 = vmatpush2.bf16.msra.mxu0 0
    %1054 = vmatprep.subr.bf16.mxu0 0
    %1055 = vmatpush2.bf16.msra.mxu0 0
    %1056 = vmatprep.subr.bf16.mxu0 0
    %1057 = vmatpush2.bf16.msra.mxu0 0
    %1058 = vmatprep.subr.bf16.mxu0 0
    %1059 = vmatpush2.bf16.msra.mxu0 0
    %1060 = vmatprep.subr.bf16.mxu0 0
    %1061 = vmatpush2.bf16.msra.mxu0 0
    %1062 = vmatprep.subr.bf16.mxu0 %v538
    %1063 = vmatpush2.bf16.msra.mxu0 %v535
    %1064 = vmatprep.subr.bf16.mxu0 %v495
    %1065 = vmatpush2.bf16.msra.mxu0 %v494
    %1066 = vmatprep.subr.bf16.mxu0 %v492
    %1067 = vmatpush2.bf16.msra.mxu0 %v491
    %1068 = vmatprep.mubr.bf16.mxu0 %v1034
    %1069 = vmatmul.mubr.bf16.gmra.mxu0 %v1031
    %v1070 = vpop.f32.mrf.mxu0
    %v1071 = vadd.f32 %v350, %v1070
    %v1072 = vpop.f32.mrf.mxu0
    %v1073 = vadd.f32 %v354, %v1072
    %v1074 = vpop.f32.mrf.mxu0
    %v1075 = vpop.f32.mrf.mxu0
    %1076 = vdwg.mxu0
    %1077 = vmatprep.subr.bf16.mxu0 0
    %1078 = vmatpush1.bf16.msra.mxu0 %v490
    %1079 = vmatprep.subr.bf16.mxu0 0
    %1080 = vmatpush1.bf16.msra.mxu0 %v487
    %1081 = vmatprep.subr.bf16.mxu0 0
    %1082 = vmatpush1.bf16.msra.mxu0 %v484
    %1083 = vmatprep.subr.bf16.mxu0 0
    %1084 = vmatpush1.bf16.msra.mxu0 %v481
    %1085 = vmatprep.subr.bf16.mxu0 0
    %1086 = vmatpush1.bf16.msra.mxu0 %v478
    %1087 = vmatprep.subr.bf16.mxu0 0
    %1088 = vmatpush1.bf16.msra.mxu0 %v475
    %1089 = vmatprep.subr.bf16.mxu0 0
    %1090 = vmatpush1.bf16.msra.mxu0 %v472
    %1091 = vmatprep.subr.bf16.mxu0 0
    %1092 = vmatpush1.bf16.msra.mxu0 %v469
    %1093 = vmatprep.subr.bf16.mxu0 0
    %1094 = vmatpush2.bf16.msra.mxu0 0
    %1095 = vmatprep.subr.bf16.mxu0 0
    %1096 = vmatpush2.bf16.msra.mxu0 0
    %1097 = vmatprep.subr.bf16.mxu0 0
    %1098 = vmatpush2.bf16.msra.mxu0 0
    %1099 = vmatprep.subr.bf16.mxu0 0
    %1100 = vmatpush2.bf16.msra.mxu0 0
    %1101 = vmatprep.subr.bf16.mxu0 0
    %1102 = vmatpush2.bf16.msra.mxu0 0
    %1103 = vmatprep.subr.bf16.mxu0 0
    %1104 = vmatpush2.bf16.msra.mxu0 %v541
    %1105 = vmatprep.subr.bf16.mxu0 0
    %1106 = vmatpush2.bf16.msra.mxu0 %v496
    %1107 = vmatprep.subr.bf16.mxu0 0
    %1108 = vmatpush2.bf16.msra.mxu0 %v493
    %1109 = vmatprep.mubr.bf16.mxu0 %v1034
    %1110 = vmatmul.mubr.bf16.gmra.mxu0 %v1031
    %v1111 = vpop.f32.mrf.mxu0
    %v1112 = vadd.f32 %v358, %v1111
    %v1113 = vpop.f32.mrf.mxu0
    %v1114 = vpop.f32.mrf.mxu0
    %v1115 = vpop.f32.mrf.mxu0
    %1116 = vdwg.mxu0
    %v1117 = vmax.f32 %v1071, 0.0
    %v1118 = vmax.f32 %v1073, 0.0
    %v1119 = vmax.f32 %v1112, 0.0
    %1122 = vrot.lane.b32.xlu0 %v1118, 88
    %v1123 = vpop.permute.xlu0 %1122
    %1124 = vrot.lane.b32.xlu0 %v1119, 88
    %v1125 = vpop.permute.xlu0 %1124
    %v1126 = vsel %vm633, %v1123, %v1125
    %v1129 = vadd.f32 %v1117, %v1126
    %v1130 = vadd.f32 %v1118, %v1125
    %v1131 = vmul.f32 %v1129, 0.5
    %v1132 = vmul.f32 %v1130, 0.5
    %1135 = vrot.lane.b32.xlu0 %v1131, 32
    %v1136 = vpop.permute.xlu0 %1135
    %1137 = vrot.lane.b32.xlu0 %v1132, 32
    %v1138 = vpop.permute.xlu0 %1137
    %v1139 = vsel %vm1018, %v1136, %v1138
    %vm1142 = vcmask 1047808
    %1143 = vst.msk [vmem:[#allocation2 + $0x28] sm:$0xff] %vm1142, %v1136
    %vm1144 = vcmask 588800
    %1145 = vst.msk [vmem:[#allocation2 + $0x30] sm:$0xff] %vm1144, %v1139
    %v1146 = vld [vmem:[%s0 + $0x8] sm:$0xff]
    %v1147 = vld [vmem:[%s0 + $0x10] sm:$0xff]
    %v1148 = vld [vmem:[%s0 + $0x18] sm:$0xff]
    %v1149 = vpack.c.bf16 %v1146, %v1146
    %v1150 = vpack.c.bf16 %v1147, %v1147
    %v1151 = vpack.c.bf16 %v1148, %v1148
    %1155 = vrot.lane.b32.xlu0 %v1149, 32
    %v1156 = vpop.permute.xlu0 %1155
    %1157 = vrot.lane.b32.xlu0 %v1150, 32
    %v1158 = vpop.permute.xlu0 %1157
    %1159 = vrot.lane.b32.xlu0 %v1151, 32
    %v1160 = vpop.permute.xlu0 %1159
    %vm1161 = vcmask 261120
    %v1162 = vsel %vm1161, %v1156, %v1158
    %v1163 = vsel %vm1161, %v1158, %v1160
    %v1166 = vsel %vm530, %v1163, 0
    %1168 = vmatprep.subr.bf16.mxu0 %v489
    %1169 = vmatpush1.bf16.msra.mxu0 %v488
    %1170 = vmatprep.subr.bf16.mxu0 %v486
    %1171 = vmatpush1.bf16.msra.mxu0 %v485
    %1172 = vmatprep.subr.bf16.mxu0 %v483
    %1173 = vmatpush1.bf16.msra.mxu0 %v482
    %1174 = vmatprep.subr.bf16.mxu0 %v480
    %1175 = vmatpush1.bf16.msra.mxu0 %v479
    %1176 = vmatprep.subr.bf16.mxu0 %v477
    %1177 = vmatpush1.bf16.msra.mxu0 %v476
    %1178 = vmatprep.subr.bf16.mxu0 %v474
    %1179 = vmatpush1.bf16.msra.mxu0 %v473
    %1180 = vmatprep.subr.bf16.mxu0 %v471
    %1181 = vmatpush1.bf16.msra.mxu0 %v470
    %1182 = vmatprep.subr.bf16.mxu0 %v468
    %1183 = vmatpush1.bf16.msra.mxu0 %v467
    %1184 = vmatprep.subr.bf16.mxu0 0
    %1185 = vmatpush2.bf16.msra.mxu0 0
    %1186 = vmatprep.subr.bf16.mxu0 0
    %1187 = vmatpush2.bf16.msra.mxu0 0
    %1188 = vmatprep.subr.bf16.mxu0 0
    %1189 = vmatpush2.bf16.msra.mxu0 0
    %1190 = vmatprep.subr.bf16.mxu0 0
    %1191 = vmatpush2.bf16.msra.mxu0 0
    %1192 = vmatprep.subr.bf16.mxu0 0
    %1193 = vmatpush2.bf16.msra.mxu0 0
    %1194 = vmatprep.subr.bf16.mxu0 %v538
    %1195 = vmatpush2.bf16.msra.mxu0 %v535
    %1196 = vmatprep.subr.bf16.mxu0 %v495
    %1197 = vmatpush2.bf16.msra.mxu0 %v494
    %1198 = vmatprep.subr.bf16.mxu0 %v492
    %1199 = vmatpush2.bf16.msra.mxu0 %v491
    %1200 = vmatprep.mubr.bf16.mxu0 %v1166
    %1201 = vmatmul.mubr.bf16.gmra.mxu0 %v1162
    %v1202 = vpop.f32.mrf.mxu0
    %v1203 = vadd.f32 %v350, %v1202
    %v1204 = vpop.f32.mrf.mxu0
    %v1205 = vadd.f32 %v354, %v1204
    %v1206 = vpop.f32.mrf.mxu0
    %v1207 = vpop.f32.mrf.mxu0
    %1208 = vdwg.mxu0
    %1209 = vmatprep.subr.bf16.mxu0 0
    %1210 = vmatpush1.bf16.msra.mxu0 %v490
    %1211 = vmatprep.subr.bf16.mxu0 0
    %1212 = vmatpush1.bf16.msra.mxu0 %v487
    %1213 = vmatprep.subr.bf16.mxu0 0
    %1214 = vmatpush1.bf16.msra.mxu0 %v484
    %1215 = vmatprep.subr.bf16.mxu0 0
    %1216 = vmatpush1.bf16.msra.mxu0 %v481
    %1217 = vmatprep.subr.bf16.mxu0 0
    %1218 = vmatpush1.bf16.msra.mxu0 %v478
    %1219 = vmatprep.subr.bf16.mxu0 0
    %1220 = vmatpush1.bf16.msra.mxu0 %v475
    %1221 = vmatprep.subr.bf16.mxu0 0
    %1222 = vmatpush1.bf16.msra.mxu0 %v472
    %1223 = vmatprep.subr.bf16.mxu0 0
    %1224 = vmatpush1.bf16.msra.mxu0 %v469
    %1225 = vmatprep.subr.bf16.mxu0 0
    %1226 = vmatpush2.bf16.msra.mxu0 0
    %1227 = vmatprep.subr.bf16.mxu0 0
    %1228 = vmatpush2.bf16.msra.mxu0 0
    %1229 = vmatprep.subr.bf16.mxu0 0
    %1230 = vmatpush2.bf16.msra.mxu0 0
    %1231 = vmatprep.subr.bf16.mxu0 0
    %1232 = vmatpush2.bf16.msra.mxu0 0
    %1233 = vmatprep.subr.bf16.mxu0 0
    %1234 = vmatpush2.bf16.msra.mxu0 0
    %1235 = vmatprep.subr.bf16.mxu0 0
    %1236 = vmatpush2.bf16.msra.mxu0 %v541
    %1237 = vmatprep.subr.bf16.mxu0 0
    %1238 = vmatpush2.bf16.msra.mxu0 %v496
    %1239 = vmatprep.subr.bf16.mxu0 0
    %1240 = vmatpush2.bf16.msra.mxu0 %v493
    %1241 = vmatprep.mubr.bf16.mxu0 %v1166
    %1242 = vmatmul.mubr.bf16.gmra.mxu0 %v1162
    %v1243 = vpop.f32.mrf.mxu0
    %v1244 = vadd.f32 %v358, %v1243
    %v1245 = vpop.f32.mrf.mxu0
    %v1246 = vpop.f32.mrf.mxu0
    %v1247 = vpop.f32.mrf.mxu0
    %1248 = vdwg.mxu0
    %v1249 = vmax.f32 %v1203, 0.0
    %v1250 = vmax.f32 %v1205, 0.0
    %v1251 = vmax.f32 %v1244, 0.0
    %1254 = vrot.lane.b32.xlu0 %v1250, 88
    %v1255 = vpop.permute.xlu0 %1254
    %1256 = vrot.lane.b32.xlu0 %v1251, 88
    %v1257 = vpop.permute.xlu0 %1256
    %v1258 = vsel %vm633, %v1255, %v1257
    %v1261 = vadd.f32 %v1249, %v1258
    %v1262 = vadd.f32 %v1250, %v1257
    %v1263 = vmul.f32 %v1261, 0.5
    %v1264 = vmul.f32 %v1262, 0.5
    %1267 = vrot.lane.b32.xlu0 %v1263, 72
    %v1268 = vpop.permute.xlu0 %1267
    %1269 = vrot.lane.b32.xlu0 %v1264, 72
    %v1270 = vpop.permute.xlu0 %1269
    %v1271 = vsel %vm1144, %v1268, %v1270
    %vm1274 = vcmask 1048128
    %1275 = vst.msk [vmem:[#allocation2 + $0x30] sm:$0xff] %vm1274, %v1268
    %vm1276 = vcmask 916480
    %1277 = vst.msk [vmem:[#allocation2 + $0x38] sm:$0xff] %vm1276, %v1271
    %v1278 = vld [vmem:[%s0 + $0x10] sm:$0xff]
    %v1279 = vld [vmem:[%s0 + $0x18] sm:$0xff]
    %v1280 = vpack.c.bf16 %v1278, %v1278
    %v1281 = vpack.c.bf16 %v1279, %v1279
    %1284 = vrot.lane.b32.xlu0 %v1280, 104
    %v1285 = vpop.permute.xlu0 %1284
    %1286 = vrot.lane.b32.xlu0 %v1281, 104
    %v1287 = vpop.permute.xlu0 %1286
    %vm1288 = vcmask 850944
    %v1289 = vsel %vm1288, %v1285, %v1287
    %v1292 = vsel %vm530, %v1287, 0
    %1294 = vmatprep.subr.bf16.mxu0 %v489
    %1295 = vmatpush1.bf16.msra.mxu0 %v488
    %1296 = vmatprep.subr.bf16.mxu0 %v486
    %1297 = vmatpush1.bf16.msra.mxu0 %v485
    %1298 = vmatprep.subr.bf16.mxu0 %v483
    %1299 = vmatpush1.bf16.msra.mxu0 %v482
    %1300 = vmatprep.subr.bf16.mxu0 %v480
    %1301 = vmatpush1.bf16.msra.mxu0 %v479
    %1302 = vmatprep.subr.bf16.mxu0 %v477
    %1303 = vmatpush1.bf16.msra.mxu0 %v476
    %1304 = vmatprep.subr.bf16.mxu0 %v474
    %1305 = vmatpush1.bf16.msra.mxu0 %v473
    %1306 = vmatprep.subr.bf16.mxu0 %v471
    %1307 = vmatpush1.bf16.msra.mxu0 %v470
    %1308 = vmatprep.subr.bf16.mxu0 %v468
    %1309 = vmatpush1.bf16.msra.mxu0 %v467
    %1310 = vmatprep.subr.bf16.mxu0 0
    %1311 = vmatpush2.bf16.msra.mxu0 0
    %1312 = vmatprep.subr.bf16.mxu0 0
    %1313 = vmatpush2.bf16.msra.mxu0 0
    %1314 = vmatprep.subr.bf16.mxu0 0
    %1315 = vmatpush2.bf16.msra.mxu0 0
    %1316 = vmatprep.subr.bf16.mxu0 0
    %1317 = vmatpush2.bf16.msra.mxu0 0
    %1318 = vmatprep.subr.bf16.mxu0 0
    %1319 = vmatpush2.bf16.msra.mxu0 0
    %1320 = vmatprep.subr.bf16.mxu0 %v538
    %1321 = vmatpush2.bf16.msra.mxu0 %v535
    %1322 = vmatprep.subr.bf16.mxu0 %v495
    %1323 = vmatpush2.bf16.msra.mxu0 %v494
    %1324 = vmatprep.subr.bf16.mxu0 %v492
    %1325 = vmatpush2.bf16.msra.mxu0 %v491
    %1326 = vmatprep.mubr.bf16.mxu0 %v1292
    %1327 = vmatmul.mubr.bf16.gmra.mxu0 %v1289
    %v1328 = vpop.f32.mrf.mxu0
    %v1329 = vadd.f32 %v350, %v1328
    %v1330 = vpop.f32.mrf.mxu0
    %v1331 = vadd.f32 %v354, %v1330
    %v1332 = vpop.f32.mrf.mxu0
    %v1333 = vpop.f32.mrf.mxu0
    %1334 = vdwg.mxu0
    %1335 = vmatprep.subr.bf16.mxu0 0
    %1336 = vmatpush1.bf16.msra.mxu0 %v490
    %1337 = vmatprep.subr.bf16.mxu0 0
    %1338 = vmatpush1.bf16.msra.mxu0 %v487
    %1339 = vmatprep.subr.bf16.mxu0 0
    %1340 = vmatpush1.bf16.msra.mxu0 %v484
    %1341 = vmatprep.subr.bf16.mxu0 0
    %1342 = vmatpush1.bf16.msra.mxu0 %v481
    %1343 = vmatprep.subr.bf16.mxu0 0
    %1344 = vmatpush1.bf16.msra.mxu0 %v478
    %1345 = vmatprep.subr.bf16.mxu0 0
    %1346 = vmatpush1.bf16.msra.mxu0 %v475
    %1347 = vmatprep.subr.bf16.mxu0 0
    %1348 = vmatpush1.bf16.msra.mxu0 %v472
    %1349 = vmatprep.subr.bf16.mxu0 0
    %1350 = vmatpush1.bf16.msra.mxu0 %v469
    %1351 = vmatprep.subr.bf16.mxu0 0
    %1352 = vmatpush2.bf16.msra.mxu0 0
    %1353 = vmatprep.subr.bf16.mxu0 0
    %1354 = vmatpush2.bf16.msra.mxu0 0
    %1355 = vmatprep.subr.bf16.mxu0 0
    %1356 = vmatpush2.bf16.msra.mxu0 0
    %1357 = vmatprep.subr.bf16.mxu0 0
    %1358 = vmatpush2.bf16.msra.mxu0 0
    %1359 = vmatprep.subr.bf16.mxu0 0
    %1360 = vmatpush2.bf16.msra.mxu0 0
    %1361 = vmatprep.subr.bf16.mxu0 0
    %1362 = vmatpush2.bf16.msra.mxu0 %v541
    %1363 = vmatprep.subr.bf16.mxu0 0
    %1364 = vmatpush2.bf16.msra.mxu0 %v496
    %1365 = vmatprep.subr.bf16.mxu0 0
    %1366 = vmatpush2.bf16.msra.mxu0 %v493
    %1367 = vmatprep.mubr.bf16.mxu0 %v1292
    %1368 = vmatmul.mubr.bf16.gmra.mxu0 %v1289
    %v1369 = vpop.f32.mrf.mxu0
    %v1370 = vadd.f32 %v358, %v1369
    %v1371 = vpop.f32.mrf.mxu0
    %v1372 = vpop.f32.mrf.mxu0
    %v1373 = vpop.f32.mrf.mxu0
    %1374 = vdwg.mxu0
    %v1375 = vmax.f32 %v1329, 0.0
    %v1376 = vmax.f32 %v1331, 0.0
    %v1377 = vmax.f32 %v1370, 0.0
    %1380 = vrot.lane.b32.xlu0 %v1376, 88
    %v1381 = vpop.permute.xlu0 %1380
    %1382 = vrot.lane.b32.xlu0 %v1377, 88
    %v1383 = vpop.permute.xlu0 %1382
    %v1384 = vsel %vm633, %v1381, %v1383
    %v1387 = vadd.f32 %v1375, %v1384
    %v1388 = vadd.f32 %v1376, %v1383
    %v1389 = vmul.f32 %v1387, 0.5
    %v1390 = vmul.f32 %v1388, 0.5
    %1393 = vrot.lane.b32.xlu0 %v1389, 112
    %v1394 = vpop.permute.xlu0 %1393
    %1395 = vrot.lane.b32.xlu0 %v1390, 112
    %v1396 = vpop.permute.xlu0 %1395
    %v1397 = vsel %vm1276, %v1394, %v1396
    %vm1401 = vcmask 1048448
    %1402 = vst.msk [vmem:[#allocation2 + $0x38] sm:$0xff] %vm1401, %v1394
    %1403 = vst [vmem:[#allocation2 + $0x40] sm:$0xff] %v1397
    %vm1404 = vcmask 195584
    %1405 = vst.msk [vmem:[#allocation2 + $0x48] sm:$0xff] %vm1404, %v1396
    %v1406 = vld [vmem:[%s0 + $0x10] sm:$0xff]
    %v1407 = vld [vmem:[%s0 + $0x18] sm:$0xff]
    %v1408 = vpack.c.bf16 %v1406, %v1406
    %v1409 = vpack.c.bf16 %v1407, %v1407
    %1412 = vrot.lane.b32.xlu0 %v1408, 48
    %v1413 = vpop.permute.xlu0 %1412
    %1414 = vrot.lane.b32.xlu0 %v1409, 48
    %v1415 = vpop.permute.xlu0 %1414
    %vm1416 = vcmask 392192
    %v1417 = vsel %vm1416, %v1413, %v1415
    %v1420 = vsel %vm530, %v1415, 0
    %1422 = vmatprep.subr.bf16.mxu0 %v489
    %1423 = vmatpush1.bf16.msra.mxu0 %v488
    %1424 = vmatprep.subr.bf16.mxu0 %v486
    %1425 = vmatpush1.bf16.msra.mxu0 %v485
    %1426 = vmatprep.subr.bf16.mxu0 %v483
    %1427 = vmatpush1.bf16.msra.mxu0 %v482
    %1428 = vmatprep.subr.bf16.mxu0 %v480
    %1429 = vmatpush1.bf16.msra.mxu0 %v479
    %1430 = vmatprep.subr.bf16.mxu0 %v477
    %1431 = vmatpush1.bf16.msra.mxu0 %v476
    %1432 = vmatprep.subr.bf16.mxu0 %v474
    %1433 = vmatpush1.bf16.msra.mxu0 %v473
    %1434 = vmatprep.subr.bf16.mxu0 %v471
    %1435 = vmatpush1.bf16.msra.mxu0 %v470
    %1436 = vmatprep.subr.bf16.mxu0 %v468
    %1437 = vmatpush1.bf16.msra.mxu0 %v467
    %1438 = vmatprep.subr.bf16.mxu0 0
    %1439 = vmatpush2.bf16.msra.mxu0 0
    %1440 = vmatprep.subr.bf16.mxu0 0
    %1441 = vmatpush2.bf16.msra.mxu0 0
    %1442 = vmatprep.subr.bf16.mxu0 0
    %1443 = vmatpush2.bf16.msra.mxu0 0
    %1444 = vmatprep.subr.bf16.mxu0 0
    %1445 = vmatpush2.bf16.msra.mxu0 0
    %1446 = vmatprep.subr.bf16.mxu0 0
    %1447 = vmatpush2.bf16.msra.mxu0 0
    %1448 = vmatprep.subr.bf16.mxu0 %v538
    %1449 = vmatpush2.bf16.msra.mxu0 %v535
    %1450 = vmatprep.subr.bf16.mxu0 %v495
    %1451 = vmatpush2.bf16.msra.mxu0 %v494
    %1452 = vmatprep.subr.bf16.mxu0 %v492
    %1453 = vmatpush2.bf16.msra.mxu0 %v491
    %1454 = vmatprep.mubr.bf16.mxu0 %v1420
    %1455 = vmatmul.mubr.bf16.gmra.mxu0 %v1417
    %v1456 = vpop.f32.mrf.mxu0
    %v1457 = vadd.f32 %v350, %v1456
    %v1458 = vpop.f32.mrf.mxu0
    %v1459 = vadd.f32 %v354, %v1458
    %v1460 = vpop.f32.mrf.mxu0
    %v1461 = vpop.f32.mrf.mxu0
    %1462 = vdwg.mxu0
    %1463 = vmatprep.subr.bf16.mxu0 0
    %1464 = vmatpush1.bf16.msra.mxu0 %v490
    %1465 = vmatprep.subr.bf16.mxu0 0
    %1466 = vmatpush1.bf16.msra.mxu0 %v487
    %1467 = vmatprep.subr.bf16.mxu0 0
    %1468 = vmatpush1.bf16.msra.mxu0 %v484
    %1469 = vmatprep.subr.bf16.mxu0 0
    %1470 = vmatpush1.bf16.msra.mxu0 %v481
    %1471 = vmatprep.subr.bf16.mxu0 0
    %1472 = vmatpush1.bf16.msra.mxu0 %v478
    %1473 = vmatprep.subr.bf16.mxu0 0
    %1474 = vmatpush1.bf16.msra.mxu0 %v475
    %1475 = vmatprep.subr.bf16.mxu0 0
    %1476 = vmatpush1.bf16.msra.mxu0 %v472
    %1477 = vmatprep.subr.bf16.mxu0 0
    %1478 = vmatpush1.bf16.msra.mxu0 %v469
    %1479 = vmatprep.subr.bf16.mxu0 0
    %1480 = vmatpush2.bf16.msra.mxu0 0
    %1481 = vmatprep.subr.bf16.mxu0 0
    %1482 = vmatpush2.bf16.msra.mxu0 0
    %1483 = vmatprep.subr.bf16.mxu0 0
    %1484 = vmatpush2.bf16.msra.mxu0 0
    %1485 = vmatprep.subr.bf16.mxu0 0
    %1486 = vmatpush2.bf16.msra.mxu0 0
    %1487 = vmatprep.subr.bf16.mxu0 0
    %1488 = vmatpush2.bf16.msra.mxu0 0
    %1489 = vmatprep.subr.bf16.mxu0 0
    %1490 = vmatpush2.bf16.msra.mxu0 %v541
    %1491 = vmatprep.subr.bf16.mxu0 0
    %1492 = vmatpush2.bf16.msra.mxu0 %v496
    %1493 = vmatprep.subr.bf16.mxu0 0
    %1494 = vmatpush2.bf16.msra.mxu0 %v493
    %1495 = vmatprep.mubr.bf16.mxu0 %v1420
    %1496 = vmatmul.mubr.bf16.gmra.mxu0 %v1417
    %v1497 = vpop.f32.mrf.mxu0
    %v1498 = vadd.f32 %v358, %v1497
    %v1499 = vpop.f32.mrf.mxu0
    %v1500 = vpop.f32.mrf.mxu0
    %v1501 = vpop.f32.mrf.mxu0
    %1502 = vdwg.mxu0
    %v1503 = vmax.f32 %v1457, 0.0
    %v1504 = vmax.f32 %v1459, 0.0
    %v1505 = vmax.f32 %v1498, 0.0
    %1508 = vrot.lane.b32.xlu0 %v1504, 88
    %v1509 = vpop.permute.xlu0 %1508
    %1510 = vrot.lane.b32.xlu0 %v1505, 88
    %v1511 = vpop.permute.xlu0 %1510
    %v1512 = vsel %vm633, %v1509, %v1511
    %v1515 = vadd.f32 %v1503, %v1512
    %v1516 = vadd.f32 %v1504, %v1511
    %v1517 = vmul.f32 %v1515, 0.5
    %v1518 = vmul.f32 %v1516, 0.5
    %1521 = vrot.lane.b32.xlu0 %v1517, 24
    %v1522 = vpop.permute.xlu0 %1521
    %1523 = vrot.lane.b32.xlu0 %v1518, 24
    %v1524 = vpop.permute.xlu0 %1523
    %v1525 = vsel %vm1404, %v1522, %v1524
    %vm1528 = vcmask 1047744
    %1529 = vst.msk [vmem:[#allocation2 + $0x48] sm:$0xff] %vm1528, %v1522
    %vm1530 = vcmask 523264
    %1531 = vst.msk [vmem:[#allocation2 + $0x50] sm:$0xff] %vm1530, %v1525
    %v1532 = vld [vmem:[%s0 + $0x18] sm:$0xff]
    %v1533 = vld [vmem:[%s0 + $0x20] sm:$0xff]
    %v1534 = vpack.c.bf16 %v1532, %v1532
    %v1535 = vpack.c.bf16 %v1533, %v1533
    %1538 = vrot.lane.b32.xlu0 %v1534, 120
    %v1539 = vpop.permute.xlu0 %1538
    %1540 = vrot.lane.b32.xlu0 %v1535, 120
    %v1541 = vpop.permute.xlu0 %1540
    %vm1542 = vcmask 982016
    %v1543 = vsel %vm1542, %v1539, %v1541
    %v1546 = vsel %vm530, %v1541, 0
    %1548 = vmatprep.subr.bf16.mxu0 %v489
    %1549 = vmatpush1.bf16.msra.mxu0 %v488
    %1550 = vmatprep.subr.bf16.mxu0 %v486
    %1551 = vmatpush1.bf16.msra.mxu0 %v485
    %1552 = vmatprep.subr.bf16.mxu0 %v483
    %1553 = vmatpush1.bf16.msra.mxu0 %v482
    %1554 = vmatprep.subr.bf16.mxu0 %v480
    %1555 = vmatpush1.bf16.msra.mxu0 %v479
    %1556 = vmatprep.subr.bf16.mxu0 %v477
    %1557 = vmatpush1.bf16.msra.mxu0 %v476
    %1558 = vmatprep.subr.bf16.mxu0 %v474
    %1559 = vmatpush1.bf16.msra.mxu0 %v473
    %1560 = vmatprep.subr.bf16.mxu0 %v471
    %1561 = vmatpush1.bf16.msra.mxu0 %v470
    %1562 = vmatprep.subr.bf16.mxu0 %v468
    %1563 = vmatpush1.bf16.msra.mxu0 %v467
    %1564 = vmatprep.subr.bf16.mxu0 0
    %1565 = vmatpush2.bf16.msra.mxu0 0
    %1566 = vmatprep.subr.bf16.mxu0 0
    %1567 = vmatpush2.bf16.msra.mxu0 0
    %1568 = vmatprep.subr.bf16.mxu0 0
    %1569 = vmatpush2.bf16.msra.mxu0 0
    %1570 = vmatprep.subr.bf16.mxu0 0
    %1571 = vmatpush2.bf16.msra.mxu0 0
    %1572 = vmatprep.subr.bf16.mxu0 0
    %1573 = vmatpush2.bf16.msra.mxu0 0
    %1574 = vmatprep.subr.bf16.mxu0 %v538
    %1575 = vmatpush2.bf16.msra.mxu0 %v535
    %1576 = vmatprep.subr.bf16.mxu0 %v495
    %1577 = vmatpush2.bf16.msra.mxu0 %v494
    %1578 = vmatprep.subr.bf16.mxu0 %v492
    %1579 = vmatpush2.bf16.msra.mxu0 %v491
    %1580 = vmatprep.mubr.bf16.mxu0 %v1546
    %1581 = vmatmul.mubr.bf16.gmra.mxu0 %v1543
    %v1582 = vpop.f32.mrf.mxu0
    %v1583 = vadd.f32 %v350, %v1582
    %v1584 = vpop.f32.mrf.mxu0
    %v1585 = vadd.f32 %v354, %v1584
    %v1586 = vpop.f32.mrf.mxu0
    %v1587 = vpop.f32.mrf.mxu0
    %1588 = vdwg.mxu0
    %1589 = vmatprep.subr.bf16.mxu0 0
    %1590 = vmatpush1.bf16.msra.mxu0 %v490
    %1591 = vmatprep.subr.bf16.mxu0 0
    %1592 = vmatpush1.bf16.msra.mxu0 %v487
    %1593 = vmatprep.subr.bf16.mxu0 0
    %1594 = vmatpush1.bf16.msra.mxu0 %v484
    %1595 = vmatprep.subr.bf16.mxu0 0
    %1596 = vmatpush1.bf16.msra.mxu0 %v481
    %1597 = vmatprep.subr.bf16.mxu0 0
    %1598 = vmatpush1.bf16.msra.mxu0 %v478
    %1599 = vmatprep.subr.bf16.mxu0 0
    %1600 = vmatpush1.bf16.msra.mxu0 %v475
    %1601 = vmatprep.subr.bf16.mxu0 0
    %1602 = vmatpush1.bf16.msra.mxu0 %v472
    %1603 = vmatprep.subr.bf16.mxu0 0
    %1604 = vmatpush1.bf16.msra.mxu0 %v469
    %1605 = vmatprep.subr.bf16.mxu0 0
    %1606 = vmatpush2.bf16.msra.mxu0 0
    %1607 = vmatprep.subr.bf16.mxu0 0
    %1608 = vmatpush2.bf16.msra.mxu0 0
    %1609 = vmatprep.subr.bf16.mxu0 0
    %1610 = vmatpush2.bf16.msra.mxu0 0
    %1611 = vmatprep.subr.bf16.mxu0 0
    %1612 = vmatpush2.bf16.msra.mxu0 0
    %1613 = vmatprep.subr.bf16.mxu0 0
    %1614 = vmatpush2.bf16.msra.mxu0 0
    %1615 = vmatprep.subr.bf16.mxu0 0
    %1616 = vmatpush2.bf16.msra.mxu0 %v541
    %1617 = vmatprep.subr.bf16.mxu0 0
    %1618 = vmatpush2.bf16.msra.mxu0 %v496
    %1619 = vmatprep.subr.bf16.mxu0 0
    %1620 = vmatpush2.bf16.msra.mxu0 %v493
    %1621 = vmatprep.mubr.bf16.mxu0 %v1546
    %1622 = vmatmul.mubr.bf16.gmra.mxu0 %v1543
    %v1623 = vpop.f32.mrf.mxu0
    %v1624 = vadd.f32 %v358, %v1623
    %v1625 = vpop.f32.mrf.mxu0
    %v1626 = vpop.f32.mrf.mxu0
    %v1627 = vpop.f32.mrf.mxu0
    %1628 = vdwg.mxu0
    %v1629 = vmax.f32 %v1583, 0.0
    %v1630 = vmax.f32 %v1585, 0.0
    %v1631 = vmax.f32 %v1624, 0.0
    %1634 = vrot.lane.b32.xlu0 %v1630, 88
    %v1635 = vpop.permute.xlu0 %1634
    %1636 = vrot.lane.b32.xlu0 %v1631, 88
    %v1637 = vpop.permute.xlu0 %1636
    %v1638 = vsel %vm633, %v1635, %v1637
    %v1641 = vadd.f32 %v1629, %v1638
    %v1642 = vadd.f32 %v1630, %v1637
    %v1643 = vmul.f32 %v1641, 0.5
    %v1644 = vmul.f32 %v1642, 0.5
    %1647 = vrot.lane.b32.xlu0 %v1643, 64
    %v1648 = vpop.permute.xlu0 %1647
    %1649 = vrot.lane.b32.xlu0 %v1644, 64
    %v1650 = vpop.permute.xlu0 %1649
    %v1651 = vsel %vm1530, %v1648, %v1650
    %vm1654 = vcmask 1048064
    %1655 = vst.msk [vmem:[#allocation2 + $0x50] sm:$0xff] %vm1654, %v1648
    %vm1656 = vcmask 850944
    %1657 = vst.msk [vmem:[#allocation2 + $0x58] sm:$0xff] %vm1656, %v1651
    %v1658 = vld [vmem:[%s0 + $0x18] sm:$0xff]
    %v1659 = vld [vmem:[%s0 + $0x20] sm:$0xff]
    %v1660 = vpack.c.bf16 %v1658, %v1658
    %v1661 = vpack.c.bf16 %v1659, %v1659
    %1664 = vrot.lane.b32.xlu0 %v1660, 64
    %v1665 = vpop.permute.xlu0 %1664
    %1666 = vrot.lane.b32.xlu0 %v1661, 64
    %v1667 = vpop.permute.xlu0 %1666
    %vm1668 = vcmask 523264
    %v1669 = vsel %vm1668, %v1665, %v1667
    %v1672 = vsel %vm530, %v1667, 0
    %1674 = vmatprep.subr.bf16.mxu0 %v489
    %1675 = vmatpush1.bf16.msra.mxu0 %v488
    %1676 = vmatprep.subr.bf16.mxu0 %v486
    %1677 = vmatpush1.bf16.msra.mxu0 %v485
    %1678 = vmatprep.subr.bf16.mxu0 %v483
    %1679 = vmatpush1.bf16.msra.mxu0 %v482
    %1680 = vmatprep.subr.bf16.mxu0 %v480
    %1681 = vmatpush1.bf16.msra.mxu0 %v479
    %1682 = vmatprep.subr.bf16.mxu0 %v477
    %1683 = vmatpush1.bf16.msra.mxu0 %v476
    %1684 = vmatprep.subr.bf16.mxu0 %v474
    %1685 = vmatpush1.bf16.msra.mxu0 %v473
    %1686 = vmatprep.subr.bf16.mxu0 %v471
    %1687 = vmatpush1.bf16.msra.mxu0 %v470
    %1688 = vmatprep.subr.bf16.mxu0 %v468
    %1689 = vmatpush1.bf16.msra.mxu0 %v467
    %1690 = vmatprep.subr.bf16.mxu0 0
    %1691 = vmatpush2.bf16.msra.mxu0 0
    %1692 = vmatprep.subr.bf16.mxu0 0
    %1693 = vmatpush2.bf16.msra.mxu0 0
    %1694 = vmatprep.subr.bf16.mxu0 0
    %1695 = vmatpush2.bf16.msra.mxu0 0
    %1696 = vmatprep.subr.bf16.mxu0 0
    %1697 = vmatpush2.bf16.msra.mxu0 0
    %1698 = vmatprep.subr.bf16.mxu0 0
    %1699 = vmatpush2.bf16.msra.mxu0 0
    %1700 = vmatprep.subr.bf16.mxu0 %v538
    %1701 = vmatpush2.bf16.msra.mxu0 %v535
    %1702 = vmatprep.subr.bf16.mxu0 %v495
    %1703 = vmatpush2.bf16.msra.mxu0 %v494
    %1704 = vmatprep.subr.bf16.mxu0 %v492
    %1705 = vmatpush2.bf16.msra.mxu0 %v491
    %1706 = vmatprep.mubr.bf16.mxu0 %v1672
    %1707 = vmatmul.mubr.bf16.gmra.mxu0 %v1669
    %v1708 = vpop.f32.mrf.mxu0
    %v1709 = vadd.f32 %v350, %v1708
    %v1710 = vpop.f32.mrf.mxu0
    %v1711 = vadd.f32 %v354, %v1710
    %v1712 = vpop.f32.mrf.mxu0
    %v1713 = vpop.f32.mrf.mxu0
    %1714 = vdwg.mxu0
    %1715 = vmatprep.subr.bf16.mxu0 0
    %1716 = vmatpush1.bf16.msra.mxu0 %v490
    %1717 = vmatprep.subr.bf16.mxu0 0
    %1718 = vmatpush1.bf16.msra.mxu0 %v487
    %1719 = vmatprep.subr.bf16.mxu0 0
    %1720 = vmatpush1.bf16.msra.mxu0 %v484
    %1721 = vmatprep.subr.bf16.mxu0 0
    %1722 = vmatpush1.bf16.msra.mxu0 %v481
    %1723 = vmatprep.subr.bf16.mxu0 0
    %1724 = vmatpush1.bf16.msra.mxu0 %v478
    %1725 = vmatprep.subr.bf16.mxu0 0
    %1726 = vmatpush1.bf16.msra.mxu0 %v475
    %1727 = vmatprep.subr.bf16.mxu0 0
    %1728 = vmatpush1.bf16.msra.mxu0 %v472
    %1729 = vmatprep.subr.bf16.mxu0 0
    %1730 = vmatpush1.bf16.msra.mxu0 %v469
    %1731 = vmatprep.subr.bf16.mxu0 0
    %1732 = vmatpush2.bf16.msra.mxu0 0
    %1733 = vmatprep.subr.bf16.mxu0 0
    %1734 = vmatpush2.bf16.msra.mxu0 0
    %1735 = vmatprep.subr.bf16.mxu0 0
    %1736 = vmatpush2.bf16.msra.mxu0 0
    %1737 = vmatprep.subr.bf16.mxu0 0
    %1738 = vmatpush2.bf16.msra.mxu0 0
    %1739 = vmatprep.subr.bf16.mxu0 0
    %1740 = vmatpush2.bf16.msra.mxu0 0
    %1741 = vmatprep.subr.bf16.mxu0 0
    %1742 = vmatpush2.bf16.msra.mxu0 %v541
    %1743 = vmatprep.subr.bf16.mxu0 0
    %1744 = vmatpush2.bf16.msra.mxu0 %v496
    %1745 = vmatprep.subr.bf16.mxu0 0
    %1746 = vmatpush2.bf16.msra.mxu0 %v493
    %1747 = vmatprep.mubr.bf16.mxu0 %v1672
    %1748 = vmatmul.mubr.bf16.gmra.mxu0 %v1669
    %v1749 = vpop.f32.mrf.mxu0
    %v1750 = vadd.f32 %v358, %v1749
    %v1751 = vpop.f32.mrf.mxu0
    %v1752 = vpop.f32.mrf.mxu0
    %v1753 = vpop.f32.mrf.mxu0
    %1754 = vdwg.mxu0
    %v1755 = vmax.f32 %v1709, 0.0
    %v1756 = vmax.f32 %v1711, 0.0
    %v1757 = vmax.f32 %v1750, 0.0
    %1760 = vrot.lane.b32.xlu0 %v1756, 88
    %v1761 = vpop.permute.xlu0 %1760
    %1762 = vrot.lane.b32.xlu0 %v1757, 88
    %v1763 = vpop.permute.xlu0 %1762
    %v1764 = vsel %vm633, %v1761, %v1763
    %v1767 = vadd.f32 %v1755, %v1764
    %v1768 = vadd.f32 %v1756, %v1763
    %v1769 = vmul.f32 %v1767, 0.5
    %v1770 = vmul.f32 %v1768, 0.5
    %1773 = vrot.lane.b32.xlu0 %v1769, 104
    %v1774 = vpop.permute.xlu0 %1773
    %1775 = vrot.lane.b32.xlu0 %v1770, 104
    %v1776 = vpop.permute.xlu0 %1775
    %v1777 = vsel %vm1656, %v1774, %v1776
    %vm1781 = vcmask 1048384
    %1782 = vst.msk [vmem:[#allocation2 + $0x58] sm:$0xff] %vm1781, %v1774
    %1783 = vst [vmem:[#allocation2 + $0x60] sm:$0xff] %v1777
    %vm1784 = vcmask 130048
    %1785 = vst.msk [vmem:[#allocation2 + $0x68] sm:$0xff] %vm1784, %v1776
    %v1786 = vld [vmem:[%s0 + $0x18] sm:$0xff]
    %v1787 = vld [vmem:[%s0 + $0x20] sm:$0xff]
    %v1788 = vld [vmem:[%s0 + $0x28] sm:$0xff]
    %v1789 = vpack.c.bf16 %v1786, %v1786
    %v1790 = vpack.c.bf16 %v1787, %v1787
    %v1791 = vpack.c.bf16 %v1788, %v1788
    %1795 = vrot.lane.b32.xlu0 %v1789, 8
    %v1796 = vpop.permute.xlu0 %1795
    %1797 = vrot.lane.b32.xlu0 %v1790, 8
    %v1798 = vpop.permute.xlu0 %1797
    %1799 = vrot.lane.b32.xlu0 %v1791, 8
    %v1800 = vpop.permute.xlu0 %1799
    %vm1801 = vcmask 64512
    %v1802 = vsel %vm1801, %v1796, %v1798
    %v1803 = vsel %vm1801, %v1798, %v1800
    %v1806 = vsel %vm530, %v1803, 0
    %1808 = vmatprep.subr.bf16.mxu0 %v489
    %1809 = vmatpush1.bf16.msra.mxu0 %v488
    %1810 = vmatprep.subr.bf16.mxu0 %v486
    %1811 = vmatpush1.bf16.msra.mxu0 %v485
    %1812 = vmatprep.subr.bf16.mxu0 %v483
    %1813 = vmatpush1.bf16.msra.mxu0 %v482
    %1814 = vmatprep.subr.bf16.mxu0 %v480
    %1815 = vmatpush1.bf16.msra.mxu0 %v479
    %1816 = vmatprep.subr.bf16.mxu0 %v477
    %1817 = vmatpush1.bf16.msra.mxu0 %v476
    %1818 = vmatprep.subr.bf16.mxu0 %v474
    %1819 = vmatpush1.bf16.msra.mxu0 %v473
    %1820 = vmatprep.subr.bf16.mxu0 %v471
    %1821 = vmatpush1.bf16.msra.mxu0 %v470
    %1822 = vmatprep.subr.bf16.mxu0 %v468
    %1823 = vmatpush1.bf16.msra.mxu0 %v467
    %1824 = vmatprep.subr.bf16.mxu0 0
    %1825 = vmatpush2.bf16.msra.mxu0 0
    %1826 = vmatprep.subr.bf16.mxu0 0
    %1827 = vmatpush2.bf16.msra.mxu0 0
    %1828 = vmatprep.subr.bf16.mxu0 0
    %1829 = vmatpush2.bf16.msra.mxu0 0
    %1830 = vmatprep.subr.bf16.mxu0 0
    %1831 = vmatpush2.bf16.msra.mxu0 0
    %1832 = vmatprep.subr.bf16.mxu0 0
    %1833 = vmatpush2.bf16.msra.mxu0 0
    %1834 = vmatprep.subr.bf16.mxu0 %v538
    %1835 = vmatpush2.bf16.msra.mxu0 %v535
    %1836 = vmatprep.subr.bf16.mxu0 %v495
    %1837 = vmatpush2.bf16.msra.mxu0 %v494
    %1838 = vmatprep.subr.bf16.mxu0 %v492
    %1839 = vmatpush2.bf16.msra.mxu0 %v491
    %1840 = vmatprep.mubr.bf16.mxu0 %v1806
    %1841 = vmatmul.mubr.bf16.gmra.mxu0 %v1802
    %v1842 = vpop.f32.mrf.mxu0
    %v1843 = vadd.f32 %v350, %v1842
    %v1844 = vpop.f32.mrf.mxu0
    %v1845 = vadd.f32 %v354, %v1844
    %v1846 = vpop.f32.mrf.mxu0
    %v1847 = vpop.f32.mrf.mxu0
    %1848 = vdwg.mxu0
    %1849 = vmatprep.subr.bf16.mxu0 0
    %1850 = vmatpush1.bf16.msra.mxu0 %v490
    %1851 = vmatprep.subr.bf16.mxu0 0
    %1852 = vmatpush1.bf16.msra.mxu0 %v487
    %1853 = vmatprep.subr.bf16.mxu0 0
    %1854 = vmatpush1.bf16.msra.mxu0 %v484
    %1855 = vmatprep.subr.bf16.mxu0 0
    %1856 = vmatpush1.bf16.msra.mxu0 %v481
    %1857 = vmatprep.subr.bf16.mxu0 0
    %1858 = vmatpush1.bf16.msra.mxu0 %v478
    %1859 = vmatprep.subr.bf16.mxu0 0
    %1860 = vmatpush1.bf16.msra.mxu0 %v475
    %1861 = vmatprep.subr.bf16.mxu0 0
    %1862 = vmatpush1.bf16.msra.mxu0 %v472
    %1863 = vmatprep.subr.bf16.mxu0 0
    %1864 = vmatpush1.bf16.msra.mxu0 %v469
    %1865 = vmatprep.subr.bf16.mxu0 0
    %1866 = vmatpush2.bf16.msra.mxu0 0
    %1867 = vmatprep.subr.bf16.mxu0 0
    %1868 = vmatpush2.bf16.msra.mxu0 0
    %1869 = vmatprep.subr.bf16.mxu0 0
    %1870 = vmatpush2.bf16.msra.mxu0 0
    %1871 = vmatprep.subr.bf16.mxu0 0
    %1872 = vmatpush2.bf16.msra.mxu0 0
    %1873 = vmatprep.subr.bf16.mxu0 0
    %1874 = vmatpush2.bf16.msra.mxu0 0
    %1875 = vmatprep.subr.bf16.mxu0 0
    %1876 = vmatpush2.bf16.msra.mxu0 %v541
    %1877 = vmatprep.subr.bf16.mxu0 0
    %1878 = vmatpush2.bf16.msra.mxu0 %v496
    %1879 = vmatprep.subr.bf16.mxu0 0
    %1880 = vmatpush2.bf16.msra.mxu0 %v493
    %1881 = vmatprep.mubr.bf16.mxu0 %v1806
    %1882 = vmatmul.mubr.bf16.gmra.mxu0 %v1802
    %v1883 = vpop.f32.mrf.mxu0
    %v1884 = vadd.f32 %v358, %v1883
    %v1885 = vpop.f32.mrf.mxu0
    %v1886 = vpop.f32.mrf.mxu0
    %v1887 = vpop.f32.mrf.mxu0
    %1888 = vdwg.mxu0
    %v1889 = vmax.f32 %v1843, 0.0
    %v1890 = vmax.f32 %v1845, 0.0
    %v1891 = vmax.f32 %v1884, 0.0
    %1894 = vrot.lane.b32.xlu0 %v1890, 88
    %v1895 = vpop.permute.xlu0 %1894
    %1896 = vrot.lane.b32.xlu0 %v1891, 88
    %v1897 = vpop.permute.xlu0 %1896
    %v1898 = vsel %vm633, %v1895, %v1897
    %v1901 = vadd.f32 %v1889, %v1898
    %v1902 = vadd.f32 %v1890, %v1897
    %v1903 = vmul.f32 %v1901, 0.5
    %v1904 = vmul.f32 %v1902, 0.5
    %1907 = vrot.lane.b32.xlu0 %v1903, 16
    %v1908 = vpop.permute.xlu0 %1907
    %1909 = vrot.lane.b32.xlu0 %v1904, 16
    %v1910 = vpop.permute.xlu0 %1909
    %v1911 = vsel %vm1784, %v1908, %v1910
    %vm1914 = vcmask 1047680
    %1915 = vst.msk [vmem:[#allocation2 + $0x68] sm:$0xff] %vm1914, %v1908
    %1916 = vst.msk [vmem:[#allocation2 + $0x70] sm:$0xff] %vm341, %v1911
    %v1917 = vld [vmem:[%s0 + $0x20] sm:$0xff]
    %v1918 = vld [vmem:[%s0 + $0x28] sm:$0xff]
    %v1919 = vpack.c.bf16 %v1917, %v1917
    %v1920 = vpack.c.bf16 %v1918, %v1918
    %1923 = vrot.lane.b32.xlu0 %v1919, 80
    %v1924 = vpop.permute.xlu0 %1923
    %1925 = vrot.lane.b32.xlu0 %v1920, 80
    %v1926 = vpop.permute.xlu0 %1925
    %vm1927 = vcmask 654336
    %v1928 = vsel %vm1927, %v1924, %v1926
    %v1931 = vsel %vm530, %v1926, 0
    %1933 = vmatprep.subr.bf16.mxu0 %v489
    %1934 = vmatpush1.bf16.msra.mxu0 %v488
    %1935 = vmatprep.subr.bf16.mxu0 %v486
    %1936 = vmatpush1.bf16.msra.mxu0 %v485
    %1937 = vmatprep.subr.bf16.mxu0 %v483
    %1938 = vmatpush1.bf16.msra.mxu0 %v482
    %1939 = vmatprep.subr.bf16.mxu0 %v480
    %1940 = vmatpush1.bf16.msra.mxu0 %v479
    %1941 = vmatprep.subr.bf16.mxu0 %v477
    %1942 = vmatpush1.bf16.msra.mxu0 %v476
    %1943 = vmatprep.subr.bf16.mxu0 %v474
    %1944 = vmatpush1.bf16.msra.mxu0 %v473
    %1945 = vmatprep.subr.bf16.mxu0 %v471
    %1946 = vmatpush1.bf16.msra.mxu0 %v470
    %1947 = vmatprep.subr.bf16.mxu0 %v468
    %1948 = vmatpush1.bf16.msra.mxu0 %v467
    %1949 = vmatprep.subr.bf16.mxu0 0
    %1950 = vmatpush2.bf16.msra.mxu0 0
    %1951 = vmatprep.subr.bf16.mxu0 0
    %1952 = vmatpush2.bf16.msra.mxu0 0
    %1953 = vmatprep.subr.bf16.mxu0 0
    %1954 = vmatpush2.bf16.msra.mxu0 0
    %1955 = vmatprep.subr.bf16.mxu0 0
    %1956 = vmatpush2.bf16.msra.mxu0 0
    %1957 = vmatprep.subr.bf16.mxu0 0
    %1958 = vmatpush2.bf16.msra.mxu0 0
    %1959 = vmatprep.subr.bf16.mxu0 %v538
    %1960 = vmatpush2.bf16.msra.mxu0 %v535
    %1961 = vmatprep.subr.bf16.mxu0 %v495
    %1962 = vmatpush2.bf16.msra.mxu0 %v494
    %1963 = vmatprep.subr.bf16.mxu0 %v492
    %1964 = vmatpush2.bf16.msra.mxu0 %v491
    %1965 = vmatprep.mubr.bf16.mxu0 %v1931
    %1966 = vmatmul.mubr.bf16.gmra.mxu0 %v1928
    %v1967 = vpop.f32.mrf.mxu0
    %v1968 = vadd.f32 %v350, %v1967
    %v1969 = vpop.f32.mrf.mxu0
    %v1970 = vadd.f32 %v354, %v1969
    %v1971 = vpop.f32.mrf.mxu0
    %v1972 = vpop.f32.mrf.mxu0
    %1973 = vdwg.mxu0
    %1974 = vmatprep.subr.bf16.mxu0 0
    %1975 = vmatpush1.bf16.msra.mxu0 %v490
    %1976 = vmatprep.subr.bf16.mxu0 0
    %1977 = vmatpush1.bf16.msra.mxu0 %v487
    %1978 = vmatprep.subr.bf16.mxu0 0
    %1979 = vmatpush1.bf16.msra.mxu0 %v484
    %1980 = vmatprep.subr.bf16.mxu0 0
    %1981 = vmatpush1.bf16.msra.mxu0 %v481
    %1982 = vmatprep.subr.bf16.mxu0 0
    %1983 = vmatpush1.bf16.msra.mxu0 %v478
    %1984 = vmatprep.subr.bf16.mxu0 0
    %1985 = vmatpush1.bf16.msra.mxu0 %v475
    %1986 = vmatprep.subr.bf16.mxu0 0
    %1987 = vmatpush1.bf16.msra.mxu0 %v472
    %1988 = vmatprep.subr.bf16.mxu0 0
    %1989 = vmatpush1.bf16.msra.mxu0 %v469
    %1990 = vmatprep.subr.bf16.mxu0 0
    %1991 = vmatpush2.bf16.msra.mxu0 0
    %1992 = vmatprep.subr.bf16.mxu0 0
    %1993 = vmatpush2.bf16.msra.mxu0 0
    %1994 = vmatprep.subr.bf16.mxu0 0
    %1995 = vmatpush2.bf16.msra.mxu0 0
    %1996 = vmatprep.subr.bf16.mxu0 0
    %1997 = vmatpush2.bf16.msra.mxu0 0
    %1998 = vmatprep.subr.bf16.mxu0 0
    %1999 = vmatpush2.bf16.msra.mxu0 0
    %2000 = vmatprep.subr.bf16.mxu0 0
    %2001 = vmatpush2.bf16.msra.mxu0 %v541
    %2002 = vmatprep.subr.bf16.mxu0 0
    %2003 = vmatpush2.bf16.msra.mxu0 %v496
    %2004 = vmatprep.subr.bf16.mxu0 0
    %2005 = vmatpush2.bf16.msra.mxu0 %v493
    %2006 = vmatprep.mubr.bf16.mxu0 %v1931
    %2007 = vmatmul.mubr.bf16.gmra.mxu0 %v1928
    %v2008 = vpop.f32.mrf.mxu0
    %v2009 = vadd.f32 %v358, %v2008
    %v2010 = vpop.f32.mrf.mxu0
    %v2011 = vpop.f32.mrf.mxu0
    %v2012 = vpop.f32.mrf.mxu0
    %2013 = vdwg.mxu0
    %v2014 = vmax.f32 %v1968, 0.0
    %v2015 = vmax.f32 %v1970, 0.0
    %v2016 = vmax.f32 %v2009, 0.0
    %2019 = vrot.lane.b32.xlu0 %v2015, 88
    %v2020 = vpop.permute.xlu0 %2019
    %2021 = vrot.lane.b32.xlu0 %v2016, 88
    %v2022 = vpop.permute.xlu0 %2021
    %v2023 = vsel %vm633, %v2020, %v2022
    %v2026 = vadd.f32 %v2014, %v2023
    %v2027 = vadd.f32 %v2015, %v2022
    %v2028 = vmul.f32 %v2026, 0.5
    %v2029 = vmul.f32 %v2027, 0.5
    %2032 = vrot.lane.b32.xlu0 %v2028, 56
    %v2033 = vpop.permute.xlu0 %2032
    %2034 = vrot.lane.b32.xlu0 %v2029, 56
    %v2035 = vpop.permute.xlu0 %2034
    %v2036 = vsel %vm341, %v2033, %v2035
    %vm2039 = vcmask 1048000
    %2040 = vst.msk [vmem:[#allocation2 + $0x70] sm:$0xff] %vm2039, %v2033
    %vm2041 = vcmask 785408
    %2042 = vst.msk [vmem:[#allocation2 + $0x78] sm:$0xff] %vm2041, %v2036
    %v2043 = vld [vmem:[%s0 + $0x20] sm:$0xff]
    %v2044 = vld [vmem:[%s0 + $0x28] sm:$0xff]
    %v2045 = vld [vmem:[%s0 + $0x30] sm:$0xff]
    %v2046 = vpack.c.bf16 %v2043, %v2043
    %v2047 = vpack.c.bf16 %v2044, %v2044
    %v2048 = vpack.c.bf16 %v2045, %v2045
    %2052 = vrot.lane.b32.xlu0 %v2046, 24
    %v2053 = vpop.permute.xlu0 %2052
    %2054 = vrot.lane.b32.xlu0 %v2047, 24
    %v2055 = vpop.permute.xlu0 %2054
    %2056 = vrot.lane.b32.xlu0 %v2048, 24
    %v2057 = vpop.permute.xlu0 %2056
    %vm2058 = vcmask 195584
    %v2059 = vsel %vm2058, %v2053, %v2055
    %v2060 = vsel %vm2058, %v2055, %v2057
    %v2063 = vsel %vm530, %v2060, 0
    %2065 = vmatprep.subr.bf16.mxu0 %v489
    %2066 = vmatpush1.bf16.msra.mxu0 %v488
    %2067 = vmatprep.subr.bf16.mxu0 %v486
    %2068 = vmatpush1.bf16.msra.mxu0 %v485
    %2069 = vmatprep.subr.bf16.mxu0 %v483
    %2070 = vmatpush1.bf16.msra.mxu0 %v482
    %2071 = vmatprep.subr.bf16.mxu0 %v480
    %2072 = vmatpush1.bf16.msra.mxu0 %v479
    %2073 = vmatprep.subr.bf16.mxu0 %v477
    %2074 = vmatpush1.bf16.msra.mxu0 %v476
    %2075 = vmatprep.subr.bf16.mxu0 %v474
    %2076 = vmatpush1.bf16.msra.mxu0 %v473
    %2077 = vmatprep.subr.bf16.mxu0 %v471
    %2078 = vmatpush1.bf16.msra.mxu0 %v470
    %2079 = vmatprep.subr.bf16.mxu0 %v468
    %2080 = vmatpush1.bf16.msra.mxu0 %v467
    %2081 = vmatprep.subr.bf16.mxu0 0
    %2082 = vmatpush2.bf16.msra.mxu0 0
    %2083 = vmatprep.subr.bf16.mxu0 0
    %2084 = vmatpush2.bf16.msra.mxu0 0
    %2085 = vmatprep.subr.bf16.mxu0 0
    %2086 = vmatpush2.bf16.msra.mxu0 0
    %2087 = vmatprep.subr.bf16.mxu0 0
    %2088 = vmatpush2.bf16.msra.mxu0 0
    %2089 = vmatprep.subr.bf16.mxu0 0
    %2090 = vmatpush2.bf16.msra.mxu0 0
    %2091 = vmatprep.subr.bf16.mxu0 %v538
    %2092 = vmatpush2.bf16.msra.mxu0 %v535
    %2093 = vmatprep.subr.bf16.mxu0 %v495
    %2094 = vmatpush2.bf16.msra.mxu0 %v494
    %2095 = vmatprep.subr.bf16.mxu0 %v492
    %2096 = vmatpush2.bf16.msra.mxu0 %v491
    %2097 = vmatprep.mubr.bf16.mxu0 %v2063
    %2098 = vmatmul.mubr.bf16.gmra.mxu0 %v2059
    %v2099 = vpop.f32.mrf.mxu0
    %v2100 = vadd.f32 %v350, %v2099
    %v2101 = vpop.f32.mrf.mxu0
    %v2102 = vadd.f32 %v354, %v2101
    %v2103 = vpop.f32.mrf.mxu0
    %v2104 = vpop.f32.mrf.mxu0
    %2105 = vdwg.mxu0
    %2106 = vmatprep.subr.bf16.mxu0 0
    %2107 = vmatpush1.bf16.msra.mxu0 %v490
    %2108 = vmatprep.subr.bf16.mxu0 0
    %2109 = vmatpush1.bf16.msra.mxu0 %v487
    %2110 = vmatprep.subr.bf16.mxu0 0
    %2111 = vmatpush1.bf16.msra.mxu0 %v484
    %2112 = vmatprep.subr.bf16.mxu0 0
    %2113 = vmatpush1.bf16.msra.mxu0 %v481
    %2114 = vmatprep.subr.bf16.mxu0 0
    %2115 = vmatpush1.bf16.msra.mxu0 %v478
    %2116 = vmatprep.subr.bf16.mxu0 0
    %2117 = vmatpush1.bf16.msra.mxu0 %v475
    %2118 = vmatprep.subr.bf16.mxu0 0
    %2119 = vmatpush1.bf16.msra.mxu0 %v472
    %2120 = vmatprep.subr.bf16.mxu0 0
    %2121 = vmatpush1.bf16.msra.mxu0 %v469
    %2122 = vmatprep.subr.bf16.mxu0 0
    %2123 = vmatpush2.bf16.msra.mxu0 0
    %2124 = vmatprep.subr.bf16.mxu0 0
    %2125 = vmatpush2.bf16.msra.mxu0 0
    %2126 = vmatprep.subr.bf16.mxu0 0
    %2127 = vmatpush2.bf16.msra.mxu0 0
    %2128 = vmatprep.subr.bf16.mxu0 0
    %2129 = vmatpush2.bf16.msra.mxu0 0
    %2130 = vmatprep.subr.bf16.mxu0 0
    %2131 = vmatpush2.bf16.msra.mxu0 0
    %2132 = vmatprep.subr.bf16.mxu0 0
    %2133 = vmatpush2.bf16.msra.mxu0 %v541
    %2134 = vmatprep.subr.bf16.mxu0 0
    %2135 = vmatpush2.bf16.msra.mxu0 %v496
    %2136 = vmatprep.subr.bf16.mxu0 0
    %2137 = vmatpush2.bf16.msra.mxu0 %v493
    %2138 = vmatprep.mubr.bf16.mxu0 %v2063
    %2139 = vmatmul.mubr.bf16.gmra.mxu0 %v2059
    %v2140 = vpop.f32.mrf.mxu0
    %v2141 = vadd.f32 %v358, %v2140
    %v2142 = vpop.f32.mrf.mxu0
    %v2143 = vpop.f32.mrf.mxu0
    %v2144 = vpop.f32.mrf.mxu0
    %2145 = vdwg.mxu0
    %v2146 = vmax.f32 %v2100, 0.0
    %v2147 = vmax.f32 %v2102, 0.0
    %v2148 = vmax.f32 %v2141, 0.0
    %2151 = vrot.lane.b32.xlu0 %v2147, 88
    %v2152 = vpop.permute.xlu0 %2151
    %2153 = vrot.lane.b32.xlu0 %v2148, 88
    %v2154 = vpop.permute.xlu0 %2153
    %v2155 = vsel %vm633, %v2152, %v2154
    %v2158 = vadd.f32 %v2146, %v2155
    %v2159 = vadd.f32 %v2147, %v2154
    %v2160 = vmul.f32 %v2158, 0.5
    %v2161 = vmul.f32 %v2159, 0.5
    %2164 = vrot.lane.b32.xlu0 %v2160, 96
    %v2165 = vpop.permute.xlu0 %2164
    %2166 = vrot.lane.b32.xlu0 %v2161, 96
    %v2167 = vpop.permute.xlu0 %2166
    %v2168 = vsel %vm2041, %v2165, %v2167
    %vm2172 = vcmask 1048320
    %2173 = vst.msk [vmem:[#allocation2 + $0x78] sm:$0xff] %vm2172, %v2165
    %2174 = vst [vmem:[#allocation2 + $0x80] sm:$0xff] %v2168
    %vm2175 = vcmask 64512
    %2176 = vst.msk [vmem:[#allocation2 + $0x88] sm:$0xff] %vm2175, %v2167
    %v2177 = vld [vmem:[%s0 + $0x28] sm:$0xff]
    %v2178 = vld [vmem:[%s0 + $0x30] sm:$0xff]
    %v2179 = vpack.c.bf16 %v2177, %v2177
    %v2180 = vpack.c.bf16 %v2178, %v2178
    %2183 = vrot.lane.b32.xlu0 %v2179, 96
    %v2184 = vpop.permute.xlu0 %2183
    %2185 = vrot.lane.b32.xlu0 %v2180, 96
    %v2186 = vpop.permute.xlu0 %2185
    %vm2187 = vcmask 785408
    %v2188 = vsel %vm2187, %v2184, %v2186
    %v2190 = vsel %vm1276, %v2188, 0
    %v2192 = vsel %vm530, 0, 0
    %2194 = vmatprep.subr.bf16.mxu0 %v489
    %2195 = vmatpush1.bf16.msra.mxu0 %v488
    %2196 = vmatprep.subr.bf16.mxu0 %v486
    %2197 = vmatpush1.bf16.msra.mxu0 %v485
    %2198 = vmatprep.subr.bf16.mxu0 %v483
    %2199 = vmatpush1.bf16.msra.mxu0 %v482
    %2200 = vmatprep.subr.bf16.mxu0 %v480
    %2201 = vmatpush1.bf16.msra.mxu0 %v479
    %2202 = vmatprep.subr.bf16.mxu0 %v477
    %2203 = vmatpush1.bf16.msra.mxu0 %v476
    %2204 = vmatprep.subr.bf16.mxu0 %v474
    %2205 = vmatpush1.bf16.msra.mxu0 %v473
    %2206 = vmatprep.subr.bf16.mxu0 %v471
    %2207 = vmatpush1.bf16.msra.mxu0 %v470
    %2208 = vmatprep.subr.bf16.mxu0 %v468
    %2209 = vmatpush1.bf16.msra.mxu0 %v467
    %2210 = vmatprep.subr.bf16.mxu0 0
    %2211 = vmatpush2.bf16.msra.mxu0 0
    %2212 = vmatprep.subr.bf16.mxu0 0
    %2213 = vmatpush2.bf16.msra.mxu0 0
    %2214 = vmatprep.subr.bf16.mxu0 0
    %2215 = vmatpush2.bf16.msra.mxu0 0
    %2216 = vmatprep.subr.bf16.mxu0 0
    %2217 = vmatpush2.bf16.msra.mxu0 0
    %2218 = vmatprep.subr.bf16.mxu0 0
    %2219 = vmatpush2.bf16.msra.mxu0 0
    %2220 = vmatprep.subr.bf16.mxu0 %v538
    %2221 = vmatpush2.bf16.msra.mxu0 %v535
    %2222 = vmatprep.subr.bf16.mxu0 %v495
    %2223 = vmatpush2.bf16.msra.mxu0 %v494
    %2224 = vmatprep.subr.bf16.mxu0 %v492
    %2225 = vmatpush2.bf16.msra.mxu0 %v491
    %2226 = vmatprep.mubr.bf16.mxu0 %v2192
    %2227 = vmatmul.mubr.bf16.gmra.mxu0 %v2190
    %v2228 = vpop.f32.mrf.mxu0
    %v2229 = vadd.f32 %v350, %v2228
    %v2230 = vpop.f32.mrf.mxu0
    %v2231 = vadd.f32 %v354, %v2230
    %v2232 = vpop.f32.mrf.mxu0
    %v2233 = vpop.f32.mrf.mxu0
    %2234 = vdwg.mxu0
    %2235 = vmatprep.subr.bf16.mxu0 0
    %2236 = vmatpush1.bf16.msra.mxu0 %v490
    %2237 = vmatprep.subr.bf16.mxu0 0
    %2238 = vmatpush1.bf16.msra.mxu0 %v487
    %2239 = vmatprep.subr.bf16.mxu0 0
    %2240 = vmatpush1.bf16.msra.mxu0 %v484
    %2241 = vmatprep.subr.bf16.mxu0 0
    %2242 = vmatpush1.bf16.msra.mxu0 %v481
    %2243 = vmatprep.subr.bf16.mxu0 0
    %2244 = vmatpush1.bf16.msra.mxu0 %v478
    %2245 = vmatprep.subr.bf16.mxu0 0
    %2246 = vmatpush1.bf16.msra.mxu0 %v475
    %2247 = vmatprep.subr.bf16.mxu0 0
    %2248 = vmatpush1.bf16.msra.mxu0 %v472
    %2249 = vmatprep.subr.bf16.mxu0 0
    %2250 = vmatpush1.bf16.msra.mxu0 %v469
    %2251 = vmatprep.subr.bf16.mxu0 0
    %2252 = vmatpush2.bf16.msra.mxu0 0
    %2253 = vmatprep.subr.bf16.mxu0 0
    %2254 = vmatpush2.bf16.msra.mxu0 0
    %2255 = vmatprep.subr.bf16.mxu0 0
    %2256 = vmatpush2.bf16.msra.mxu0 0
    %2257 = vmatprep.subr.bf16.mxu0 0
    %2258 = vmatpush2.bf16.msra.mxu0 0
    %2259 = vmatprep.subr.bf16.mxu0 0
    %2260 = vmatpush2.bf16.msra.mxu0 0
    %2261 = vmatprep.subr.bf16.mxu0 0
    %2262 = vmatpush2.bf16.msra.mxu0 %v541
    %2263 = vmatprep.subr.bf16.mxu0 0
    %2264 = vmatpush2.bf16.msra.mxu0 %v496
    %2265 = vmatprep.subr.bf16.mxu0 0
    %2266 = vmatpush2.bf16.msra.mxu0 %v493
    %2267 = vmatprep.mubr.bf16.mxu0 %v2192
    %2268 = vmatmul.mubr.bf16.gmra.mxu0 %v2190
    %v2269 = vpop.f32.mrf.mxu0
    %v2270 = vadd.f32 %v358, %v2269
    %v2271 = vpop.f32.mrf.mxu0
    %v2272 = vpop.f32.mrf.mxu0
    %v2273 = vpop.f32.mrf.mxu0
    %2274 = vdwg.mxu0
    %v2275 = vmax.f32 %v2229, 0.0
    %v2276 = vmax.f32 %v2231, 0.0
    %v2277 = vmax.f32 %v2270, 0.0
    %2280 = vrot.lane.b32.xlu0 %v2276, 88
    %v2281 = vpop.permute.xlu0 %2280
    %2282 = vrot.lane.b32.xlu0 %v2277, 88
    %v2283 = vpop.permute.xlu0 %2282
    %v2284 = vsel %vm633, %v2281, %v2283
    %v2287 = vadd.f32 %v2275, %v2284
    %v2288 = vadd.f32 %v2276, %v2283
    %v2289 = vmul.f32 %v2287, 0.5
    %v2290 = vmul.f32 %v2288, 0.5
    %2293 = vrot.lane.b32.xlu0 %v2289, 8
    %v2294 = vpop.permute.xlu0 %2293
    %2295 = vrot.lane.b32.xlu0 %v2290, 8
    %v2296 = vpop.permute.xlu0 %2295
    %v2297 = vsel %vm2175, %v2294, %v2296
    %vm2300 = vcmask 1047616
    %2301 = vst.msk [vmem:[#allocation2 + $0x88] sm:$0xff] %vm2300, %v2294
    %vm2302 = vcmask 392192
    %2303 = vst.msk [vmem:[#allocation2 + $0x90] sm:$0xff] %vm2302, %v2297
    %v2304 = vld [vmem:[#allocation2] sm:$0xff]
    %v2305 = vld [vmem:[#allocation2 + $0x8] sm:$0xff]
    %v2306 = vld [vmem:[#allocation2 + $0x10] sm:$0xff]
    %v2307 = vld [vmem:[#allocation2 + $0x18] sm:$0xff]
    %v2308 = vld [vmem:[#allocation2 + $0x20] sm:$0xff]
    %v2309 = vld [vmem:[#allocation2 + $0x28] sm:$0xff]
    %v2310 = vld [vmem:[#allocation2 + $0x30] sm:$0xff]
    %v2311 = vld [vmem:[#allocation2 + $0x38] sm:$0xff]
    %v2312 = vpack.c.bf16 %v2304, %v2304
    %v2313 = vpack.c.bf16 %v2305, %v2305
    %v2314 = vpack.c.bf16 %v2306, %v2306
    %v2315 = vpack.c.bf16 %v2307, %v2307
    %v2316 = vpack.c.bf16 %v2308, %v2308
    %v2317 = vpack.c.bf16 %v2309, %v2309
    %v2318 = vpack.c.bf16 %v2310, %v2310
    %v2319 = vpack.c.bf16 %v2311, %v2311
    %v2321 = vlaneseq
    %v2322 = vshrl.u32 %v2321, 7
    %v2323 = vsub.s32 0, %v2322
    %v2324 = vrot.slane %v335, %v2323
    %v2325 = vlaneseq
    %v2326 = vshrl.u32 %v2325, 7
    %v2327 = vsub.s32 1, %v2326
    %v2328 = vrot.slane %v335, %v2327
    %v2329 = vlaneseq
    %v2330 = vshrl.u32 %v2329, 7
    %v2331 = vsub.s32 2, %v2330
    %v2332 = vrot.slane %v335, %v2331
    %v2588 = vunpack.c.l.b16 %v83
    %v2589 = vunpack.c.h.b16 %v83
    %v2590 = vunpack.c.l.b16 %v84
    %v2591 = vunpack.c.l.b16 %v85
    %v2592 = vunpack.c.h.b16 %v85
    %v2593 = vunpack.c.l.b16 %v86
    %v2594 = vunpack.c.l.b16 %v87
    %v2595 = vunpack.c.h.b16 %v87
    %v2596 = vunpack.c.l.b16 %v88
    %v2597 = vunpack.c.l.b16 %v89
    %v2598 = vunpack.c.h.b16 %v89
    %v2599 = vunpack.c.l.b16 %v90
    %v2600 = vunpack.c.l.b16 %v91
    %v2601 = vunpack.c.h.b16 %v91
    %v2602 = vunpack.c.l.b16 %v92
    %v2603 = vunpack.c.l.b16 %v93
    %v2604 = vunpack.c.h.b16 %v93
    %v2605 = vunpack.c.l.b16 %v94
    %v2606 = vunpack.c.l.b16 %v95
    %v2607 = vunpack.c.h.b16 %v95
    %v2608 = vunpack.c.l.b16 %v96
    %v2609 = vunpack.c.l.b16 %v97
    %v2610 = vunpack.c.h.b16 %v97
    %v2611 = vunpack.c.l.b16 %v98
    %v2612 = vunpack.c.l.b16 %v99
    %v2613 = vunpack.c.h.b16 %v99
    %v2614 = vunpack.c.l.b16 %v100
    %v2615 = vunpack.c.l.b16 %v101
    %v2616 = vunpack.c.h.b16 %v101
    %v2617 = vunpack.c.l.b16 %v102
    %v2618 = vunpack.c.l.b16 %v103
    %v2619 = vunpack.c.h.b16 %v103
    %v2620 = vunpack.c.l.b16 %v104
    %v2621 = vunpack.c.l.b16 %v105
    %v2622 = vunpack.c.h.b16 %v105
    %v2623 = vunpack.c.l.b16 %v106
    %v2624 = vunpack.c.l.b16 %v107
    %v2625 = vunpack.c.h.b16 %v107
    %v2626 = vunpack.c.l.b16 %v108
    %v2627 = vunpack.c.l.b16 %v109
    %v2628 = vunpack.c.h.b16 %v109
    %v2629 = vunpack.c.l.b16 %v110
    %v2630 = vunpack.c.l.b16 %v111
    %v2631 = vunpack.c.h.b16 %v111
    %v2632 = vunpack.c.l.b16 %v112
    %v2633 = vunpack.c.l.b16 %v113
    %v2634 = vunpack.c.h.b16 %v113
    %v2635 = vunpack.c.l.b16 %v114
    %v2636 = vunpack.c.l.b16 %v115
    %v2637 = vunpack.c.h.b16 %v115
    %v2638 = vunpack.c.l.b16 %v116
    %v2639 = vunpack.c.l.b16 %v117
    %v2640 = vunpack.c.h.b16 %v117
    %v2641 = vunpack.c.l.b16 %v118
    %v2642 = vunpack.c.l.b16 %v119
    %v2643 = vunpack.c.h.b16 %v119
    %v2644 = vunpack.c.l.b16 %v120
    %v2645 = vunpack.c.l.b16 %v121
    %v2646 = vunpack.c.h.b16 %v121
    %v2647 = vunpack.c.l.b16 %v122
    %v2648 = vunpack.c.l.b16 %v123
    %v2649 = vunpack.c.h.b16 %v123
    %v2650 = vunpack.c.l.b16 %v124
    %v2651 = vunpack.c.l.b16 %v125
    %v2652 = vunpack.c.h.b16 %v125
    %v2653 = vunpack.c.l.b16 %v126
    %v2654 = vunpack.c.l.b16 %v127
    %v2655 = vunpack.c.h.b16 %v127
    %v2656 = vunpack.c.l.b16 %v128
    %v2657 = vunpack.c.l.b16 %v129
    %v2658 = vunpack.c.h.b16 %v129
    %v2659 = vunpack.c.l.b16 %v130
    %v2660 = vunpack.c.l.b16 %v131
    %v2661 = vunpack.c.h.b16 %v131
    %v2662 = vunpack.c.l.b16 %v132
    %v2663 = vunpack.c.l.b16 %v133
    %v2664 = vunpack.c.h.b16 %v133
    %v2665 = vunpack.c.l.b16 %v134
    %v2666 = vunpack.c.l.b16 %v135
    %v2667 = vunpack.c.h.b16 %v135
    %v2668 = vunpack.c.l.b16 %v136
    %v2669 = vunpack.c.l.b16 %v137
    %v2670 = vunpack.c.h.b16 %v137
    %v2671 = vunpack.c.l.b16 %v138
    %v2672 = vunpack.c.l.b16 %v139
    %v2673 = vunpack.c.h.b16 %v139
    %v2674 = vunpack.c.l.b16 %v140
    %v2675 = vunpack.c.l.b16 %v141
    %v2676 = vunpack.c.h.b16 %v141
    %v2677 = vunpack.c.l.b16 %v142
    %v2678 = vunpack.c.l.b16 %v143
    %v2679 = vunpack.c.h.b16 %v143
    %v2680 = vunpack.c.l.b16 %v144
    %v2681 = vunpack.c.l.b16 %v145
    %v2682 = vunpack.c.h.b16 %v145
    %v2683 = vunpack.c.l.b16 %v146
    %v2684 = vunpack.c.l.b16 %v147
    %v2685 = vunpack.c.h.b16 %v147
    %v2686 = vunpack.c.l.b16 %v148
    %v2687 = vunpack.c.l.b16 %v149
    %v2688 = vunpack.c.h.b16 %v149
    %v2689 = vunpack.c.l.b16 %v150
    %v2690 = vunpack.c.l.b16 %v151
    %v2691 = vunpack.c.h.b16 %v151
    %v2692 = vunpack.c.l.b16 %v152
    %v2693 = vunpack.c.l.b16 %v153
    %v2694 = vunpack.c.h.b16 %v153
    %v2695 = vunpack.c.l.b16 %v154
    %v2696 = vunpack.c.l.b16 %v155
    %v2697 = vunpack.c.h.b16 %v155
    %v2698 = vunpack.c.l.b16 %v156
    %v2699 = vunpack.c.l.b16 %v157
    %v2700 = vunpack.c.h.b16 %v157
    %v2701 = vunpack.c.l.b16 %v158
    %v2702 = vunpack.c.l.b16 %v159
    %v2703 = vunpack.c.h.b16 %v159
    %v2704 = vunpack.c.l.b16 %v160
    %v2705 = vunpack.c.l.b16 %v161
    %v2706 = vunpack.c.h.b16 %v161
    %v2707 = vunpack.c.l.b16 %v162
    %v2708 = vunpack.c.l.b16 %v163
    %v2709 = vunpack.c.h.b16 %v163
    %v2710 = vunpack.c.l.b16 %v164
    %v2711 = vunpack.c.l.b16 %v165
    %v2712 = vunpack.c.h.b16 %v165
    %v2713 = vunpack.c.l.b16 %v166
    %v2714 = vunpack.c.l.b16 %v167
    %v2715 = vunpack.c.h.b16 %v167
    %v2716 = vunpack.c.l.b16 %v168
    %v2717 = vunpack.c.l.b16 %v169
    %v2718 = vunpack.c.h.b16 %v169
    %v2719 = vunpack.c.l.b16 %v170
    %v2720 = vunpack.c.l.b16 %v171
    %v2721 = vunpack.c.h.b16 %v171
    %v2722 = vunpack.c.l.b16 %v172
    %v2723 = vunpack.c.l.b16 %v173
    %v2724 = vunpack.c.h.b16 %v173
    %v2725 = vunpack.c.l.b16 %v174
    %v2726 = vunpack.c.l.b16 %v175
    %v2727 = vunpack.c.h.b16 %v175
    %v2728 = vunpack.c.l.b16 %v176
    %v2729 = vunpack.c.l.b16 %v177
    %v2730 = vunpack.c.h.b16 %v177
    %v2731 = vunpack.c.l.b16 %v178
    %v2732 = vunpack.c.l.b16 %v179
    %v2733 = vunpack.c.h.b16 %v179
    %v2734 = vunpack.c.l.b16 %v180
    %v2735 = vunpack.c.l.b16 %v181
    %v2736 = vunpack.c.h.b16 %v181
    %v2737 = vunpack.c.l.b16 %v182
    %v2738 = vunpack.c.l.b16 %v183
    %v2739 = vunpack.c.h.b16 %v183
    %v2740 = vunpack.c.l.b16 %v184
    %v2741 = vunpack.c.l.b16 %v185
    %v2742 = vunpack.c.h.b16 %v185
    %v2743 = vunpack.c.l.b16 %v186
    %v2744 = vunpack.c.l.b16 %v187
    %v2745 = vunpack.c.h.b16 %v187
    %v2746 = vunpack.c.l.b16 %v188
    %v2747 = vunpack.c.l.b16 %v189
    %v2748 = vunpack.c.h.b16 %v189
    %v2749 = vunpack.c.l.b16 %v190
    %v2750 = vunpack.c.l.b16 %v191
    %v2751 = vunpack.c.h.b16 %v191
    %v2752 = vunpack.c.l.b16 %v192
    %v2753 = vunpack.c.l.b16 %v193
    %v2754 = vunpack.c.h.b16 %v193
    %v2755 = vunpack.c.l.b16 %v194
    %v2756 = vunpack.c.l.b16 %v195
    %v2757 = vunpack.c.h.b16 %v195
    %v2758 = vunpack.c.l.b16 %v196
    %v2759 = vunpack.c.l.b16 %v197
    %v2760 = vunpack.c.h.b16 %v197
    %v2761 = vunpack.c.l.b16 %v198
    %v2762 = vunpack.c.l.b16 %v199
    %v2763 = vunpack.c.h.b16 %v199
    %v2764 = vunpack.c.l.b16 %v200
    %v2765 = vunpack.c.l.b16 %v201
    %v2766 = vunpack.c.h.b16 %v201
    %v2767 = vunpack.c.l.b16 %v202
    %v2768 = vunpack.c.l.b16 %v203
    %v2769 = vunpack.c.h.b16 %v203
    %v2770 = vunpack.c.l.b16 %v204
    %v2771 = vunpack.c.l.b16 %v205
    %v2772 = vunpack.c.h.b16 %v205
    %v2773 = vunpack.c.l.b16 %v206
    %v2774 = vunpack.c.l.b16 %v207
    %v2775 = vunpack.c.h.b16 %v207
    %v2776 = vunpack.c.l.b16 %v208
    %v2777 = vunpack.c.l.b16 %v209
    %v2778 = vunpack.c.h.b16 %v209
    %v2779 = vunpack.c.l.b16 %v210
    %v2780 = vunpack.c.l.b16 %v211
    %v2781 = vunpack.c.h.b16 %v211
    %v2782 = vunpack.c.l.b16 %v212
    %v2783 = vunpack.c.l.b16 %v213
    %v2784 = vunpack.c.h.b16 %v213
    %v2785 = vunpack.c.l.b16 %v214
    %v2786 = vunpack.c.l.b16 %v215
    %v2787 = vunpack.c.h.b16 %v215
    %v2788 = vunpack.c.l.b16 %v216
    %v2789 = vunpack.c.l.b16 %v217
    %v2790 = vunpack.c.h.b16 %v217
    %v2791 = vunpack.c.l.b16 %v218
    %v2792 = vunpack.c.l.b16 %v219
    %v2793 = vunpack.c.h.b16 %v219
    %v2794 = vunpack.c.l.b16 %v220
    %v2795 = vunpack.c.l.b16 %v221
    %v2796 = vunpack.c.h.b16 %v221
    %v2797 = vunpack.c.l.b16 %v222
    %v2798 = vunpack.c.l.b16 %v223
    %v2799 = vunpack.c.h.b16 %v223
    %v2800 = vunpack.c.l.b16 %v224
    %v2801 = vunpack.c.l.b16 %v225
    %v2802 = vunpack.c.h.b16 %v225
    %v2803 = vunpack.c.l.b16 %v226
    %v2804 = vunpack.c.l.b16 %v227
    %v2805 = vunpack.c.h.b16 %v227
    %v2806 = vunpack.c.l.b16 %v228
    %v2807 = vunpack.c.l.b16 %v229
    %v2808 = vunpack.c.h.b16 %v229
    %v2809 = vunpack.c.l.b16 %v230
    %v2810 = vunpack.c.l.b16 %v231
    %v2811 = vunpack.c.h.b16 %v231
    %v2812 = vunpack.c.l.b16 %v232
    %v2813 = vunpack.c.l.b16 %v233
    %v2814 = vunpack.c.h.b16 %v233
    %v2815 = vunpack.c.l.b16 %v234
    %v2816 = vunpack.c.l.b16 %v235
    %v2817 = vunpack.c.h.b16 %v235
    %v2818 = vunpack.c.l.b16 %v236
    %v2819 = vunpack.c.l.b16 %v237
    %v2820 = vunpack.c.h.b16 %v237
    %v2821 = vunpack.c.l.b16 %v238
    %v2822 = vunpack.c.l.b16 %v239
    %v2823 = vunpack.c.h.b16 %v239
    %v2824 = vunpack.c.l.b16 %v240
    %v2825 = vunpack.c.l.b16 %v241
    %v2826 = vunpack.c.h.b16 %v241
    %v2827 = vunpack.c.l.b16 %v242
    %v2828 = vunpack.c.l.b16 %v243
    %v2829 = vunpack.c.h.b16 %v243
    %v2830 = vunpack.c.l.b16 %v244
    %v2831 = vunpack.c.l.b16 %v245
    %v2832 = vunpack.c.h.b16 %v245
    %v2833 = vunpack.c.l.b16 %v246
    %v2834 = vunpack.c.l.b16 %v247
    %v2835 = vunpack.c.h.b16 %v247
    %v2836 = vunpack.c.l.b16 %v248
    %v2837 = vunpack.c.l.b16 %v249
    %v2838 = vunpack.c.h.b16 %v249
    %v2839 = vunpack.c.l.b16 %v250
    %v2840 = vunpack.c.l.b16 %v251
    %v2841 = vunpack.c.h.b16 %v251
    %v2842 = vunpack.c.l.b16 %v252
    %v2843 = vunpack.c.l.b16 %v253
    %v2844 = vunpack.c.h.b16 %v253
    %v2845 = vunpack.c.l.b16 %v254
    %v2846 = vunpack.c.l.b16 %v255
    %v2847 = vunpack.c.h.b16 %v255
    %v2848 = vunpack.c.l.b16 %v256
    %v2849 = vunpack.c.l.b16 %v257
    %v2850 = vunpack.c.h.b16 %v257
    %v2851 = vunpack.c.l.b16 %v258
    %v2852 = vunpack.c.l.b16 %v259
    %v2853 = vunpack.c.h.b16 %v259
    %v2854 = vunpack.c.l.b16 %v260
    %v2855 = vunpack.c.l.b16 %v261
    %v2856 = vunpack.c.h.b16 %v261
    %v2857 = vunpack.c.l.b16 %v262
    %v2858 = vunpack.c.l.b16 %v263
    %v2859 = vunpack.c.h.b16 %v263
    %v2860 = vunpack.c.l.b16 %v264
    %v2861 = vunpack.c.l.b16 %v265
    %v2862 = vunpack.c.h.b16 %v265
    %v2863 = vunpack.c.l.b16 %v266
    %v2864 = vunpack.c.l.b16 %v267
    %v2865 = vunpack.c.h.b16 %v267
    %v2866 = vunpack.c.l.b16 %v268
    %v2867 = vunpack.c.l.b16 %v269
    %v2868 = vunpack.c.h.b16 %v269
    %v2869 = vunpack.c.l.b16 %v270
    %v2870 = vunpack.c.l.b16 %v271
    %v2871 = vunpack.c.h.b16 %v271
    %v2872 = vunpack.c.l.b16 %v272
    %v2873 = vunpack.c.l.b16 %v273
    %v2874 = vunpack.c.h.b16 %v273
    %v2875 = vunpack.c.l.b16 %v274
    %v2876 = vunpack.c.l.b16 %v275
    %v2877 = vunpack.c.h.b16 %v275
    %v2878 = vunpack.c.l.b16 %v276
    %v2879 = vunpack.c.l.b16 %v277
    %v2880 = vunpack.c.h.b16 %v277
    %v2881 = vunpack.c.l.b16 %v278
    %v2882 = vunpack.c.l.b16 %v279
    %v2883 = vunpack.c.h.b16 %v279
    %v2884 = vunpack.c.l.b16 %v280
    %v2885 = vunpack.c.l.b16 %v281
    %v2886 = vunpack.c.h.b16 %v281
    %v2887 = vunpack.c.l.b16 %v282
    %v2888 = vunpack.c.l.b16 %v283
    %v2889 = vunpack.c.h.b16 %v283
    %v2890 = vunpack.c.l.b16 %v284
    %v2891 = vunpack.c.l.b16 %v285
    %v2892 = vunpack.c.h.b16 %v285
    %v2893 = vunpack.c.l.b16 %v286
    %v2894 = vunpack.c.l.b16 %v287
    %v2895 = vunpack.c.h.b16 %v287
    %v2896 = vunpack.c.l.b16 %v288
    %v2897 = vunpack.c.l.b16 %v289
    %v2898 = vunpack.c.h.b16 %v289
    %v2899 = vunpack.c.l.b16 %v290
    %v2900 = vunpack.c.l.b16 %v291
    %v2901 = vunpack.c.h.b16 %v291
    %v2902 = vunpack.c.l.b16 %v292
    %v2903 = vunpack.c.l.b16 %v293
    %v2904 = vunpack.c.h.b16 %v293
    %v2905 = vunpack.c.l.b16 %v294
    %v2906 = vunpack.c.l.b16 %v295
    %v2907 = vunpack.c.h.b16 %v295
    %v2908 = vunpack.c.l.b16 %v296
    %v2909 = vunpack.c.l.b16 %v297
    %v2910 = vunpack.c.h.b16 %v297
    %v2911 = vunpack.c.l.b16 %v298
    %v2912 = vunpack.c.l.b16 %v299
    %v2913 = vunpack.c.h.b16 %v299
    %v2914 = vunpack.c.l.b16 %v300
    %v2915 = vunpack.c.l.b16 %v301
    %v2916 = vunpack.c.h.b16 %v301
    %v2917 = vunpack.c.l.b16 %v302
    %v2918 = vunpack.c.l.b16 %v303
    %v2919 = vunpack.c.h.b16 %v303
    %v2920 = vunpack.c.l.b16 %v304
    %v2921 = vunpack.c.l.b16 %v305
    %v2922 = vunpack.c.h.b16 %v305
    %v2923 = vunpack.c.l.b16 %v306
    %v2924 = vunpack.c.l.b16 %v307
    %v2925 = vunpack.c.h.b16 %v307
    %v2926 = vunpack.c.l.b16 %v308
    %v2927 = vunpack.c.l.b16 %v309
    %v2928 = vunpack.c.h.b16 %v309
    %v2929 = vunpack.c.l.b16 %v310
    %v2930 = vunpack.c.l.b16 %v311
    %v2931 = vunpack.c.h.b16 %v311
    %v2932 = vunpack.c.l.b16 %v312
    %v2933 = vunpack.c.l.b16 %v313
    %v2934 = vunpack.c.h.b16 %v313
    %v2935 = vunpack.c.l.b16 %v314
    %v2936 = vunpack.c.l.b16 %v315
    %v2937 = vunpack.c.h.b16 %v315
    %v2938 = vunpack.c.l.b16 %v316
    %v2939 = vunpack.c.l.b16 %v317
    %v2940 = vunpack.c.h.b16 %v317
    %v2941 = vunpack.c.l.b16 %v318
    %v2942 = vunpack.c.l.b16 %v319
    %v2943 = vunpack.c.h.b16 %v319
    %v2944 = vunpack.c.l.b16 %v320
    %v2945 = vunpack.c.l.b16 %v321
    %v2946 = vunpack.c.h.b16 %v321
    %v2947 = vunpack.c.l.b16 %v322
    %v2948 = vunpack.c.l.b16 %v323
    %v2949 = vunpack.c.h.b16 %v323
    %v2950 = vunpack.c.l.b16 %v324
    %v2951 = vunpack.c.l.b16 %v325
    %v2952 = vunpack.c.h.b16 %v325
    %v2953 = vunpack.c.l.b16 %v326
    %v2954 = vunpack.c.l.b16 %v327
    %v2955 = vunpack.c.h.b16 %v327
    %v2956 = vunpack.c.l.b16 %v328
    %v2957 = vunpack.c.l.b16 %v329
    %v2958 = vunpack.c.h.b16 %v329
    %v2959 = vunpack.c.l.b16 %v330
    %v2960 = vunpack.c.l.b16 %v331
    %v2961 = vunpack.c.h.b16 %v331
    %v2962 = vunpack.c.l.b16 %v332
    %v2963 = vunpack.c.l.b16 %v333
    %v2964 = vunpack.c.h.b16 %v333
    %v2965 = vunpack.c.l.b16 %v334
    %v2966 = vpack.c.b16 %v2591, %v2588
    %v2967 = vpack.c.b16 %v2592, %v2589
    %v2968 = vpack.c.b16 %v2593, %v2590
    %v2969 = vpack.c.b16 %v2597, %v2594
    %v2970 = vpack.c.b16 %v2598, %v2595
    %v2971 = vpack.c.b16 %v2599, %v2596
    %v2972 = vpack.c.b16 %v2603, %v2600
    %v2973 = vpack.c.b16 %v2604, %v2601
    %v2974 = vpack.c.b16 %v2605, %v2602
    %v2975 = vpack.c.b16 %v2609, %v2606
    %v2976 = vpack.c.b16 %v2610, %v2607
    %v2977 = vpack.c.b16 %v2611, %v2608
    %v2978 = vpack.c.b16 %v2615, %v2612
    %v2979 = vpack.c.b16 %v2616, %v2613
    %v2980 = vpack.c.b16 %v2617, %v2614
    %v2981 = vpack.c.b16 %v2621, %v2618
    %v2982 = vpack.c.b16 %v2622, %v2619
    %v2983 = vpack.c.b16 %v2623, %v2620
    %v2984 = vpack.c.b16 %v2627, %v2624
    %v2985 = vpack.c.b16 %v2628, %v2625
    %v2986 = vpack.c.b16 %v2629, %v2626
    %v2987 = vpack.c.b16 %v2633, %v2630
    %v2988 = vpack.c.b16 %v2634, %v2631
    %v2989 = vpack.c.b16 %v2635, %v2632
    %v2990 = vpack.c.b16 %v2639, %v2636
    %v2991 = vpack.c.b16 %v2640, %v2637
    %v2992 = vpack.c.b16 %v2641, %v2638
    %v2993 = vpack.c.b16 %v2645, %v2642
    %v2994 = vpack.c.b16 %v2646, %v2643
    %v2995 = vpack.c.b16 %v2647, %v2644
    %v2996 = vpack.c.b16 %v2651, %v2648
    %v2997 = vpack.c.b16 %v2652, %v2649
    %v2998 = vpack.c.b16 %v2653, %v2650
    %v2999 = vpack.c.b16 %v2657, %v2654
    %v3000 = vpack.c.b16 %v2658, %v2655
    %v3001 = vpack.c.b16 %v2659, %v2656
    %v3002 = vpack.c.b16 %v2663, %v2660
    %v3003 = vpack.c.b16 %v2664, %v2661
    %v3004 = vpack.c.b16 %v2665, %v2662
    %v3005 = vpack.c.b16 %v2669, %v2666
    %v3006 = vpack.c.b16 %v2670, %v2667
    %v3007 = vpack.c.b16 %v2671, %v2668
    %v3008 = vpack.c.b16 %v2675, %v2672
    %v3009 = vpack.c.b16 %v2676, %v2673
    %v3010 = vpack.c.b16 %v2677, %v2674
    %v3011 = vpack.c.b16 %v2681, %v2678
    %v3012 = vpack.c.b16 %v2682, %v2679
    %v3013 = vpack.c.b16 %v2683, %v2680
    %v3014 = vpack.c.b16 %v2687, %v2684
    %v3015 = vpack.c.b16 %v2688, %v2685
    %v3016 = vpack.c.b16 %v2689, %v2686
    %v3017 = vpack.c.b16 %v2693, %v2690
    %v3018 = vpack.c.b16 %v2694, %v2691
    %v3019 = vpack.c.b16 %v2695, %v2692
    %v3020 = vpack.c.b16 %v2699, %v2696
    %v3021 = vpack.c.b16 %v2700, %v2697
    %v3022 = vpack.c.b16 %v2701, %v2698
    %v3023 = vpack.c.b16 %v2705, %v2702
    %v3024 = vpack.c.b16 %v2706, %v2703
    %v3025 = vpack.c.b16 %v2707, %v2704
    %v3026 = vpack.c.b16 %v2711, %v2708
    %v3027 = vpack.c.b16 %v2712, %v2709
    %v3028 = vpack.c.b16 %v2713, %v2710
    %v3029 = vpack.c.b16 %v2717, %v2714
    %v3030 = vpack.c.b16 %v2718, %v2715
    %v3031 = vpack.c.b16 %v2719, %v2716
    %v3032 = vpack.c.b16 %v2723, %v2720
    %v3033 = vpack.c.b16 %v2724, %v2721
    %v3034 = vpack.c.b16 %v2725, %v2722
    %v3035 = vpack.c.b16 %v2729, %v2726
    %v3036 = vpack.c.b16 %v2730, %v2727
    %v3037 = vpack.c.b16 %v2731, %v2728
    %v3038 = vpack.c.b16 %v2735, %v2732
    %v3039 = vpack.c.b16 %v2736, %v2733
    %v3040 = vpack.c.b16 %v2737, %v2734
    %v3041 = vpack.c.b16 %v2741, %v2738
    %v3042 = vpack.c.b16 %v2742, %v2739
    %v3043 = vpack.c.b16 %v2743, %v2740
    %v3044 = vpack.c.b16 %v2747, %v2744
    %v3045 = vpack.c.b16 %v2748, %v2745
    %v3046 = vpack.c.b16 %v2749, %v2746
    %v3047 = vpack.c.b16 %v2753, %v2750
    %v3048 = vpack.c.b16 %v2754, %v2751
    %v3049 = vpack.c.b16 %v2755, %v2752
    %v3050 = vpack.c.b16 %v2759, %v2756
    %v3051 = vpack.c.b16 %v2760, %v2757
    %v3052 = vpack.c.b16 %v2761, %v2758
    %v3053 = vpack.c.b16 %v2765, %v2762
    %v3054 = vpack.c.b16 %v2766, %v2763
    %v3055 = vpack.c.b16 %v2767, %v2764
    %v3056 = vpack.c.b16 %v2771, %v2768
    %v3057 = vpack.c.b16 %v2772, %v2769
    %v3058 = vpack.c.b16 %v2773, %v2770
    %v3059 = vpack.c.b16 %v2777, %v2774
    %v3060 = vpack.c.b16 %v2778, %v2775
    %v3061 = vpack.c.b16 %v2779, %v2776
    %v3062 = vpack.c.b16 %v2783, %v2780
    %v3063 = vpack.c.b16 %v2784, %v2781
    %v3064 = vpack.c.b16 %v2785, %v2782
    %v3065 = vpack.c.b16 %v2789, %v2786
    %v3066 = vpack.c.b16 %v2790, %v2787
    %v3067 = vpack.c.b16 %v2791, %v2788
    %v3068 = vpack.c.b16 %v2795, %v2792
    %v3069 = vpack.c.b16 %v2796, %v2793
    %v3070 = vpack.c.b16 %v2797, %v2794
    %v3071 = vpack.c.b16 %v2801, %v2798
    %v3072 = vpack.c.b16 %v2802, %v2799
    %v3073 = vpack.c.b16 %v2803, %v2800
    %v3074 = vpack.c.b16 %v2807, %v2804
    %v3075 = vpack.c.b16 %v2808, %v2805
    %v3076 = vpack.c.b16 %v2809, %v2806
    %v3077 = vpack.c.b16 %v2813, %v2810
    %v3078 = vpack.c.b16 %v2814, %v2811
    %v3079 = vpack.c.b16 %v2815, %v2812
    %v3080 = vpack.c.b16 %v2819, %v2816
    %v3081 = vpack.c.b16 %v2820, %v2817
    %v3082 = vpack.c.b16 %v2821, %v2818
    %v3083 = vpack.c.b16 %v2825, %v2822
    %v3084 = vpack.c.b16 %v2826, %v2823
    %v3085 = vpack.c.b16 %v2827, %v2824
    %v3086 = vpack.c.b16 %v2831, %v2828
    %v3087 = vpack.c.b16 %v2832, %v2829
    %v3088 = vpack.c.b16 %v2833, %v2830
    %v3089 = vpack.c.b16 %v2837, %v2834
    %v3090 = vpack.c.b16 %v2838, %v2835
    %v3091 = vpack.c.b16 %v2839, %v2836
    %v3092 = vpack.c.b16 %v2843, %v2840
    %v3093 = vpack.c.b16 %v2844, %v2841
    %v3094 = vpack.c.b16 %v2845, %v2842
    %v3095 = vpack.c.b16 %v2849, %v2846
    %v3096 = vpack.c.b16 %v2850, %v2847
    %v3097 = vpack.c.b16 %v2851, %v2848
    %v3098 = vpack.c.b16 %v2855, %v2852
    %v3099 = vpack.c.b16 %v2856, %v2853
    %v3100 = vpack.c.b16 %v2857, %v2854
    %v3101 = vpack.c.b16 %v2861, %v2858
    %v3102 = vpack.c.b16 %v2862, %v2859
    %v3103 = vpack.c.b16 %v2863, %v2860
    %v3104 = vpack.c.b16 %v2867, %v2864
    %v3105 = vpack.c.b16 %v2868, %v2865
    %v3106 = vpack.c.b16 %v2869, %v2866
    %v3107 = vpack.c.b16 %v2873, %v2870
    %v3108 = vpack.c.b16 %v2874, %v2871
    %v3109 = vpack.c.b16 %v2875, %v2872
    %v3110 = vpack.c.b16 %v2879, %v2876
    %v3111 = vpack.c.b16 %v2880, %v2877
    %v3112 = vpack.c.b16 %v2881, %v2878
    %v3113 = vpack.c.b16 %v2885, %v2882
    %v3114 = vpack.c.b16 %v2886, %v2883
    %v3115 = vpack.c.b16 %v2887, %v2884
    %v3116 = vpack.c.b16 %v2891, %v2888
    %v3117 = vpack.c.b16 %v2892, %v2889
    %v3118 = vpack.c.b16 %v2893, %v2890
    %v3119 = vpack.c.b16 %v2897, %v2894
    %v3120 = vpack.c.b16 %v2898, %v2895
    %v3121 = vpack.c.b16 %v2899, %v2896
    %v3122 = vpack.c.b16 %v2903, %v2900
    %v3123 = vpack.c.b16 %v2904, %v2901
    %v3124 = vpack.c.b16 %v2905, %v2902
    %v3125 = vpack.c.b16 %v2909, %v2906
    %v3126 = vpack.c.b16 %v2910, %v2907
    %v3127 = vpack.c.b16 %v2911, %v2908
    %v3128 = vpack.c.b16 %v2915, %v2912
    %v3129 = vpack.c.b16 %v2916, %v2913
    %v3130 = vpack.c.b16 %v2917, %v2914
    %v3131 = vpack.c.b16 %v2921, %v2918
    %v3132 = vpack.c.b16 %v2922, %v2919
    %v3133 = vpack.c.b16 %v2923, %v2920
    %v3134 = vpack.c.b16 %v2927, %v2924
    %v3135 = vpack.c.b16 %v2928, %v2925
    %v3136 = vpack.c.b16 %v2929, %v2926
    %v3137 = vpack.c.b16 %v2933, %v2930
    %v3138 = vpack.c.b16 %v2934, %v2931
    %v3139 = vpack.c.b16 %v2935, %v2932
    %v3140 = vpack.c.b16 %v2939, %v2936
    %v3141 = vpack.c.b16 %v2940, %v2937
    %v3142 = vpack.c.b16 %v2941, %v2938
    %v3143 = vpack.c.b16 %v2945, %v2942
    %v3144 = vpack.c.b16 %v2946, %v2943
    %v3145 = vpack.c.b16 %v2947, %v2944
    %v3146 = vpack.c.b16 %v2951, %v2948
    %v3147 = vpack.c.b16 %v2952, %v2949
    %v3148 = vpack.c.b16 %v2953, %v2950
    %v3149 = vpack.c.b16 %v2957, %v2954
    %v3150 = vpack.c.b16 %v2958, %v2955
    %v3151 = vpack.c.b16 %v2959, %v2956
    %v3152 = vpack.c.b16 %v2963, %v2960
    %v3153 = vpack.c.b16 %v2964, %v2961
    %v3154 = vpack.c.b16 %v2965, %v2962
    %v3345 = vsel %vm1276, %v2319, 0
    %3347 = vmatprep.subr.bf16.mxu0 %v2988
    %3348 = vmatpush1.bf16.msra.mxu0 %v2987
    %3349 = vmatprep.subr.bf16.mxu0 %v2985
    %3350 = vmatpush1.bf16.msra.mxu0 %v2984
    %3351 = vmatprep.subr.bf16.mxu0 %v2982
    %3352 = vmatpush1.bf16.msra.mxu0 %v2981
    %3353 = vmatprep.subr.bf16.mxu0 %v2979
    %3354 = vmatpush1.bf16.msra.mxu0 %v2978
    %3355 = vmatprep.subr.bf16.mxu0 %v2976
    %3356 = vmatpush1.bf16.msra.mxu0 %v2975
    %3357 = vmatprep.subr.bf16.mxu0 %v2973
    %3358 = vmatpush1.bf16.msra.mxu0 %v2972
    %3359 = vmatprep.subr.bf16.mxu0 %v2970
    %3360 = vmatpush1.bf16.msra.mxu0 %v2969
    %3361 = vmatprep.subr.bf16.mxu0 %v2967
    %3362 = vmatpush1.bf16.msra.mxu0 %v2966
    %3363 = vmatprep.subr.bf16.mxu0 %v3012
    %3364 = vmatpush2.bf16.msra.mxu0 %v3011
    %3365 = vmatprep.subr.bf16.mxu0 %v3009
    %3366 = vmatpush2.bf16.msra.mxu0 %v3008
    %3367 = vmatprep.subr.bf16.mxu0 %v3006
    %3368 = vmatpush2.bf16.msra.mxu0 %v3005
    %3369 = vmatprep.subr.bf16.mxu0 %v3003
    %3370 = vmatpush2.bf16.msra.mxu0 %v3002
    %3371 = vmatprep.subr.bf16.mxu0 %v3000
    %3372 = vmatpush2.bf16.msra.mxu0 %v2999
    %3373 = vmatprep.subr.bf16.mxu0 %v2997
    %3374 = vmatpush2.bf16.msra.mxu0 %v2996
    %3375 = vmatprep.subr.bf16.mxu0 %v2994
    %3376 = vmatpush2.bf16.msra.mxu0 %v2993
    %3377 = vmatprep.subr.bf16.mxu0 %v2991
    %3378 = vmatpush2.bf16.msra.mxu0 %v2990
    %3379 = vmatprep.mubr.bf16.mxu0 %v2313
    %3380 = vmatmul.mubr.bf16.gmra.mxu0 %v2312
    %v3381 = vpop.f32.mrf.mxu0
    %v3382 = vadd.f32 %v2324, %v3381
    %v3383 = vpop.f32.mrf.mxu0
    %v3384 = vadd.f32 %v2328, %v3383
    %v3385 = vpop.f32.mrf.mxu0
    %v3386 = vpop.f32.mrf.mxu0
    %3387 = vdwg.mxu0
    %3388 = vmatprep.subr.bf16.mxu0 %v3036
    %3389 = vmatpush1.bf16.msra.mxu0 %v3035
    %3390 = vmatprep.subr.bf16.mxu0 %v3033
    %3391 = vmatpush1.bf16.msra.mxu0 %v3032
    %3392 = vmatprep.subr.bf16.mxu0 %v3030
    %3393 = vmatpush1.bf16.msra.mxu0 %v3029
    %3394 = vmatprep.subr.bf16.mxu0 %v3027
    %3395 = vmatpush1.bf16.msra.mxu0 %v3026
    %3396 = vmatprep.subr.bf16.mxu0 %v3024
    %3397 = vmatpush1.bf16.msra.mxu0 %v3023
    %3398 = vmatprep.subr.bf16.mxu0 %v3021
    %3399 = vmatpush1.bf16.msra.mxu0 %v3020
    %3400 = vmatprep.subr.bf16.mxu0 %v3018
    %3401 = vmatpush1.bf16.msra.mxu0 %v3017
    %3402 = vmatprep.subr.bf16.mxu0 %v3015
    %3403 = vmatpush1.bf16.msra.mxu0 %v3014
    %3404 = vmatprep.subr.bf16.mxu0 %v3060
    %3405 = vmatpush2.bf16.msra.mxu0 %v3059
    %3406 = vmatprep.subr.bf16.mxu0 %v3057
    %3407 = vmatpush2.bf16.msra.mxu0 %v3056
    %3408 = vmatprep.subr.bf16.mxu0 %v3054
    %3409 = vmatpush2.bf16.msra.mxu0 %v3053
    %3410 = vmatprep.subr.bf16.mxu0 %v3051
    %3411 = vmatpush2.bf16.msra.mxu0 %v3050
    %3412 = vmatprep.subr.bf16.mxu0 %v3048
    %3413 = vmatpush2.bf16.msra.mxu0 %v3047
    %3414 = vmatprep.subr.bf16.mxu0 %v3045
    %3415 = vmatpush2.bf16.msra.mxu0 %v3044
    %3416 = vmatprep.subr.bf16.mxu0 %v3042
    %3417 = vmatpush2.bf16.msra.mxu0 %v3041
    %3418 = vmatprep.subr.bf16.mxu0 %v3039
    %3419 = vmatpush2.bf16.msra.mxu0 %v3038
    %3420 = vmatprep.mubr.bf16.mxu0 %v2315
    %3421 = vmatmul.mubr.bf16.gmra.mxu0 %v2314
    %v3422 = vpop.f32.mrf.mxu0
    %v3423 = vadd.f32 %v3382, %v3422
    %v3424 = vpop.f32.mrf.mxu0
    %v3425 = vadd.f32 %v3384, %v3424
    %v3426 = vpop.f32.mrf.mxu0
    %v3427 = vpop.f32.mrf.mxu0
    %3428 = vdwg.mxu0
    %3429 = vmatprep.subr.bf16.mxu0 %v3084
    %3430 = vmatpush1.bf16.msra.mxu0 %v3083
    %3431 = vmatprep.subr.bf16.mxu0 %v3081
    %3432 = vmatpush1.bf16.msra.mxu0 %v3080
    %3433 = vmatprep.subr.bf16.mxu0 %v3078
    %3434 = vmatpush1.bf16.msra.mxu0 %v3077
    %3435 = vmatprep.subr.bf16.mxu0 %v3075
    %3436 = vmatpush1.bf16.msra.mxu0 %v3074
    %3437 = vmatprep.subr.bf16.mxu0 %v3072
    %3438 = vmatpush1.bf16.msra.mxu0 %v3071
    %3439 = vmatprep.subr.bf16.mxu0 %v3069
    %3440 = vmatpush1.bf16.msra.mxu0 %v3068
    %3441 = vmatprep.subr.bf16.mxu0 %v3066
    %3442 = vmatpush1.bf16.msra.mxu0 %v3065
    %3443 = vmatprep.subr.bf16.mxu0 %v3063
    %3444 = vmatpush1.bf16.msra.mxu0 %v3062
    %3445 = vmatprep.subr.bf16.mxu0 %v3108
    %3446 = vmatpush2.bf16.msra.mxu0 %v3107
    %3447 = vmatprep.subr.bf16.mxu0 %v3105
    %3448 = vmatpush2.bf16.msra.mxu0 %v3104
    %3449 = vmatprep.subr.bf16.mxu0 %v3102
    %3450 = vmatpush2.bf16.msra.mxu0 %v3101
    %3451 = vmatprep.subr.bf16.mxu0 %v3099
    %3452 = vmatpush2.bf16.msra.mxu0 %v3098
    %3453 = vmatprep.subr.bf16.mxu0 %v3096
    %3454 = vmatpush2.bf16.msra.mxu0 %v3095
    %3455 = vmatprep.subr.bf16.mxu0 %v3093
    %3456 = vmatpush2.bf16.msra.mxu0 %v3092
    %3457 = vmatprep.subr.bf16.mxu0 %v3090
    %3458 = vmatpush2.bf16.msra.mxu0 %v3089
    %3459 = vmatprep.subr.bf16.mxu0 %v3087
    %3460 = vmatpush2.bf16.msra.mxu0 %v3086
    %3461 = vmatprep.mubr.bf16.mxu0 %v2317
    %3462 = vmatmul.mubr.bf16.gmra.mxu0 %v2316
    %v3463 = vpop.f32.mrf.mxu0
    %v3464 = vadd.f32 %v3423, %v3463
    %v3465 = vpop.f32.mrf.mxu0
    %v3466 = vadd.f32 %v3425, %v3465
    %v3467 = vpop.f32.mrf.mxu0
    %v3468 = vpop.f32.mrf.mxu0
    %3469 = vdwg.mxu0
    %3470 = vmatprep.subr.bf16.mxu0 %v3132
    %3471 = vmatpush1.bf16.msra.mxu0 %v3131
    %3472 = vmatprep.subr.bf16.mxu0 %v3129
    %3473 = vmatpush1.bf16.msra.mxu0 %v3128
    %3474 = vmatprep.subr.bf16.mxu0 %v3126
    %3475 = vmatpush1.bf16.msra.mxu0 %v3125
    %3476 = vmatprep.subr.bf16.mxu0 %v3123
    %3477 = vmatpush1.bf16.msra.mxu0 %v3122
    %3478 = vmatprep.subr.bf16.mxu0 %v3120
    %3479 = vmatpush1.bf16.msra.mxu0 %v3119
    %3480 = vmatprep.subr.bf16.mxu0 %v3117
    %3481 = vmatpush1.bf16.msra.mxu0 %v3116
    %3482 = vmatprep.subr.bf16.mxu0 %v3114
    %3483 = vmatpush1.bf16.msra.mxu0 %v3113
    %3484 = vmatprep.subr.bf16.mxu0 %v3111
    %3485 = vmatpush1.bf16.msra.mxu0 %v3110
    %3486 = vmatprep.subr.bf16.mxu0 0
    %3487 = vmatpush2.bf16.msra.mxu0 0
    %3488 = vmatprep.subr.bf16.mxu0 %v3153
    %3489 = vmatpush2.bf16.msra.mxu0 %v3152
    %3490 = vmatprep.subr.bf16.mxu0 %v3150
    %3491 = vmatpush2.bf16.msra.mxu0 %v3149
    %3492 = vmatprep.subr.bf16.mxu0 %v3147
    %3493 = vmatpush2.bf16.msra.mxu0 %v3146
    %3494 = vmatprep.subr.bf16.mxu0 %v3144
    %3495 = vmatpush2.bf16.msra.mxu0 %v3143
    %3496 = vmatprep.subr.bf16.mxu0 %v3141
    %3497 = vmatpush2.bf16.msra.mxu0 %v3140
    %3498 = vmatprep.subr.bf16.mxu0 %v3138
    %3499 = vmatpush2.bf16.msra.mxu0 %v3137
    %3500 = vmatprep.subr.bf16.mxu0 %v3135
    %3501 = vmatpush2.bf16.msra.mxu0 %v3134
    %3502 = vmatprep.mubr.bf16.mxu0 %v3345
    %3503 = vmatmul.mubr.bf16.gmra.mxu0 %v2318
    %v3504 = vpop.f32.mrf.mxu0
    %v3505 = vadd.f32 %v3464, %v3504
    %v3506 = vpop.f32.mrf.mxu0
    %v3507 = vadd.f32 %v3466, %v3506
    %v3508 = vpop.f32.mrf.mxu0
    %v3509 = vpop.f32.mrf.mxu0
    %3510 = vdwg.mxu0
    %3511 = vmatprep.subr.bf16.mxu0 0
    %3512 = vmatpush1.bf16.msra.mxu0 %v2989
    %3513 = vmatprep.subr.bf16.mxu0 0
    %3514 = vmatpush1.bf16.msra.mxu0 %v2986
    %3515 = vmatprep.subr.bf16.mxu0 0
    %3516 = vmatpush1.bf16.msra.mxu0 %v2983
    %3517 = vmatprep.subr.bf16.mxu0 0
    %3518 = vmatpush1.bf16.msra.mxu0 %v2980
    %3519 = vmatprep.subr.bf16.mxu0 0
    %3520 = vmatpush1.bf16.msra.mxu0 %v2977
    %3521 = vmatprep.subr.bf16.mxu0 0
    %3522 = vmatpush1.bf16.msra.mxu0 %v2974
    %3523 = vmatprep.subr.bf16.mxu0 0
    %3524 = vmatpush1.bf16.msra.mxu0 %v2971
    %3525 = vmatprep.subr.bf16.mxu0 0
    %3526 = vmatpush1.bf16.msra.mxu0 %v2968
    %3527 = vmatprep.subr.bf16.mxu0 0
    %3528 = vmatpush2.bf16.msra.mxu0 %v3013
    %3529 = vmatprep.subr.bf16.mxu0 0
    %3530 = vmatpush2.bf16.msra.mxu0 %v3010
    %3531 = vmatprep.subr.bf16.mxu0 0
    %3532 = vmatpush2.bf16.msra.mxu0 %v3007
    %3533 = vmatprep.subr.bf16.mxu0 0
    %3534 = vmatpush2.bf16.msra.mxu0 %v3004
    %3535 = vmatprep.subr.bf16.mxu0 0
    %3536 = vmatpush2.bf16.msra.mxu0 %v3001
    %3537 = vmatprep.subr.bf16.mxu0 0
    %3538 = vmatpush2.bf16.msra.mxu0 %v2998
    %3539 = vmatprep.subr.bf16.mxu0 0
    %3540 = vmatpush2.bf16.msra.mxu0 %v2995
    %3541 = vmatprep.subr.bf16.mxu0 0
    %3542 = vmatpush2.bf16.msra.mxu0 %v2992
    %3543 = vmatprep.mubr.bf16.mxu0 %v2313
    %3544 = vmatmul.mubr.bf16.gmra.mxu0 %v2312
    %v3545 = vpop.f32.mrf.mxu0
    %v3546 = vadd.f32 %v2332, %v3545
    %v3547 = vpop.f32.mrf.mxu0
    %v3548 = vpop.f32.mrf.mxu0
    %v3549 = vpop.f32.mrf.mxu0
    %3550 = vdwg.mxu0
    %3551 = vmatprep.subr.bf16.mxu0 0
    %3552 = vmatpush1.bf16.msra.mxu0 %v3037
    %3553 = vmatprep.subr.bf16.mxu0 0
    %3554 = vmatpush1.bf16.msra.mxu0 %v3034
    %3555 = vmatprep.subr.bf16.mxu0 0
    %3556 = vmatpush1.bf16.msra.mxu0 %v3031
    %3557 = vmatprep.subr.bf16.mxu0 0
    %3558 = vmatpush1.bf16.msra.mxu0 %v3028
    %3559 = vmatprep.subr.bf16.mxu0 0
    %3560 = vmatpush1.bf16.msra.mxu0 %v3025
    %3561 = vmatprep.subr.bf16.mxu0 0
    %3562 = vmatpush1.bf16.msra.mxu0 %v3022
    %3563 = vmatprep.subr.bf16.mxu0 0
    %3564 = vmatpush1.bf16.msra.mxu0 %v3019
    %3565 = vmatprep.subr.bf16.mxu0 0
    %3566 = vmatpush1.bf16.msra.mxu0 %v3016
    %3567 = vmatprep.subr.bf16.mxu0 0
    %3568 = vmatpush2.bf16.msra.mxu0 %v3061
    %3569 = vmatprep.subr.bf16.mxu0 0
    %3570 = vmatpush2.bf16.msra.mxu0 %v3058
    %3571 = vmatprep.subr.bf16.mxu0 0
    %3572 = vmatpush2.bf16.msra.mxu0 %v3055
    %3573 = vmatprep.subr.bf16.mxu0 0
    %3574 = vmatpush2.bf16.msra.mxu0 %v3052
    %3575 = vmatprep.subr.bf16.mxu0 0
    %3576 = vmatpush2.bf16.msra.mxu0 %v3049
    %3577 = vmatprep.subr.bf16.mxu0 0
    %3578 = vmatpush2.bf16.msra.mxu0 %v3046
    %3579 = vmatprep.subr.bf16.mxu0 0
    %3580 = vmatpush2.bf16.msra.mxu0 %v3043
    %3581 = vmatprep.subr.bf16.mxu0 0
    %3582 = vmatpush2.bf16.msra.mxu0 %v3040
    %3583 = vmatprep.mubr.bf16.mxu0 %v2315
    %3584 = vmatmul.mubr.bf16.gmra.mxu0 %v2314
    %v3585 = vpop.f32.mrf.mxu0
    %v3586 = vadd.f32 %v3546, %v3585
    %v3587 = vpop.f32.mrf.mxu0
    %v3588 = vpop.f32.mrf.mxu0
    %v3589 = vpop.f32.mrf.mxu0
    %3590 = vdwg.mxu0
    %3591 = vmatprep.subr.bf16.mxu0 0
    %3592 = vmatpush1.bf16.msra.mxu0 %v3085
    %3593 = vmatprep.subr.bf16.mxu0 0
    %3594 = vmatpush1.bf16.msra.mxu0 %v3082
    %3595 = vmatprep.subr.bf16.mxu0 0
    %3596 = vmatpush1.bf16.msra.mxu0 %v3079
    %3597 = vmatprep.subr.bf16.mxu0 0
    %3598 = vmatpush1.bf16.msra.mxu0 %v3076
    %3599 = vmatprep.subr.bf16.mxu0 0
    %3600 = vmatpush1.bf16.msra.mxu0 %v3073
    %3601 = vmatprep.subr.bf16.mxu0 0
    %3602 = vmatpush1.bf16.msra.mxu0 %v3070
    %3603 = vmatprep.subr.bf16.mxu0 0
    %3604 = vmatpush1.bf16.msra.mxu0 %v3067
    %3605 = vmatprep.subr.bf16.mxu0 0
    %3606 = vmatpush1.bf16.msra.mxu0 %v3064
    %3607 = vmatprep.subr.bf16.mxu0 0
    %3608 = vmatpush2.bf16.msra.mxu0 %v3109
    %3609 = vmatprep.subr.bf16.mxu0 0
    %3610 = vmatpush2.bf16.msra.mxu0 %v3106
    %3611 = vmatprep.subr.bf16.mxu0 0
    %3612 = vmatpush2.bf16.msra.mxu0 %v3103
    %3613 = vmatprep.subr.bf16.mxu0 0
    %3614 = vmatpush2.bf16.msra.mxu0 %v3100
    %3615 = vmatprep.subr.bf16.mxu0 0
    %3616 = vmatpush2.bf16.msra.mxu0 %v3097
    %3617 = vmatprep.subr.bf16.mxu0 0
    %3618 = vmatpush2.bf16.msra.mxu0 %v3094
    %3619 = vmatprep.subr.bf16.mxu0 0
    %3620 = vmatpush2.bf16.msra.mxu0 %v3091
    %3621 = vmatprep.subr.bf16.mxu0 0
    %3622 = vmatpush2.bf16.msra.mxu0 %v3088
    %3623 = vmatprep.mubr.bf16.mxu0 %v2317
    %3624 = vmatmul.mubr.bf16.gmra.mxu0 %v2316
    %v3625 = vpop.f32.mrf.mxu0
    %v3626 = vadd.f32 %v3586, %v3625
    %v3627 = vpop.f32.mrf.mxu0
    %v3628 = vpop.f32.mrf.mxu0
    %v3629 = vpop.f32.mrf.mxu0
    %3630 = vdwg.mxu0
    %3631 = vmatprep.subr.bf16.mxu0 0
    %3632 = vmatpush1.bf16.msra.mxu0 %v3133
    %3633 = vmatprep.subr.bf16.mxu0 0
    %3634 = vmatpush1.bf16.msra.mxu0 %v3130
    %3635 = vmatprep.subr.bf16.mxu0 0
    %3636 = vmatpush1.bf16.msra.mxu0 %v3127
    %3637 = vmatprep.subr.bf16.mxu0 0
    %3638 = vmatpush1.bf16.msra.mxu0 %v3124
    %3639 = vmatprep.subr.bf16.mxu0 0
    %3640 = vmatpush1.bf16.msra.mxu0 %v3121
    %3641 = vmatprep.subr.bf16.mxu0 0
    %3642 = vmatpush1.bf16.msra.mxu0 %v3118
    %3643 = vmatprep.subr.bf16.mxu0 0
    %3644 = vmatpush1.bf16.msra.mxu0 %v3115
    %3645 = vmatprep.subr.bf16.mxu0 0
    %3646 = vmatpush1.bf16.msra.mxu0 %v3112
    %3647 = vmatprep.subr.bf16.mxu0 0
    %3648 = vmatpush2.bf16.msra.mxu0 0
    %3649 = vmatprep.subr.bf16.mxu0 0
    %3650 = vmatpush2.bf16.msra.mxu0 %v3154
    %3651 = vmatprep.subr.bf16.mxu0 0
    %3652 = vmatpush2.bf16.msra.mxu0 %v3151
    %3653 = vmatprep.subr.bf16.mxu0 0
    %3654 = vmatpush2.bf16.msra.mxu0 %v3148
    %3655 = vmatprep.subr.bf16.mxu0 0
    %3656 = vmatpush2.bf16.msra.mxu0 %v3145
    %3657 = vmatprep.subr.bf16.mxu0 0
    %3658 = vmatpush2.bf16.msra.mxu0 %v3142
    %3659 = vmatprep.subr.bf16.mxu0 0
    %3660 = vmatpush2.bf16.msra.mxu0 %v3139
    %3661 = vmatprep.subr.bf16.mxu0 0
    %3662 = vmatpush2.bf16.msra.mxu0 %v3136
    %3663 = vmatprep.mubr.bf16.mxu0 %v3345
    %3664 = vmatmul.mubr.bf16.gmra.mxu0 %v2318
    %v3665 = vpop.f32.mrf.mxu0
    %v3666 = vadd.f32 %v3626, %v3665
    %v3667 = vpop.f32.mrf.mxu0
    %v3668 = vpop.f32.mrf.mxu0
    %v3669 = vpop.f32.mrf.mxu0
    %3670 = vdwg.mxu0
    %v3671 = vmax.f32 %v3505, 0.0
    %v3672 = vmax.f32 %v3507, 0.0
    %v3673 = vmax.f32 %v3666, 0.0
    %3676 = vrot.lane.b32.xlu0 %v3672, 96
    %v3677 = vpop.permute.xlu0 %3676
    %3678 = vrot.lane.b32.xlu0 %v3673, 96
    %v3679 = vpop.permute.xlu0 %3678
    %v3680 = vsel %vm2041, %v3677, %v3679
    %v3683 = vadd.f32 %v3671, %v3680
    %v3684 = vadd.f32 %v3672, %v3679
    %v3685 = vmul.f32 %v3683, 0.5
    %v3686 = vmul.f32 %v3684, 0.5
    %3687 = vst [vmem:[#allocation3] sm:$0xff] %v3685
    %3688 = vst.msk [vmem:[#allocation3 + $0x8] sm:$0xff] %vm1018, %v3686
    %v3689 = vld [vmem:[#allocation2 + $0x10] sm:$0xff]
    %v3690 = vld [vmem:[#allocation2 + $0x18] sm:$0xff]
    %v3691 = vld [vmem:[#allocation2 + $0x20] sm:$0xff]
    %v3692 = vld [vmem:[#allocation2 + $0x28] sm:$0xff]
    %v3693 = vld [vmem:[#allocation2 + $0x30] sm:$0xff]
    %v3694 = vld [vmem:[#allocation2 + $0x38] sm:$0xff]
    %v3695 = vld [vmem:[#allocation2 + $0x40] sm:$0xff]
    %v3696 = vld [vmem:[#allocation2 + $0x48] sm:$0xff]
    %v3697 = vld [vmem:[#allocation2 + $0x50] sm:$0xff]
    %v3698 = vpack.c.bf16 %v3689, %v3689
    %v3699 = vpack.c.bf16 %v3690, %v3690
    %v3700 = vpack.c.bf16 %v3691, %v3691
    %v3701 = vpack.c.bf16 %v3692, %v3692
    %v3702 = vpack.c.bf16 %v3693, %v3693
    %v3703 = vpack.c.bf16 %v3694, %v3694
    %v3704 = vpack.c.bf16 %v3695, %v3695
    %v3705 = vpack.c.bf16 %v3696, %v3696
    %v3706 = vpack.c.bf16 %v3697, %v3697
    %3716 = vrot.lane.b32.xlu0 %v3698, 48
    %v3717 = vpop.permute.xlu0 %3716
    %3718 = vrot.lane.b32.xlu0 %v3699, 48
    %v3719 = vpop.permute.xlu0 %3718
    %3720 = vrot.lane.b32.xlu0 %v3700, 48
    %v3721 = vpop.permute.xlu0 %3720
    %3722 = vrot.lane.b32.xlu0 %v3701, 48
    %v3723 = vpop.permute.xlu0 %3722
    %3724 = vrot.lane.b32.xlu0 %v3702, 48
    %v3725 = vpop.permute.xlu0 %3724
    %3726 = vrot.lane.b32.xlu0 %v3703, 48
    %v3727 = vpop.permute.xlu0 %3726
    %3728 = vrot.lane.b32.xlu0 %v3704, 48
    %v3729 = vpop.permute.xlu0 %3728
    %3730 = vrot.lane.b32.xlu0 %v3705, 48
    %v3731 = vpop.permute.xlu0 %3730
    %3732 = vrot.lane.b32.xlu0 %v3706, 48
    %v3733 = vpop.permute.xlu0 %3732
    %v3734 = vsel %vm1416, %v3717, %v3719
    %v3735 = vsel %vm1416, %v3719, %v3721
    %v3736 = vsel %vm1416, %v3721, %v3723
    %v3737 = vsel %vm1416, %v3723, %v3725
    %v3738 = vsel %vm1416, %v3725, %v3727
    %v3739 = vsel %vm1416, %v3727, %v3729
    %v3740 = vsel %vm1416, %v3729, %v3731
    %v3741 = vsel %vm1416, %v3731, %v3733
    %v3750 = vsel %vm1276, %v3741, 0
    %3752 = vmatprep.subr.bf16.mxu0 %v2988
    %3753 = vmatpush1.bf16.msra.mxu0 %v2987
    %3754 = vmatprep.subr.bf16.mxu0 %v2985
    %3755 = vmatpush1.bf16.msra.mxu0 %v2984
    %3756 = vmatprep.subr.bf16.mxu0 %v2982
    %3757 = vmatpush1.bf16.msra.mxu0 %v2981
    %3758 = vmatprep.subr.bf16.mxu0 %v2979
    %3759 = vmatpush1.bf16.msra.mxu0 %v2978
    %3760 = vmatprep.subr.bf16.mxu0 %v2976
    %3761 = vmatpush1.bf16.msra.mxu0 %v2975
    %3762 = vmatprep.subr.bf16.mxu0 %v2973
    %3763 = vmatpush1.bf16.msra.mxu0 %v2972
    %3764 = vmatprep.subr.bf16.mxu0 %v2970
    %3765 = vmatpush1.bf16.msra.mxu0 %v2969
    %3766 = vmatprep.subr.bf16.mxu0 %v2967
    %3767 = vmatpush1.bf16.msra.mxu0 %v2966
    %3768 = vmatprep.subr.bf16.mxu0 %v3012
    %3769 = vmatpush2.bf16.msra.mxu0 %v3011
    %3770 = vmatprep.subr.bf16.mxu0 %v3009
    %3771 = vmatpush2.bf16.msra.mxu0 %v3008
    %3772 = vmatprep.subr.bf16.mxu0 %v3006
    %3773 = vmatpush2.bf16.msra.mxu0 %v3005
    %3774 = vmatprep.subr.bf16.mxu0 %v3003
    %3775 = vmatpush2.bf16.msra.mxu0 %v3002
    %3776 = vmatprep.subr.bf16.mxu0 %v3000
    %3777 = vmatpush2.bf16.msra.mxu0 %v2999
    %3778 = vmatprep.subr.bf16.mxu0 %v2997
    %3779 = vmatpush2.bf16.msra.mxu0 %v2996
    %3780 = vmatprep.subr.bf16.mxu0 %v2994
    %3781 = vmatpush2.bf16.msra.mxu0 %v2993
    %3782 = vmatprep.subr.bf16.mxu0 %v2991
    %3783 = vmatpush2.bf16.msra.mxu0 %v2990
    %3784 = vmatprep.mubr.bf16.mxu0 %v3735
    %3785 = vmatmul.mubr.bf16.gmra.mxu0 %v3734
    %v3786 = vpop.f32.mrf.mxu0
    %v3787 = vadd.f32 %v2324, %v3786
    %v3788 = vpop.f32.mrf.mxu0
    %v3789 = vadd.f32 %v2328, %v3788
    %v3790 = vpop.f32.mrf.mxu0
    %v3791 = vpop.f32.mrf.mxu0
    %3792 = vdwg.mxu0
    %3793 = vmatprep.subr.bf16.mxu0 %v3036
    %3794 = vmatpush1.bf16.msra.mxu0 %v3035
    %3795 = vmatprep.subr.bf16.mxu0 %v3033
    %3796 = vmatpush1.bf16.msra.mxu0 %v3032
    %3797 = vmatprep.subr.bf16.mxu0 %v3030
    %3798 = vmatpush1.bf16.msra.mxu0 %v3029
    %3799 = vmatprep.subr.bf16.mxu0 %v3027
    %3800 = vmatpush1.bf16.msra.mxu0 %v3026
    %3801 = vmatprep.subr.bf16.mxu0 %v3024
    %3802 = vmatpush1.bf16.msra.mxu0 %v3023
    %3803 = vmatprep.subr.bf16.mxu0 %v3021
    %3804 = vmatpush1.bf16.msra.mxu0 %v3020
    %3805 = vmatprep.subr.bf16.mxu0 %v3018
    %3806 = vmatpush1.bf16.msra.mxu0 %v3017
    %3807 = vmatprep.subr.bf16.mxu0 %v3015
    %3808 = vmatpush1.bf16.msra.mxu0 %v3014
    %3809 = vmatprep.subr.bf16.mxu0 %v3060
    %3810 = vmatpush2.bf16.msra.mxu0 %v3059
    %3811 = vmatprep.subr.bf16.mxu0 %v3057
    %3812 = vmatpush2.bf16.msra.mxu0 %v3056
    %3813 = vmatprep.subr.bf16.mxu0 %v3054
    %3814 = vmatpush2.bf16.msra.mxu0 %v3053
    %3815 = vmatprep.subr.bf16.mxu0 %v3051
    %3816 = vmatpush2.bf16.msra.mxu0 %v3050
    %3817 = vmatprep.subr.bf16.mxu0 %v3048
    %3818 = vmatpush2.bf16.msra.mxu0 %v3047
    %3819 = vmatprep.subr.bf16.mxu0 %v3045
    %3820 = vmatpush2.bf16.msra.mxu0 %v3044
    %3821 = vmatprep.subr.bf16.mxu0 %v3042
    %3822 = vmatpush2.bf16.msra.mxu0 %v3041
    %3823 = vmatprep.subr.bf16.mxu0 %v3039
    %3824 = vmatpush2.bf16.msra.mxu0 %v3038
    %3825 = vmatprep.mubr.bf16.mxu0 %v3737
    %3826 = vmatmul.mubr.bf16.gmra.mxu0 %v3736
    %v3827 = vpop.f32.mrf.mxu0
    %v3828 = vadd.f32 %v3787, %v3827
    %v3829 = vpop.f32.mrf.mxu0
    %v3830 = vadd.f32 %v3789, %v3829
    %v3831 = vpop.f32.mrf.mxu0
    %v3832 = vpop.f32.mrf.mxu0
    %3833 = vdwg.mxu0
    %3834 = vmatprep.subr.bf16.mxu0 %v3084
    %3835 = vmatpush1.bf16.msra.mxu0 %v3083
    %3836 = vmatprep.subr.bf16.mxu0 %v3081
    %3837 = vmatpush1.bf16.msra.mxu0 %v3080
    %3838 = vmatprep.subr.bf16.mxu0 %v3078
    %3839 = vmatpush1.bf16.msra.mxu0 %v3077
    %3840 = vmatprep.subr.bf16.mxu0 %v3075
    %3841 = vmatpush1.bf16.msra.mxu0 %v3074
    %3842 = vmatprep.subr.bf16.mxu0 %v3072
    %3843 = vmatpush1.bf16.msra.mxu0 %v3071
    %3844 = vmatprep.subr.bf16.mxu0 %v3069
    %3845 = vmatpush1.bf16.msra.mxu0 %v3068
    %3846 = vmatprep.subr.bf16.mxu0 %v3066
    %3847 = vmatpush1.bf16.msra.mxu0 %v3065
    %3848 = vmatprep.subr.bf16.mxu0 %v3063
    %3849 = vmatpush1.bf16.msra.mxu0 %v3062
    %3850 = vmatprep.subr.bf16.mxu0 %v3108
    %3851 = vmatpush2.bf16.msra.mxu0 %v3107
    %3852 = vmatprep.subr.bf16.mxu0 %v3105
    %3853 = vmatpush2.bf16.msra.mxu0 %v3104
    %3854 = vmatprep.subr.bf16.mxu0 %v3102
    %3855 = vmatpush2.bf16.msra.mxu0 %v3101
    %3856 = vmatprep.subr.bf16.mxu0 %v3099
    %3857 = vmatpush2.bf16.msra.mxu0 %v3098
    %3858 = vmatprep.subr.bf16.mxu0 %v3096
    %3859 = vmatpush2.bf16.msra.mxu0 %v3095
    %3860 = vmatprep.subr.bf16.mxu0 %v3093
    %3861 = vmatpush2.bf16.msra.mxu0 %v3092
    %3862 = vmatprep.subr.bf16.mxu0 %v3090
    %3863 = vmatpush2.bf16.msra.mxu0 %v3089
    %3864 = vmatprep.subr.bf16.mxu0 %v3087
    %3865 = vmatpush2.bf16.msra.mxu0 %v3086
    %3866 = vmatprep.mubr.bf16.mxu0 %v3739
    %3867 = vmatmul.mubr.bf16.gmra.mxu0 %v3738
    %v3868 = vpop.f32.mrf.mxu0
    %v3869 = vadd.f32 %v3828, %v3868
    %v3870 = vpop.f32.mrf.mxu0
    %v3871 = vadd.f32 %v3830, %v3870
    %v3872 = vpop.f32.mrf.mxu0
    %v3873 = vpop.f32.mrf.mxu0
    %3874 = vdwg.mxu0
    %3875 = vmatprep.subr.bf16.mxu0 %v3132
    %3876 = vmatpush1.bf16.msra.mxu0 %v3131
    %3877 = vmatprep.subr.bf16.mxu0 %v3129
    %3878 = vmatpush1.bf16.msra.mxu0 %v3128
    %3879 = vmatprep.subr.bf16.mxu0 %v3126
    %3880 = vmatpush1.bf16.msra.mxu0 %v3125
    %3881 = vmatprep.subr.bf16.mxu0 %v3123
    %3882 = vmatpush1.bf16.msra.mxu0 %v3122
    %3883 = vmatprep.subr.bf16.mxu0 %v3120
    %3884 = vmatpush1.bf16.msra.mxu0 %v3119
    %3885 = vmatprep.subr.bf16.mxu0 %v3117
    %3886 = vmatpush1.bf16.msra.mxu0 %v3116
    %3887 = vmatprep.subr.bf16.mxu0 %v3114
    %3888 = vmatpush1.bf16.msra.mxu0 %v3113
    %3889 = vmatprep.subr.bf16.mxu0 %v3111
    %3890 = vmatpush1.bf16.msra.mxu0 %v3110
    %3891 = vmatprep.subr.bf16.mxu0 0
    %3892 = vmatpush2.bf16.msra.mxu0 0
    %3893 = vmatprep.subr.bf16.mxu0 %v3153
    %3894 = vmatpush2.bf16.msra.mxu0 %v3152
    %3895 = vmatprep.subr.bf16.mxu0 %v3150
    %3896 = vmatpush2.bf16.msra.mxu0 %v3149
    %3897 = vmatprep.subr.bf16.mxu0 %v3147
    %3898 = vmatpush2.bf16.msra.mxu0 %v3146
    %3899 = vmatprep.subr.bf16.mxu0 %v3144
    %3900 = vmatpush2.bf16.msra.mxu0 %v3143
    %3901 = vmatprep.subr.bf16.mxu0 %v3141
    %3902 = vmatpush2.bf16.msra.mxu0 %v3140
    %3903 = vmatprep.subr.bf16.mxu0 %v3138
    %3904 = vmatpush2.bf16.msra.mxu0 %v3137
    %3905 = vmatprep.subr.bf16.mxu0 %v3135
    %3906 = vmatpush2.bf16.msra.mxu0 %v3134
    %3907 = vmatprep.mubr.bf16.mxu0 %v3750
    %3908 = vmatmul.mubr.bf16.gmra.mxu0 %v3740
    %v3909 = vpop.f32.mrf.mxu0
    %v3910 = vadd.f32 %v3869, %v3909
    %v3911 = vpop.f32.mrf.mxu0
    %v3912 = vadd.f32 %v3871, %v3911
    %v3913 = vpop.f32.mrf.mxu0
    %v3914 = vpop.f32.mrf.mxu0
    %3915 = vdwg.mxu0
    %3916 = vmatprep.subr.bf16.mxu0 0
    %3917 = vmatpush1.bf16.msra.mxu0 %v2989
    %3918 = vmatprep.subr.bf16.mxu0 0
    %3919 = vmatpush1.bf16.msra.mxu0 %v2986
    %3920 = vmatprep.subr.bf16.mxu0 0
    %3921 = vmatpush1.bf16.msra.mxu0 %v2983
    %3922 = vmatprep.subr.bf16.mxu0 0
    %3923 = vmatpush1.bf16.msra.mxu0 %v2980
    %3924 = vmatprep.subr.bf16.mxu0 0
    %3925 = vmatpush1.bf16.msra.mxu0 %v2977
    %3926 = vmatprep.subr.bf16.mxu0 0
    %3927 = vmatpush1.bf16.msra.mxu0 %v2974
    %3928 = vmatprep.subr.bf16.mxu0 0
    %3929 = vmatpush1.bf16.msra.mxu0 %v2971
    %3930 = vmatprep.subr.bf16.mxu0 0
    %3931 = vmatpush1.bf16.msra.mxu0 %v2968
    %3932 = vmatprep.subr.bf16.mxu0 0
    %3933 = vmatpush2.bf16.msra.mxu0 %v3013
    %3934 = vmatprep.subr.bf16.mxu0 0
    %3935 = vmatpush2.bf16.msra.mxu0 %v3010
    %3936 = vmatprep.subr.bf16.mxu0 0
    %3937 = vmatpush2.bf16.msra.mxu0 %v3007
    %3938 = vmatprep.subr.bf16.mxu0 0
    %3939 = vmatpush2.bf16.msra.mxu0 %v3004
    %3940 = vmatprep.subr.bf16.mxu0 0
    %3941 = vmatpush2.bf16.msra.mxu0 %v3001
    %3942 = vmatprep.subr.bf16.mxu0 0
    %3943 = vmatpush2.bf16.msra.mxu0 %v2998
    %3944 = vmatprep.subr.bf16.mxu0 0
    %3945 = vmatpush2.bf16.msra.mxu0 %v2995
    %3946 = vmatprep.subr.bf16.mxu0 0
    %3947 = vmatpush2.bf16.msra.mxu0 %v2992
    %3948 = vmatprep.mubr.bf16.mxu0 %v3735
    %3949 = vmatmul.mubr.bf16.gmra.mxu0 %v3734
    %v3950 = vpop.f32.mrf.mxu0
    %v3951 = vadd.f32 %v2332, %v3950
    %v3952 = vpop.f32.mrf.mxu0
    %v3953 = vpop.f32.mrf.mxu0
    %v3954 = vpop.f32.mrf.mxu0
    %3955 = vdwg.mxu0
    %3956 = vmatprep.subr.bf16.mxu0 0
    %3957 = vmatpush1.bf16.msra.mxu0 %v3037
    %3958 = vmatprep.subr.bf16.mxu0 0
    %3959 = vmatpush1.bf16.msra.mxu0 %v3034
    %3960 = vmatprep.subr.bf16.mxu0 0
    %3961 = vmatpush1.bf16.msra.mxu0 %v3031
    %3962 = vmatprep.subr.bf16.mxu0 0
    %3963 = vmatpush1.bf16.msra.mxu0 %v3028
    %3964 = vmatprep.subr.bf16.mxu0 0
    %3965 = vmatpush1.bf16.msra.mxu0 %v3025
    %3966 = vmatprep.subr.bf16.mxu0 0
    %3967 = vmatpush1.bf16.msra.mxu0 %v3022
    %3968 = vmatprep.subr.bf16.mxu0 0
    %3969 = vmatpush1.bf16.msra.mxu0 %v3019
    %3970 = vmatprep.subr.bf16.mxu0 0
    %3971 = vmatpush1.bf16.msra.mxu0 %v3016
    %3972 = vmatprep.subr.bf16.mxu0 0
    %3973 = vmatpush2.bf16.msra.mxu0 %v3061
    %3974 = vmatprep.subr.bf16.mxu0 0
    %3975 = vmatpush2.bf16.msra.mxu0 %v3058
    %3976 = vmatprep.subr.bf16.mxu0 0
    %3977 = vmatpush2.bf16.msra.mxu0 %v3055
    %3978 = vmatprep.subr.bf16.mxu0 0
    %3979 = vmatpush2.bf16.msra.mxu0 %v3052
    %3980 = vmatprep.subr.bf16.mxu0 0
    %3981 = vmatpush2.bf16.msra.mxu0 %v3049
    %3982 = vmatprep.subr.bf16.mxu0 0
    %3983 = vmatpush2.bf16.msra.mxu0 %v3046
    %3984 = vmatprep.subr.bf16.mxu0 0
    %3985 = vmatpush2.bf16.msra.mxu0 %v3043
    %3986 = vmatprep.subr.bf16.mxu0 0
    %3987 = vmatpush2.bf16.msra.mxu0 %v3040
    %3988 = vmatprep.mubr.bf16.mxu0 %v3737
    %3989 = vmatmul.mubr.bf16.gmra.mxu0 %v3736
    %v3990 = vpop.f32.mrf.mxu0
    %v3991 = vadd.f32 %v3951, %v3990
    %v3992 = vpop.f32.mrf.mxu0
    %v3993 = vpop.f32.mrf.mxu0
    %v3994 = vpop.f32.mrf.mxu0
    %3995 = vdwg.mxu0
    %3996 = vmatprep.subr.bf16.mxu0 0
    %3997 = vmatpush1.bf16.msra.mxu0 %v3085
    %3998 = vmatprep.subr.bf16.mxu0 0
    %3999 = vmatpush1.bf16.msra.mxu0 %v3082
    %4000 = vmatprep.subr.bf16.mxu0 0
    %4001 = vmatpush1.bf16.msra.mxu0 %v3079
    %4002 = vmatprep.subr.bf16.mxu0 0
    %4003 = vmatpush1.bf16.msra.mxu0 %v3076
    %4004 = vmatprep.subr.bf16.mxu0 0
    %4005 = vmatpush1.bf16.msra.mxu0 %v3073
    %4006 = vmatprep.subr.bf16.mxu0 0
    %4007 = vmatpush1.bf16.msra.mxu0 %v3070
    %4008 = vmatprep.subr.bf16.mxu0 0
    %4009 = vmatpush1.bf16.msra.mxu0 %v3067
    %4010 = vmatprep.subr.bf16.mxu0 0
    %4011 = vmatpush1.bf16.msra.mxu0 %v3064
    %4012 = vmatprep.subr.bf16.mxu0 0
    %4013 = vmatpush2.bf16.msra.mxu0 %v3109
    %4014 = vmatprep.subr.bf16.mxu0 0
    %4015 = vmatpush2.bf16.msra.mxu0 %v3106
    %4016 = vmatprep.subr.bf16.mxu0 0
    %4017 = vmatpush2.bf16.msra.mxu0 %v3103
    %4018 = vmatprep.subr.bf16.mxu0 0
    %4019 = vmatpush2.bf16.msra.mxu0 %v3100
    %4020 = vmatprep.subr.bf16.mxu0 0
    %4021 = vmatpush2.bf16.msra.mxu0 %v3097
    %4022 = vmatprep.subr.bf16.mxu0 0
    %4023 = vmatpush2.bf16.msra.mxu0 %v3094
    %4024 = vmatprep.subr.bf16.mxu0 0
    %4025 = vmatpush2.bf16.msra.mxu0 %v3091
    %4026 = vmatprep.subr.bf16.mxu0 0
    %4027 = vmatpush2.bf16.msra.mxu0 %v3088
    %4028 = vmatprep.mubr.bf16.mxu0 %v3739
    %4029 = vmatmul.mubr.bf16.gmra.mxu0 %v3738
    %v4030 = vpop.f32.mrf.mxu0
    %v4031 = vadd.f32 %v3991, %v4030
    %v4032 = vpop.f32.mrf.mxu0
    %v4033 = vpop.f32.mrf.mxu0
    %v4034 = vpop.f32.mrf.mxu0
    %4035 = vdwg.mxu0
    %4036 = vmatprep.subr.bf16.mxu0 0
    %4037 = vmatpush1.bf16.msra.mxu0 %v3133
    %4038 = vmatprep.subr.bf16.mxu0 0
    %4039 = vmatpush1.bf16.msra.mxu0 %v3130
    %4040 = vmatprep.subr.bf16.mxu0 0
    %4041 = vmatpush1.bf16.msra.mxu0 %v3127
    %4042 = vmatprep.subr.bf16.mxu0 0
    %4043 = vmatpush1.bf16.msra.mxu0 %v3124
    %4044 = vmatprep.subr.bf16.mxu0 0
    %4045 = vmatpush1.bf16.msra.mxu0 %v3121
    %4046 = vmatprep.subr.bf16.mxu0 0
    %4047 = vmatpush1.bf16.msra.mxu0 %v3118
    %4048 = vmatprep.subr.bf16.mxu0 0
    %4049 = vmatpush1.bf16.msra.mxu0 %v3115
    %4050 = vmatprep.subr.bf16.mxu0 0
    %4051 = vmatpush1.bf16.msra.mxu0 %v3112
    %4052 = vmatprep.subr.bf16.mxu0 0
    %4053 = vmatpush2.bf16.msra.mxu0 0
    %4054 = vmatprep.subr.bf16.mxu0 0
    %4055 = vmatpush2.bf16.msra.mxu0 %v3154
    %4056 = vmatprep.subr.bf16.mxu0 0
    %4057 = vmatpush2.bf16.msra.mxu0 %v3151
    %4058 = vmatprep.subr.bf16.mxu0 0
    %4059 = vmatpush2.bf16.msra.mxu0 %v3148
    %4060 = vmatprep.subr.bf16.mxu0 0
    %4061 = vmatpush2.bf16.msra.mxu0 %v3145
    %4062 = vmatprep.subr.bf16.mxu0 0
    %4063 = vmatpush2.bf16.msra.mxu0 %v3142
    %4064 = vmatprep.subr.bf16.mxu0 0
    %4065 = vmatpush2.bf16.msra.mxu0 %v3139
    %4066 = vmatprep.subr.bf16.mxu0 0
    %4067 = vmatpush2.bf16.msra.mxu0 %v3136
    %4068 = vmatprep.mubr.bf16.mxu0 %v3750
    %4069 = vmatmul.mubr.bf16.gmra.mxu0 %v3740
    %v4070 = vpop.f32.mrf.mxu0
    %v4071 = vadd.f32 %v4031, %v4070
    %v4072 = vpop.f32.mrf.mxu0
    %v4073 = vpop.f32.mrf.mxu0
    %v4074 = vpop.f32.mrf.mxu0
    %4075 = vdwg.mxu0
    %v4076 = vmax.f32 %v3910, 0.0
    %v4077 = vmax.f32 %v3912, 0.0
    %v4078 = vmax.f32 %v4071, 0.0
    %4081 = vrot.lane.b32.xlu0 %v4077, 96
    %v4082 = vpop.permute.xlu0 %4081
    %4083 = vrot.lane.b32.xlu0 %v4078, 96
    %v4084 = vpop.permute.xlu0 %4083
    %v4085 = vsel %vm2041, %v4082, %v4084
    %v4088 = vadd.f32 %v4076, %v4085
    %v4089 = vadd.f32 %v4077, %v4084
    %v4090 = vmul.f32 %v4088, 0.5
    %v4091 = vmul.f32 %v4089, 0.5
    %4094 = vrot.lane.b32.xlu0 %v4090, 32
    %v4095 = vpop.permute.xlu0 %4094
    %4096 = vrot.lane.b32.xlu0 %v4091, 32
    %v4097 = vpop.permute.xlu0 %4096
    %v4098 = vsel %vm1018, %v4095, %v4097
    %4101 = vst.msk [vmem:[#allocation3 + $0x8] sm:$0xff] %vm1142, %v4095
    %4102 = vst.msk [vmem:[#allocation3 + $0x10] sm:$0xff] %vm1530, %v4098
    %v4103 = vld [vmem:[#allocation2 + $0x28] sm:$0xff]
    %v4104 = vld [vmem:[#allocation2 + $0x30] sm:$0xff]
    %v4105 = vld [vmem:[#allocation2 + $0x38] sm:$0xff]
    %v4106 = vld [vmem:[#allocation2 + $0x40] sm:$0xff]
    %v4107 = vld [vmem:[#allocation2 + $0x48] sm:$0xff]
    %v4108 = vld [vmem:[#allocation2 + $0x50] sm:$0xff]
    %v4109 = vld [vmem:[#allocation2 + $0x58] sm:$0xff]
    %v4110 = vld [vmem:[#allocation2 + $0x60] sm:$0xff]
    %v4111 = vld [vmem:[#allocation2 + $0x68] sm:$0xff]
    %v4112 = vpack.c.bf16 %v4103, %v4103
    %v4113 = vpack.c.bf16 %v4104, %v4104
    %v4114 = vpack.c.bf16 %v4105, %v4105
    %v4115 = vpack.c.bf16 %v4106, %v4106
    %v4116 = vpack.c.bf16 %v4107, %v4107
    %v4117 = vpack.c.bf16 %v4108, %v4108
    %v4118 = vpack.c.bf16 %v4109, %v4109
    %v4119 = vpack.c.bf16 %v4110, %v4110
    %v4120 = vpack.c.bf16 %v4111, %v4111
    %4130 = vrot.lane.b32.xlu0 %v4112, 96
    %v4131 = vpop.permute.xlu0 %4130
    %4132 = vrot.lane.b32.xlu0 %v4113, 96
    %v4133 = vpop.permute.xlu0 %4132
    %4134 = vrot.lane.b32.xlu0 %v4114, 96
    %v4135 = vpop.permute.xlu0 %4134
    %4136 = vrot.lane.b32.xlu0 %v4115, 96
    %v4137 = vpop.permute.xlu0 %4136
    %4138 = vrot.lane.b32.xlu0 %v4116, 96
    %v4139 = vpop.permute.xlu0 %4138
    %4140 = vrot.lane.b32.xlu0 %v4117, 96
    %v4141 = vpop.permute.xlu0 %4140
    %4142 = vrot.lane.b32.xlu0 %v4118, 96
    %v4143 = vpop.permute.xlu0 %4142
    %4144 = vrot.lane.b32.xlu0 %v4119, 96
    %v4145 = vpop.permute.xlu0 %4144
    %4146 = vrot.lane.b32.xlu0 %v4120, 96
    %v4147 = vpop.permute.xlu0 %4146
    %v4148 = vsel %vm2187, %v4131, %v4133
    %v4149 = vsel %vm2187, %v4133, %v4135
    %v4150 = vsel %vm2187, %v4135, %v4137
    %v4151 = vsel %vm2187, %v4137, %v4139
    %v4152 = vsel %vm2187, %v4139, %v4141
    %v4153 = vsel %vm2187, %v4141, %v4143
    %v4154 = vsel %vm2187, %v4143, %v4145
    %v4155 = vsel %vm2187, %v4145, %v4147
    %v4164 = vsel %vm1276, %v4155, 0
    %4166 = vmatprep.subr.bf16.mxu0 %v2988
    %4167 = vmatpush1.bf16.msra.mxu0 %v2987
    %4168 = vmatprep.subr.bf16.mxu0 %v2985
    %4169 = vmatpush1.bf16.msra.mxu0 %v2984
    %4170 = vmatprep.subr.bf16.mxu0 %v2982
    %4171 = vmatpush1.bf16.msra.mxu0 %v2981
    %4172 = vmatprep.subr.bf16.mxu0 %v2979
    %4173 = vmatpush1.bf16.msra.mxu0 %v2978
    %4174 = vmatprep.subr.bf16.mxu0 %v2976
    %4175 = vmatpush1.bf16.msra.mxu0 %v2975
    %4176 = vmatprep.subr.bf16.mxu0 %v2973
    %4177 = vmatpush1.bf16.msra.mxu0 %v2972
    %4178 = vmatprep.subr.bf16.mxu0 %v2970
    %4179 = vmatpush1.bf16.msra.mxu0 %v2969
    %4180 = vmatprep.subr.bf16.mxu0 %v2967
    %4181 = vmatpush1.bf16.msra.mxu0 %v2966
    %4182 = vmatprep.subr.bf16.mxu0 %v3012
    %4183 = vmatpush2.bf16.msra.mxu0 %v3011
    %4184 = vmatprep.subr.bf16.mxu0 %v3009
    %4185 = vmatpush2.bf16.msra.mxu0 %v3008
    %4186 = vmatprep.subr.bf16.mxu0 %v3006
    %4187 = vmatpush2.bf16.msra.mxu0 %v3005
    %4188 = vmatprep.subr.bf16.mxu0 %v3003
    %4189 = vmatpush2.bf16.msra.mxu0 %v3002
    %4190 = vmatprep.subr.bf16.mxu0 %v3000
    %4191 = vmatpush2.bf16.msra.mxu0 %v2999
    %4192 = vmatprep.subr.bf16.mxu0 %v2997
    %4193 = vmatpush2.bf16.msra.mxu0 %v2996
    %4194 = vmatprep.subr.bf16.mxu0 %v2994
    %4195 = vmatpush2.bf16.msra.mxu0 %v2993
    %4196 = vmatprep.subr.bf16.mxu0 %v2991
    %4197 = vmatpush2.bf16.msra.mxu0 %v2990
    %4198 = vmatprep.mubr.bf16.mxu0 %v4149
    %4199 = vmatmul.mubr.bf16.gmra.mxu0 %v4148
    %v4200 = vpop.f32.mrf.mxu0
    %v4201 = vadd.f32 %v2324, %v4200
    %v4202 = vpop.f32.mrf.mxu0
    %v4203 = vadd.f32 %v2328, %v4202
    %v4204 = vpop.f32.mrf.mxu0
    %v4205 = vpop.f32.mrf.mxu0
    %4206 = vdwg.mxu0
    %4207 = vmatprep.subr.bf16.mxu0 %v3036
    %4208 = vmatpush1.bf16.msra.mxu0 %v3035
    %4209 = vmatprep.subr.bf16.mxu0 %v3033
    %4210 = vmatpush1.bf16.msra.mxu0 %v3032
    %4211 = vmatprep.subr.bf16.mxu0 %v3030
    %4212 = vmatpush1.bf16.msra.mxu0 %v3029
    %4213 = vmatprep.subr.bf16.mxu0 %v3027
    %4214 = vmatpush1.bf16.msra.mxu0 %v3026
    %4215 = vmatprep.subr.bf16.mxu0 %v3024
    %4216 = vmatpush1.bf16.msra.mxu0 %v3023
    %4217 = vmatprep.subr.bf16.mxu0 %v3021
    %4218 = vmatpush1.bf16.msra.mxu0 %v3020
    %4219 = vmatprep.subr.bf16.mxu0 %v3018
    %4220 = vmatpush1.bf16.msra.mxu0 %v3017
    %4221 = vmatprep.subr.bf16.mxu0 %v3015
    %4222 = vmatpush1.bf16.msra.mxu0 %v3014
    %4223 = vmatprep.subr.bf16.mxu0 %v3060
    %4224 = vmatpush2.bf16.msra.mxu0 %v3059
    %4225 = vmatprep.subr.bf16.mxu0 %v3057
    %4226 = vmatpush2.bf16.msra.mxu0 %v3056
    %4227 = vmatprep.subr.bf16.mxu0 %v3054
    %4228 = vmatpush2.bf16.msra.mxu0 %v3053
    %4229 = vmatprep.subr.bf16.mxu0 %v3051
    %4230 = vmatpush2.bf16.msra.mxu0 %v3050
    %4231 = vmatprep.subr.bf16.mxu0 %v3048
    %4232 = vmatpush2.bf16.msra.mxu0 %v3047
    %4233 = vmatprep.subr.bf16.mxu0 %v3045
    %4234 = vmatpush2.bf16.msra.mxu0 %v3044
    %4235 = vmatprep.subr.bf16.mxu0 %v3042
    %4236 = vmatpush2.bf16.msra.mxu0 %v3041
    %4237 = vmatprep.subr.bf16.mxu0 %v3039
    %4238 = vmatpush2.bf16.msra.mxu0 %v3038
    %4239 = vmatprep.mubr.bf16.mxu0 %v4151
    %4240 = vmatmul.mubr.bf16.gmra.mxu0 %v4150
    %v4241 = vpop.f32.mrf.mxu0
    %v4242 = vadd.f32 %v4201, %v4241
    %v4243 = vpop.f32.mrf.mxu0
    %v4244 = vadd.f32 %v4203, %v4243
    %v4245 = vpop.f32.mrf.mxu0
    %v4246 = vpop.f32.mrf.mxu0
    %4247 = vdwg.mxu0
    %4248 = vmatprep.subr.bf16.mxu0 %v3084
    %4249 = vmatpush1.bf16.msra.mxu0 %v3083
    %4250 = vmatprep.subr.bf16.mxu0 %v3081
    %4251 = vmatpush1.bf16.msra.mxu0 %v3080
    %4252 = vmatprep.subr.bf16.mxu0 %v3078
    %4253 = vmatpush1.bf16.msra.mxu0 %v3077
    %4254 = vmatprep.subr.bf16.mxu0 %v3075
    %4255 = vmatpush1.bf16.msra.mxu0 %v3074
    %4256 = vmatprep.subr.bf16.mxu0 %v3072
    %4257 = vmatpush1.bf16.msra.mxu0 %v3071
    %4258 = vmatprep.subr.bf16.mxu0 %v3069
    %4259 = vmatpush1.bf16.msra.mxu0 %v3068
    %4260 = vmatprep.subr.bf16.mxu0 %v3066
    %4261 = vmatpush1.bf16.msra.mxu0 %v3065
    %4262 = vmatprep.subr.bf16.mxu0 %v3063
    %4263 = vmatpush1.bf16.msra.mxu0 %v3062
    %4264 = vmatprep.subr.bf16.mxu0 %v3108
    %4265 = vmatpush2.bf16.msra.mxu0 %v3107
    %4266 = vmatprep.subr.bf16.mxu0 %v3105
    %4267 = vmatpush2.bf16.msra.mxu0 %v3104
    %4268 = vmatprep.subr.bf16.mxu0 %v3102
    %4269 = vmatpush2.bf16.msra.mxu0 %v3101
    %4270 = vmatprep.subr.bf16.mxu0 %v3099
    %4271 = vmatpush2.bf16.msra.mxu0 %v3098
    %4272 = vmatprep.subr.bf16.mxu0 %v3096
    %4273 = vmatpush2.bf16.msra.mxu0 %v3095
    %4274 = vmatprep.subr.bf16.mxu0 %v3093
    %4275 = vmatpush2.bf16.msra.mxu0 %v3092
    %4276 = vmatprep.subr.bf16.mxu0 %v3090
    %4277 = vmatpush2.bf16.msra.mxu0 %v3089
    %4278 = vmatprep.subr.bf16.mxu0 %v3087
    %4279 = vmatpush2.bf16.msra.mxu0 %v3086
    %4280 = vmatprep.mubr.bf16.mxu0 %v4153
    %4281 = vmatmul.mubr.bf16.gmra.mxu0 %v4152
    %v4282 = vpop.f32.mrf.mxu0
    %v4283 = vadd.f32 %v4242, %v4282
    %v4284 = vpop.f32.mrf.mxu0
    %v4285 = vadd.f32 %v4244, %v4284
    %v4286 = vpop.f32.mrf.mxu0
    %v4287 = vpop.f32.mrf.mxu0
    %4288 = vdwg.mxu0
    %4289 = vmatprep.subr.bf16.mxu0 %v3132
    %4290 = vmatpush1.bf16.msra.mxu0 %v3131
    %4291 = vmatprep.subr.bf16.mxu0 %v3129
    %4292 = vmatpush1.bf16.msra.mxu0 %v3128
    %4293 = vmatprep.subr.bf16.mxu0 %v3126
    %4294 = vmatpush1.bf16.msra.mxu0 %v3125
    %4295 = vmatprep.subr.bf16.mxu0 %v3123
    %4296 = vmatpush1.bf16.msra.mxu0 %v3122
    %4297 = vmatprep.subr.bf16.mxu0 %v3120
    %4298 = vmatpush1.bf16.msra.mxu0 %v3119
    %4299 = vmatprep.subr.bf16.mxu0 %v3117
    %4300 = vmatpush1.bf16.msra.mxu0 %v3116
    %4301 = vmatprep.subr.bf16.mxu0 %v3114
    %4302 = vmatpush1.bf16.msra.mxu0 %v3113
    %4303 = vmatprep.subr.bf16.mxu0 %v3111
    %4304 = vmatpush1.bf16.msra.mxu0 %v3110
    %4305 = vmatprep.subr.bf16.mxu0 0
    %4306 = vmatpush2.bf16.msra.mxu0 0
    %4307 = vmatprep.subr.bf16.mxu0 %v3153
    %4308 = vmatpush2.bf16.msra.mxu0 %v3152
    %4309 = vmatprep.subr.bf16.mxu0 %v3150
    %4310 = vmatpush2.bf16.msra.mxu0 %v3149
    %4311 = vmatprep.subr.bf16.mxu0 %v3147
    %4312 = vmatpush2.bf16.msra.mxu0 %v3146
    %4313 = vmatprep.subr.bf16.mxu0 %v3144
    %4314 = vmatpush2.bf16.msra.mxu0 %v3143
    %4315 = vmatprep.subr.bf16.mxu0 %v3141
    %4316 = vmatpush2.bf16.msra.mxu0 %v3140
    %4317 = vmatprep.subr.bf16.mxu0 %v3138
    %4318 = vmatpush2.bf16.msra.mxu0 %v3137
    %4319 = vmatprep.subr.bf16.mxu0 %v3135
    %4320 = vmatpush2.bf16.msra.mxu0 %v3134
    %4321 = vmatprep.mubr.bf16.mxu0 %v4164
    %4322 = vmatmul.mubr.bf16.gmra.mxu0 %v4154
    %v4323 = vpop.f32.mrf.mxu0
    %v4324 = vadd.f32 %v4283, %v4323
    %v4325 = vpop.f32.mrf.mxu0
    %v4326 = vadd.f32 %v4285, %v4325
    %v4327 = vpop.f32.mrf.mxu0
    %v4328 = vpop.f32.mrf.mxu0
    %4329 = vdwg.mxu0
    %4330 = vmatprep.subr.bf16.mxu0 0
    %4331 = vmatpush1.bf16.msra.mxu0 %v2989
    %4332 = vmatprep.subr.bf16.mxu0 0
    %4333 = vmatpush1.bf16.msra.mxu0 %v2986
    %4334 = vmatprep.subr.bf16.mxu0 0
    %4335 = vmatpush1.bf16.msra.mxu0 %v2983
    %4336 = vmatprep.subr.bf16.mxu0 0
    %4337 = vmatpush1.bf16.msra.mxu0 %v2980
    %4338 = vmatprep.subr.bf16.mxu0 0
    %4339 = vmatpush1.bf16.msra.mxu0 %v2977
    %4340 = vmatprep.subr.bf16.mxu0 0
    %4341 = vmatpush1.bf16.msra.mxu0 %v2974
    %4342 = vmatprep.subr.bf16.mxu0 0
    %4343 = vmatpush1.bf16.msra.mxu0 %v2971
    %4344 = vmatprep.subr.bf16.mxu0 0
    %4345 = vmatpush1.bf16.msra.mxu0 %v2968
    %4346 = vmatprep.subr.bf16.mxu0 0
    %4347 = vmatpush2.bf16.msra.mxu0 %v3013
    %4348 = vmatprep.subr.bf16.mxu0 0
    %4349 = vmatpush2.bf16.msra.mxu0 %v3010
    %4350 = vmatprep.subr.bf16.mxu0 0
    %4351 = vmatpush2.bf16.msra.mxu0 %v3007
    %4352 = vmatprep.subr.bf16.mxu0 0
    %4353 = vmatpush2.bf16.msra.mxu0 %v3004
    %4354 = vmatprep.subr.bf16.mxu0 0
    %4355 = vmatpush2.bf16.msra.mxu0 %v3001
    %4356 = vmatprep.subr.bf16.mxu0 0
    %4357 = vmatpush2.bf16.msra.mxu0 %v2998
    %4358 = vmatprep.subr.bf16.mxu0 0
    %4359 = vmatpush2.bf16.msra.mxu0 %v2995
    %4360 = vmatprep.subr.bf16.mxu0 0
    %4361 = vmatpush2.bf16.msra.mxu0 %v2992
    %4362 = vmatprep.mubr.bf16.mxu0 %v4149
    %4363 = vmatmul.mubr.bf16.gmra.mxu0 %v4148
    %v4364 = vpop.f32.mrf.mxu0
    %v4365 = vadd.f32 %v2332, %v4364
    %v4366 = vpop.f32.mrf.mxu0
    %v4367 = vpop.f32.mrf.mxu0
    %v4368 = vpop.f32.mrf.mxu0
    %4369 = vdwg.mxu0
    %4370 = vmatprep.subr.bf16.mxu0 0
    %4371 = vmatpush1.bf16.msra.mxu0 %v3037
    %4372 = vmatprep.subr.bf16.mxu0 0
    %4373 = vmatpush1.bf16.msra.mxu0 %v3034
    %4374 = vmatprep.subr.bf16.mxu0 0
    %4375 = vmatpush1.bf16.msra.mxu0 %v3031
    %4376 = vmatprep.subr.bf16.mxu0 0
    %4377 = vmatpush1.bf16.msra.mxu0 %v3028
    %4378 = vmatprep.subr.bf16.mxu0 0
    %4379 = vmatpush1.bf16.msra.mxu0 %v3025
    %4380 = vmatprep.subr.bf16.mxu0 0
    %4381 = vmatpush1.bf16.msra.mxu0 %v3022
    %4382 = vmatprep.subr.bf16.mxu0 0
    %4383 = vmatpush1.bf16.msra.mxu0 %v3019
    %4384 = vmatprep.subr.bf16.mxu0 0
    %4385 = vmatpush1.bf16.msra.mxu0 %v3016
    %4386 = vmatprep.subr.bf16.mxu0 0
    %4387 = vmatpush2.bf16.msra.mxu0 %v3061
    %4388 = vmatprep.subr.bf16.mxu0 0
    %4389 = vmatpush2.bf16.msra.mxu0 %v3058
    %4390 = vmatprep.subr.bf16.mxu0 0
    %4391 = vmatpush2.bf16.msra.mxu0 %v3055
    %4392 = vmatprep.subr.bf16.mxu0 0
    %4393 = vmatpush2.bf16.msra.mxu0 %v3052
    %4394 = vmatprep.subr.bf16.mxu0 0
    %4395 = vmatpush2.bf16.msra.mxu0 %v3049
    %4396 = vmatprep.subr.bf16.mxu0 0
    %4397 = vmatpush2.bf16.msra.mxu0 %v3046
    %4398 = vmatprep.subr.bf16.mxu0 0
    %4399 = vmatpush2.bf16.msra.mxu0 %v3043
    %4400 = vmatprep.subr.bf16.mxu0 0
    %4401 = vmatpush2.bf16.msra.mxu0 %v3040
    %4402 = vmatprep.mubr.bf16.mxu0 %v4151
    %4403 = vmatmul.mubr.bf16.gmra.mxu0 %v4150
    %v4404 = vpop.f32.mrf.mxu0
    %v4405 = vadd.f32 %v4365, %v4404
    %v4406 = vpop.f32.mrf.mxu0
    %v4407 = vpop.f32.mrf.mxu0
    %v4408 = vpop.f32.mrf.mxu0
    %4409 = vdwg.mxu0
    %4410 = vmatprep.subr.bf16.mxu0 0
    %4411 = vmatpush1.bf16.msra.mxu0 %v3085
    %4412 = vmatprep.subr.bf16.mxu0 0
    %4413 = vmatpush1.bf16.msra.mxu0 %v3082
    %4414 = vmatprep.subr.bf16.mxu0 0
    %4415 = vmatpush1.bf16.msra.mxu0 %v3079
    %4416 = vmatprep.subr.bf16.mxu0 0
    %4417 = vmatpush1.bf16.msra.mxu0 %v3076
    %4418 = vmatprep.subr.bf16.mxu0 0
    %4419 = vmatpush1.bf16.msra.mxu0 %v3073
    %4420 = vmatprep.subr.bf16.mxu0 0
    %4421 = vmatpush1.bf16.msra.mxu0 %v3070
    %4422 = vmatprep.subr.bf16.mxu0 0
    %4423 = vmatpush1.bf16.msra.mxu0 %v3067
    %4424 = vmatprep.subr.bf16.mxu0 0
    %4425 = vmatpush1.bf16.msra.mxu0 %v3064
    %4426 = vmatprep.subr.bf16.mxu0 0
    %4427 = vmatpush2.bf16.msra.mxu0 %v3109
    %4428 = vmatprep.subr.bf16.mxu0 0
    %4429 = vmatpush2.bf16.msra.mxu0 %v3106
    %4430 = vmatprep.subr.bf16.mxu0 0
    %4431 = vmatpush2.bf16.msra.mxu0 %v3103
    %4432 = vmatprep.subr.bf16.mxu0 0
    %4433 = vmatpush2.bf16.msra.mxu0 %v3100
    %4434 = vmatprep.subr.bf16.mxu0 0
    %4435 = vmatpush2.bf16.msra.mxu0 %v3097
    %4436 = vmatprep.subr.bf16.mxu0 0
    %4437 = vmatpush2.bf16.msra.mxu0 %v3094
    %4438 = vmatprep.subr.bf16.mxu0 0
    %4439 = vmatpush2.bf16.msra.mxu0 %v3091
    %4440 = vmatprep.subr.bf16.mxu0 0
    %4441 = vmatpush2.bf16.msra.mxu0 %v3088
    %4442 = vmatprep.mubr.bf16.mxu0 %v4153
    %4443 = vmatmul.mubr.bf16.gmra.mxu0 %v4152
    %v4444 = vpop.f32.mrf.mxu0
    %v4445 = vadd.f32 %v4405, %v4444
    %v4446 = vpop.f32.mrf.mxu0
    %v4447 = vpop.f32.mrf.mxu0
    %v4448 = vpop.f32.mrf.mxu0
    %4449 = vdwg.mxu0
    %4450 = vmatprep.subr.bf16.mxu0 0
    %4451 = vmatpush1.bf16.msra.mxu0 %v3133
    %4452 = vmatprep.subr.bf16.mxu0 0
    %4453 = vmatpush1.bf16.msra.mxu0 %v3130
    %4454 = vmatprep.subr.bf16.mxu0 0
    %4455 = vmatpush1.bf16.msra.mxu0 %v3127
    %4456 = vmatprep.subr.bf16.mxu0 0
    %4457 = vmatpush1.bf16.msra.mxu0 %v3124
    %4458 = vmatprep.subr.bf16.mxu0 0
    %4459 = vmatpush1.bf16.msra.mxu0 %v3121
    %4460 = vmatprep.subr.bf16.mxu0 0
    %4461 = vmatpush1.bf16.msra.mxu0 %v3118
    %4462 = vmatprep.subr.bf16.mxu0 0
    %4463 = vmatpush1.bf16.msra.mxu0 %v3115
    %4464 = vmatprep.subr.bf16.mxu0 0
    %4465 = vmatpush1.bf16.msra.mxu0 %v3112
    %4466 = vmatprep.subr.bf16.mxu0 0
    %4467 = vmatpush2.bf16.msra.mxu0 0
    %4468 = vmatprep.subr.bf16.mxu0 0
    %4469 = vmatpush2.bf16.msra.mxu0 %v3154
    %4470 = vmatprep.subr.bf16.mxu0 0
    %4471 = vmatpush2.bf16.msra.mxu0 %v3151
    %4472 = vmatprep.subr.bf16.mxu0 0
    %4473 = vmatpush2.bf16.msra.mxu0 %v3148
    %4474 = vmatprep.subr.bf16.mxu0 0
    %4475 = vmatpush2.bf16.msra.mxu0 %v3145
    %4476 = vmatprep.subr.bf16.mxu0 0
    %4477 = vmatpush2.bf16.msra.mxu0 %v3142
    %4478 = vmatprep.subr.bf16.mxu0 0
    %4479 = vmatpush2.bf16.msra.mxu0 %v3139
    %4480 = vmatprep.subr.bf16.mxu0 0
    %4481 = vmatpush2.bf16.msra.mxu0 %v3136
    %4482 = vmatprep.mubr.bf16.mxu0 %v4164
    %4483 = vmatmul.mubr.bf16.gmra.mxu0 %v4154
    %v4484 = vpop.f32.mrf.mxu0
    %v4485 = vadd.f32 %v4445, %v4484
    %v4486 = vpop.f32.mrf.mxu0
    %v4487 = vpop.f32.mrf.mxu0
    %v4488 = vpop.f32.mrf.mxu0
    %4489 = vdwg.mxu0
    %v4490 = vmax.f32 %v4324, 0.0
    %v4491 = vmax.f32 %v4326, 0.0
    %v4492 = vmax.f32 %v4485, 0.0
    %4495 = vrot.lane.b32.xlu0 %v4491, 96
    %v4496 = vpop.permute.xlu0 %4495
    %4497 = vrot.lane.b32.xlu0 %v4492, 96
    %v4498 = vpop.permute.xlu0 %4497
    %v4499 = vsel %vm2041, %v4496, %v4498
    %v4502 = vadd.f32 %v4490, %v4499
    %v4503 = vadd.f32 %v4491, %v4498
    %v4504 = vmul.f32 %v4502, 0.5
    %v4505 = vmul.f32 %v4503, 0.5
    %4508 = vrot.lane.b32.xlu0 %v4504, 64
    %v4509 = vpop.permute.xlu0 %4508
    %4510 = vrot.lane.b32.xlu0 %v4505, 64
    %v4511 = vpop.permute.xlu0 %4510
    %v4512 = vsel %vm1530, %v4509, %v4511
    %4515 = vst.msk [vmem:[#allocation3 + $0x10] sm:$0xff] %vm1654, %v4509
    %4516 = vst.msk [vmem:[#allocation3 + $0x18] sm:$0xff] %vm2041, %v4512
    %v4517 = vld [vmem:[#allocation2 + $0x38] sm:$0xff]
    %v4518 = vld [vmem:[#allocation2 + $0x40] sm:$0xff]
    %v4519 = vld [vmem:[#allocation2 + $0x48] sm:$0xff]
    %v4520 = vld [vmem:[#allocation2 + $0x50] sm:$0xff]
    %v4521 = vld [vmem:[#allocation2 + $0x58] sm:$0xff]
    %v4522 = vld [vmem:[#allocation2 + $0x60] sm:$0xff]
    %v4523 = vld [vmem:[#allocation2 + $0x68] sm:$0xff]
    %v4524 = vld [vmem:[#allocation2 + $0x70] sm:$0xff]
    %v4525 = vld [vmem:[#allocation2 + $0x78] sm:$0xff]
    %v4526 = vpack.c.bf16 %v4517, %v4517
    %v4527 = vpack.c.bf16 %v4518, %v4518
    %v4528 = vpack.c.bf16 %v4519, %v4519
    %v4529 = vpack.c.bf16 %v4520, %v4520
    %v4530 = vpack.c.bf16 %v4521, %v4521
    %v4531 = vpack.c.bf16 %v4522, %v4522
    %v4532 = vpack.c.bf16 %v4523, %v4523
    %v4533 = vpack.c.bf16 %v4524, %v4524
    %v4534 = vpack.c.bf16 %v4525, %v4525
    %4544 = vrot.lane.b32.xlu0 %v4526, 16
    %v4545 = vpop.permute.xlu0 %4544
    %4546 = vrot.lane.b32.xlu0 %v4527, 16
    %v4547 = vpop.permute.xlu0 %4546
    %4548 = vrot.lane.b32.xlu0 %v4528, 16
    %v4549 = vpop.permute.xlu0 %4548
    %4550 = vrot.lane.b32.xlu0 %v4529, 16
    %v4551 = vpop.permute.xlu0 %4550
    %4552 = vrot.lane.b32.xlu0 %v4530, 16
    %v4553 = vpop.permute.xlu0 %4552
    %4554 = vrot.lane.b32.xlu0 %v4531, 16
    %v4555 = vpop.permute.xlu0 %4554
    %4556 = vrot.lane.b32.xlu0 %v4532, 16
    %v4557 = vpop.permute.xlu0 %4556
    %4558 = vrot.lane.b32.xlu0 %v4533, 16
    %v4559 = vpop.permute.xlu0 %4558
    %4560 = vrot.lane.b32.xlu0 %v4534, 16
    %v4561 = vpop.permute.xlu0 %4560
    %v4562 = vsel %vm901, %v4545, %v4547
    %v4563 = vsel %vm901, %v4547, %v4549
    %v4564 = vsel %vm901, %v4549, %v4551
    %v4565 = vsel %vm901, %v4551, %v4553
    %v4566 = vsel %vm901, %v4553, %v4555
    %v4567 = vsel %vm901, %v4555, %v4557
    %v4568 = vsel %vm901, %v4557, %v4559
    %v4569 = vsel %vm901, %v4559, %v4561
    %v4578 = vsel %vm1276, %v4569, 0
    %4580 = vmatprep.subr.bf16.mxu0 %v2988
    %4581 = vmatpush1.bf16.msra.mxu0 %v2987
    %4582 = vmatprep.subr.bf16.mxu0 %v2985
    %4583 = vmatpush1.bf16.msra.mxu0 %v2984
    %4584 = vmatprep.subr.bf16.mxu0 %v2982
    %4585 = vmatpush1.bf16.msra.mxu0 %v2981
    %4586 = vmatprep.subr.bf16.mxu0 %v2979
    %4587 = vmatpush1.bf16.msra.mxu0 %v2978
    %4588 = vmatprep.subr.bf16.mxu0 %v2976
    %4589 = vmatpush1.bf16.msra.mxu0 %v2975
    %4590 = vmatprep.subr.bf16.mxu0 %v2973
    %4591 = vmatpush1.bf16.msra.mxu0 %v2972
    %4592 = vmatprep.subr.bf16.mxu0 %v2970
    %4593 = vmatpush1.bf16.msra.mxu0 %v2969
    %4594 = vmatprep.subr.bf16.mxu0 %v2967
    %4595 = vmatpush1.bf16.msra.mxu0 %v2966
    %4596 = vmatprep.subr.bf16.mxu0 %v3012
    %4597 = vmatpush2.bf16.msra.mxu0 %v3011
    %4598 = vmatprep.subr.bf16.mxu0 %v3009
    %4599 = vmatpush2.bf16.msra.mxu0 %v3008
    %4600 = vmatprep.subr.bf16.mxu0 %v3006
    %4601 = vmatpush2.bf16.msra.mxu0 %v3005
    %4602 = vmatprep.subr.bf16.mxu0 %v3003
    %4603 = vmatpush2.bf16.msra.mxu0 %v3002
    %4604 = vmatprep.subr.bf16.mxu0 %v3000
    %4605 = vmatpush2.bf16.msra.mxu0 %v2999
    %4606 = vmatprep.subr.bf16.mxu0 %v2997
    %4607 = vmatpush2.bf16.msra.mxu0 %v2996
    %4608 = vmatprep.subr.bf16.mxu0 %v2994
    %4609 = vmatpush2.bf16.msra.mxu0 %v2993
    %4610 = vmatprep.subr.bf16.mxu0 %v2991
    %4611 = vmatpush2.bf16.msra.mxu0 %v2990
    %4612 = vmatprep.mubr.bf16.mxu0 %v4563
    %4613 = vmatmul.mubr.bf16.gmra.mxu0 %v4562
    %v4614 = vpop.f32.mrf.mxu0
    %v4615 = vadd.f32 %v2324, %v4614
    %v4616 = vpop.f32.mrf.mxu0
    %v4617 = vadd.f32 %v2328, %v4616
    %v4618 = vpop.f32.mrf.mxu0
    %v4619 = vpop.f32.mrf.mxu0
    %4620 = vdwg.mxu0
    %4621 = vmatprep.subr.bf16.mxu0 %v3036
    %4622 = vmatpush1.bf16.msra.mxu0 %v3035
    %4623 = vmatprep.subr.bf16.mxu0 %v3033
    %4624 = vmatpush1.bf16.msra.mxu0 %v3032
    %4625 = vmatprep.subr.bf16.mxu0 %v3030
    %4626 = vmatpush1.bf16.msra.mxu0 %v3029
    %4627 = vmatprep.subr.bf16.mxu0 %v3027
    %4628 = vmatpush1.bf16.msra.mxu0 %v3026
    %4629 = vmatprep.subr.bf16.mxu0 %v3024
    %4630 = vmatpush1.bf16.msra.mxu0 %v3023
    %4631 = vmatprep.subr.bf16.mxu0 %v3021
    %4632 = vmatpush1.bf16.msra.mxu0 %v3020
    %4633 = vmatprep.subr.bf16.mxu0 %v3018
    %4634 = vmatpush1.bf16.msra.mxu0 %v3017
    %4635 = vmatprep.subr.bf16.mxu0 %v3015
    %4636 = vmatpush1.bf16.msra.mxu0 %v3014
    %4637 = vmatprep.subr.bf16.mxu0 %v3060
    %4638 = vmatpush2.bf16.msra.mxu0 %v3059
    %4639 = vmatprep.subr.bf16.mxu0 %v3057
    %4640 = vmatpush2.bf16.msra.mxu0 %v3056
    %4641 = vmatprep.subr.bf16.mxu0 %v3054
    %4642 = vmatpush2.bf16.msra.mxu0 %v3053
    %4643 = vmatprep.subr.bf16.mxu0 %v3051
    %4644 = vmatpush2.bf16.msra.mxu0 %v3050
    %4645 = vmatprep.subr.bf16.mxu0 %v3048
    %4646 = vmatpush2.bf16.msra.mxu0 %v3047
    %4647 = vmatprep.subr.bf16.mxu0 %v3045
    %4648 = vmatpush2.bf16.msra.mxu0 %v3044
    %4649 = vmatprep.subr.bf16.mxu0 %v3042
    %4650 = vmatpush2.bf16.msra.mxu0 %v3041
    %4651 = vmatprep.subr.bf16.mxu0 %v3039
    %4652 = vmatpush2.bf16.msra.mxu0 %v3038
    %4653 = vmatprep.mubr.bf16.mxu0 %v4565
    %4654 = vmatmul.mubr.bf16.gmra.mxu0 %v4564
    %v4655 = vpop.f32.mrf.mxu0
    %v4656 = vadd.f32 %v4615, %v4655
    %v4657 = vpop.f32.mrf.mxu0
    %v4658 = vadd.f32 %v4617, %v4657
    %v4659 = vpop.f32.mrf.mxu0
    %v4660 = vpop.f32.mrf.mxu0
    %4661 = vdwg.mxu0
    %4662 = vmatprep.subr.bf16.mxu0 %v3084
    %4663 = vmatpush1.bf16.msra.mxu0 %v3083
    %4664 = vmatprep.subr.bf16.mxu0 %v3081
    %4665 = vmatpush1.bf16.msra.mxu0 %v3080
    %4666 = vmatprep.subr.bf16.mxu0 %v3078
    %4667 = vmatpush1.bf16.msra.mxu0 %v3077
    %4668 = vmatprep.subr.bf16.mxu0 %v3075
    %4669 = vmatpush1.bf16.msra.mxu0 %v3074
    %4670 = vmatprep.subr.bf16.mxu0 %v3072
    %4671 = vmatpush1.bf16.msra.mxu0 %v3071
    %4672 = vmatprep.subr.bf16.mxu0 %v3069
    %4673 = vmatpush1.bf16.msra.mxu0 %v3068
    %4674 = vmatprep.subr.bf16.mxu0 %v3066
    %4675 = vmatpush1.bf16.msra.mxu0 %v3065
    %4676 = vmatprep.subr.bf16.mxu0 %v3063
    %4677 = vmatpush1.bf16.msra.mxu0 %v3062
    %4678 = vmatprep.subr.bf16.mxu0 %v3108
    %4679 = vmatpush2.bf16.msra.mxu0 %v3107
    %4680 = vmatprep.subr.bf16.mxu0 %v3105
    %4681 = vmatpush2.bf16.msra.mxu0 %v3104
    %4682 = vmatprep.subr.bf16.mxu0 %v3102
    %4683 = vmatpush2.bf16.msra.mxu0 %v3101
    %4684 = vmatprep.subr.bf16.mxu0 %v3099
    %4685 = vmatpush2.bf16.msra.mxu0 %v3098
    %4686 = vmatprep.subr.bf16.mxu0 %v3096
    %4687 = vmatpush2.bf16.msra.mxu0 %v3095
    %4688 = vmatprep.subr.bf16.mxu0 %v3093
    %4689 = vmatpush2.bf16.msra.mxu0 %v3092
    %4690 = vmatprep.subr.bf16.mxu0 %v3090
    %4691 = vmatpush2.bf16.msra.mxu0 %v3089
    %4692 = vmatprep.subr.bf16.mxu0 %v3087
    %4693 = vmatpush2.bf16.msra.mxu0 %v3086
    %4694 = vmatprep.mubr.bf16.mxu0 %v4567
    %4695 = vmatmul.mubr.bf16.gmra.mxu0 %v4566
    %v4696 = vpop.f32.mrf.mxu0
    %v4697 = vadd.f32 %v4656, %v4696
    %v4698 = vpop.f32.mrf.mxu0
    %v4699 = vadd.f32 %v4658, %v4698
    %v4700 = vpop.f32.mrf.mxu0
    %v4701 = vpop.f32.mrf.mxu0
    %4702 = vdwg.mxu0
    %4703 = vmatprep.subr.bf16.mxu0 %v3132
    %4704 = vmatpush1.bf16.msra.mxu0 %v3131
    %4705 = vmatprep.subr.bf16.mxu0 %v3129
    %4706 = vmatpush1.bf16.msra.mxu0 %v3128
    %4707 = vmatprep.subr.bf16.mxu0 %v3126
    %4708 = vmatpush1.bf16.msra.mxu0 %v3125
    %4709 = vmatprep.subr.bf16.mxu0 %v3123
    %4710 = vmatpush1.bf16.msra.mxu0 %v3122
    %4711 = vmatprep.subr.bf16.mxu0 %v3120
    %4712 = vmatpush1.bf16.msra.mxu0 %v3119
    %4713 = vmatprep.subr.bf16.mxu0 %v3117
    %4714 = vmatpush1.bf16.msra.mxu0 %v3116
    %4715 = vmatprep.subr.bf16.mxu0 %v3114
    %4716 = vmatpush1.bf16.msra.mxu0 %v3113
    %4717 = vmatprep.subr.bf16.mxu0 %v3111
    %4718 = vmatpush1.bf16.msra.mxu0 %v3110
    %4719 = vmatprep.subr.bf16.mxu0 0
    %4720 = vmatpush2.bf16.msra.mxu0 0
    %4721 = vmatprep.subr.bf16.mxu0 %v3153
    %4722 = vmatpush2.bf16.msra.mxu0 %v3152
    %4723 = vmatprep.subr.bf16.mxu0 %v3150
    %4724 = vmatpush2.bf16.msra.mxu0 %v3149
    %4725 = vmatprep.subr.bf16.mxu0 %v3147
    %4726 = vmatpush2.bf16.msra.mxu0 %v3146
    %4727 = vmatprep.subr.bf16.mxu0 %v3144
    %4728 = vmatpush2.bf16.msra.mxu0 %v3143
    %4729 = vmatprep.subr.bf16.mxu0 %v3141
    %4730 = vmatpush2.bf16.msra.mxu0 %v3140
    %4731 = vmatprep.subr.bf16.mxu0 %v3138
    %4732 = vmatpush2.bf16.msra.mxu0 %v3137
    %4733 = vmatprep.subr.bf16.mxu0 %v3135
    %4734 = vmatpush2.bf16.msra.mxu0 %v3134
    %4735 = vmatprep.mubr.bf16.mxu0 %v4578
    %4736 = vmatmul.mubr.bf16.gmra.mxu0 %v4568
    %v4737 = vpop.f32.mrf.mxu0
    %v4738 = vadd.f32 %v4697, %v4737
    %v4739 = vpop.f32.mrf.mxu0
    %v4740 = vadd.f32 %v4699, %v4739
    %v4741 = vpop.f32.mrf.mxu0
    %v4742 = vpop.f32.mrf.mxu0
    %4743 = vdwg.mxu0
    %4744 = vmatprep.subr.bf16.mxu0 0
    %4745 = vmatpush1.bf16.msra.mxu0 %v2989
    %4746 = vmatprep.subr.bf16.mxu0 0
    %4747 = vmatpush1.bf16.msra.mxu0 %v2986
    %4748 = vmatprep.subr.bf16.mxu0 0
    %4749 = vmatpush1.bf16.msra.mxu0 %v2983
    %4750 = vmatprep.subr.bf16.mxu0 0
    %4751 = vmatpush1.bf16.msra.mxu0 %v2980
    %4752 = vmatprep.subr.bf16.mxu0 0
    %4753 = vmatpush1.bf16.msra.mxu0 %v2977
    %4754 = vmatprep.subr.bf16.mxu0 0
    %4755 = vmatpush1.bf16.msra.mxu0 %v2974
    %4756 = vmatprep.subr.bf16.mxu0 0
    %4757 = vmatpush1.bf16.msra.mxu0 %v2971
    %4758 = vmatprep.subr.bf16.mxu0 0
    %4759 = vmatpush1.bf16.msra.mxu0 %v2968
    %4760 = vmatprep.subr.bf16.mxu0 0
    %4761 = vmatpush2.bf16.msra.mxu0 %v3013
    %4762 = vmatprep.subr.bf16.mxu0 0
    %4763 = vmatpush2.bf16.msra.mxu0 %v3010
    %4764 = vmatprep.subr.bf16.mxu0 0
    %4765 = vmatpush2.bf16.msra.mxu0 %v3007
    %4766 = vmatprep.subr.bf16.mxu0 0
    %4767 = vmatpush2.bf16.msra.mxu0 %v3004
    %4768 = vmatprep.subr.bf16.mxu0 0
    %4769 = vmatpush2.bf16.msra.mxu0 %v3001
    %4770 = vmatprep.subr.bf16.mxu0 0
    %4771 = vmatpush2.bf16.msra.mxu0 %v2998
    %4772 = vmatprep.subr.bf16.mxu0 0
    %4773 = vmatpush2.bf16.msra.mxu0 %v2995
    %4774 = vmatprep.subr.bf16.mxu0 0
    %4775 = vmatpush2.bf16.msra.mxu0 %v2992
    %4776 = vmatprep.mubr.bf16.mxu0 %v4563
    %4777 = vmatmul.mubr.bf16.gmra.mxu0 %v4562
    %v4778 = vpop.f32.mrf.mxu0
    %v4779 = vadd.f32 %v2332, %v4778
    %v4780 = vpop.f32.mrf.mxu0
    %v4781 = vpop.f32.mrf.mxu0
    %v4782 = vpop.f32.mrf.mxu0
    %4783 = vdwg.mxu0
    %4784 = vmatprep.subr.bf16.mxu0 0
    %4785 = vmatpush1.bf16.msra.mxu0 %v3037
    %4786 = vmatprep.subr.bf16.mxu0 0
    %4787 = vmatpush1.bf16.msra.mxu0 %v3034
    %4788 = vmatprep.subr.bf16.mxu0 0
    %4789 = vmatpush1.bf16.msra.mxu0 %v3031
    %4790 = vmatprep.subr.bf16.mxu0 0
    %4791 = vmatpush1.bf16.msra.mxu0 %v3028
    %4792 = vmatprep.subr.bf16.mxu0 0
    %4793 = vmatpush1.bf16.msra.mxu0 %v3025
    %4794 = vmatprep.subr.bf16.mxu0 0
    %4795 = vmatpush1.bf16.msra.mxu0 %v3022
    %4796 = vmatprep.subr.bf16.mxu0 0
    %4797 = vmatpush1.bf16.msra.mxu0 %v3019
    %4798 = vmatprep.subr.bf16.mxu0 0
    %4799 = vmatpush1.bf16.msra.mxu0 %v3016
    %4800 = vmatprep.subr.bf16.mxu0 0
    %4801 = vmatpush2.bf16.msra.mxu0 %v3061
    %4802 = vmatprep.subr.bf16.mxu0 0
    %4803 = vmatpush2.bf16.msra.mxu0 %v3058
    %4804 = vmatprep.subr.bf16.mxu0 0
    %4805 = vmatpush2.bf16.msra.mxu0 %v3055
    %4806 = vmatprep.subr.bf16.mxu0 0
    %4807 = vmatpush2.bf16.msra.mxu0 %v3052
    %4808 = vmatprep.subr.bf16.mxu0 0
    %4809 = vmatpush2.bf16.msra.mxu0 %v3049
    %4810 = vmatprep.subr.bf16.mxu0 0
    %4811 = vmatpush2.bf16.msra.mxu0 %v3046
    %4812 = vmatprep.subr.bf16.mxu0 0
    %4813 = vmatpush2.bf16.msra.mxu0 %v3043
    %4814 = vmatprep.subr.bf16.mxu0 0
    %4815 = vmatpush2.bf16.msra.mxu0 %v3040
    %4816 = vmatprep.mubr.bf16.mxu0 %v4565
    %4817 = vmatmul.mubr.bf16.gmra.mxu0 %v4564
    %v4818 = vpop.f32.mrf.mxu0
    %v4819 = vadd.f32 %v4779, %v4818
    %v4820 = vpop.f32.mrf.mxu0
    %v4821 = vpop.f32.mrf.mxu0
    %v4822 = vpop.f32.mrf.mxu0
    %4823 = vdwg.mxu0
    %4824 = vmatprep.subr.bf16.mxu0 0
    %4825 = vmatpush1.bf16.msra.mxu0 %v3085
    %4826 = vmatprep.subr.bf16.mxu0 0
    %4827 = vmatpush1.bf16.msra.mxu0 %v3082
    %4828 = vmatprep.subr.bf16.mxu0 0
    %4829 = vmatpush1.bf16.msra.mxu0 %v3079
    %4830 = vmatprep.subr.bf16.mxu0 0
    %4831 = vmatpush1.bf16.msra.mxu0 %v3076
    %4832 = vmatprep.subr.bf16.mxu0 0
    %4833 = vmatpush1.bf16.msra.mxu0 %v3073
    %4834 = vmatprep.subr.bf16.mxu0 0
    %4835 = vmatpush1.bf16.msra.mxu0 %v3070
    %4836 = vmatprep.subr.bf16.mxu0 0
    %4837 = vmatpush1.bf16.msra.mxu0 %v3067
    %4838 = vmatprep.subr.bf16.mxu0 0
    %4839 = vmatpush1.bf16.msra.mxu0 %v3064
    %4840 = vmatprep.subr.bf16.mxu0 0
    %4841 = vmatpush2.bf16.msra.mxu0 %v3109
    %4842 = vmatprep.subr.bf16.mxu0 0
    %4843 = vmatpush2.bf16.msra.mxu0 %v3106
    %4844 = vmatprep.subr.bf16.mxu0 0
    %4845 = vmatpush2.bf16.msra.mxu0 %v3103
    %4846 = vmatprep.subr.bf16.mxu0 0
    %4847 = vmatpush2.bf16.msra.mxu0 %v3100
    %4848 = vmatprep.subr.bf16.mxu0 0
    %4849 = vmatpush2.bf16.msra.mxu0 %v3097
    %4850 = vmatprep.subr.bf16.mxu0 0
    %4851 = vmatpush2.bf16.msra.mxu0 %v3094
    %4852 = vmatprep.subr.bf16.mxu0 0
    %4853 = vmatpush2.bf16.msra.mxu0 %v3091
    %4854 = vmatprep.subr.bf16.mxu0 0
    %4855 = vmatpush2.bf16.msra.mxu0 %v3088
    %4856 = vmatprep.mubr.bf16.mxu0 %v4567
    %4857 = vmatmul.mubr.bf16.gmra.mxu0 %v4566
    %v4858 = vpop.f32.mrf.mxu0
    %v4859 = vadd.f32 %v4819, %v4858
    %v4860 = vpop.f32.mrf.mxu0
    %v4861 = vpop.f32.mrf.mxu0
    %v4862 = vpop.f32.mrf.mxu0
    %4863 = vdwg.mxu0
    %4864 = vmatprep.subr.bf16.mxu0 0
    %4865 = vmatpush1.bf16.msra.mxu0 %v3133
    %4866 = vmatprep.subr.bf16.mxu0 0
    %4867 = vmatpush1.bf16.msra.mxu0 %v3130
    %4868 = vmatprep.subr.bf16.mxu0 0
    %4869 = vmatpush1.bf16.msra.mxu0 %v3127
    %4870 = vmatprep.subr.bf16.mxu0 0
    %4871 = vmatpush1.bf16.msra.mxu0 %v3124
    %4872 = vmatprep.subr.bf16.mxu0 0
    %4873 = vmatpush1.bf16.msra.mxu0 %v3121
    %4874 = vmatprep.subr.bf16.mxu0 0
    %4875 = vmatpush1.bf16.msra.mxu0 %v3118
    %4876 = vmatprep.subr.bf16.mxu0 0
    %4877 = vmatpush1.bf16.msra.mxu0 %v3115
    %4878 = vmatprep.subr.bf16.mxu0 0
    %4879 = vmatpush1.bf16.msra.mxu0 %v3112
    %4880 = vmatprep.subr.bf16.mxu0 0
    %4881 = vmatpush2.bf16.msra.mxu0 0
    %4882 = vmatprep.subr.bf16.mxu0 0
    %4883 = vmatpush2.bf16.msra.mxu0 %v3154
    %4884 = vmatprep.subr.bf16.mxu0 0
    %4885 = vmatpush2.bf16.msra.mxu0 %v3151
    %4886 = vmatprep.subr.bf16.mxu0 0
    %4887 = vmatpush2.bf16.msra.mxu0 %v3148
    %4888 = vmatprep.subr.bf16.mxu0 0
    %4889 = vmatpush2.bf16.msra.mxu0 %v3145
    %4890 = vmatprep.subr.bf16.mxu0 0
    %4891 = vmatpush2.bf16.msra.mxu0 %v3142
    %4892 = vmatprep.subr.bf16.mxu0 0
    %4893 = vmatpush2.bf16.msra.mxu0 %v3139
    %4894 = vmatprep.subr.bf16.mxu0 0
    %4895 = vmatpush2.bf16.msra.mxu0 %v3136
    %4896 = vmatprep.mubr.bf16.mxu0 %v4578
    %4897 = vmatmul.mubr.bf16.gmra.mxu0 %v4568
    %v4898 = vpop.f32.mrf.mxu0
    %v4899 = vadd.f32 %v4859, %v4898
    %v4900 = vpop.f32.mrf.mxu0
    %v4901 = vpop.f32.mrf.mxu0
    %v4902 = vpop.f32.mrf.mxu0
    %4903 = vdwg.mxu0
    %v4904 = vmax.f32 %v4738, 0.0
    %v4905 = vmax.f32 %v4740, 0.0
    %v4906 = vmax.f32 %v4899, 0.0
    %4909 = vrot.lane.b32.xlu0 %v4905, 96
    %v4910 = vpop.permute.xlu0 %4909
    %4911 = vrot.lane.b32.xlu0 %v4906, 96
    %v4912 = vpop.permute.xlu0 %4911
    %v4913 = vsel %vm2041, %v4910, %v4912
    %v4916 = vadd.f32 %v4904, %v4913
    %v4917 = vadd.f32 %v4905, %v4912
    %v4918 = vmul.f32 %v4916, 0.5
    %v4919 = vmul.f32 %v4917, 0.5
    %4922 = vrot.lane.b32.xlu0 %v4918, 96
    %v4923 = vpop.permute.xlu0 %4922
    %4924 = vrot.lane.b32.xlu0 %v4919, 96
    %v4925 = vpop.permute.xlu0 %4924
    %v4926 = vsel %vm2041, %v4923, %v4925
    %4929 = vst.msk [vmem:[#allocation3 + $0x18] sm:$0xff] %vm2172, %v4923
    %4930 = vst [vmem:[#allocation3 + $0x20] sm:$0xff] %v4926
    %v4931 = vld [vmem:[#allocation2 + $0x50] sm:$0xff]
    %v4932 = vld [vmem:[#allocation2 + $0x58] sm:$0xff]
    %v4933 = vld [vmem:[#allocation2 + $0x60] sm:$0xff]
    %v4934 = vld [vmem:[#allocation2 + $0x68] sm:$0xff]
    %v4935 = vld [vmem:[#allocation2 + $0x70] sm:$0xff]
    %v4936 = vld [vmem:[#allocation2 + $0x78] sm:$0xff]
    %v4937 = vld [vmem:[#allocation2 + $0x80] sm:$0xff]
    %v4938 = vld [vmem:[#allocation2 + $0x88] sm:$0xff]
    %v4939 = vld [vmem:[#allocation2 + $0x90] sm:$0xff]
    %v4940 = vpack.c.bf16 %v4931, %v4931
    %v4941 = vpack.c.bf16 %v4932, %v4932
    %v4942 = vpack.c.bf16 %v4933, %v4933
    %v4943 = vpack.c.bf16 %v4934, %v4934
    %v4944 = vpack.c.bf16 %v4935, %v4935
    %v4945 = vpack.c.bf16 %v4936, %v4936
    %v4946 = vpack.c.bf16 %v4937, %v4937
    %v4947 = vpack.c.bf16 %v4938, %v4938
    %v4948 = vpack.c.bf16 %v4939, %v4939
    %4958 = vrot.lane.b32.xlu0 %v4940, 64
    %v4959 = vpop.permute.xlu0 %4958
    %4960 = vrot.lane.b32.xlu0 %v4941, 64
    %v4961 = vpop.permute.xlu0 %4960
    %4962 = vrot.lane.b32.xlu0 %v4942, 64
    %v4963 = vpop.permute.xlu0 %4962
    %4964 = vrot.lane.b32.xlu0 %v4943, 64
    %v4965 = vpop.permute.xlu0 %4964
    %4966 = vrot.lane.b32.xlu0 %v4944, 64
    %v4967 = vpop.permute.xlu0 %4966
    %4968 = vrot.lane.b32.xlu0 %v4945, 64
    %v4969 = vpop.permute.xlu0 %4968
    %4970 = vrot.lane.b32.xlu0 %v4946, 64
    %v4971 = vpop.permute.xlu0 %4970
    %4972 = vrot.lane.b32.xlu0 %v4947, 64
    %v4973 = vpop.permute.xlu0 %4972
    %4974 = vrot.lane.b32.xlu0 %v4948, 64
    %v4975 = vpop.permute.xlu0 %4974
    %v4976 = vsel %vm1668, %v4959, %v4961
    %v4977 = vsel %vm1668, %v4961, %v4963
    %v4978 = vsel %vm1668, %v4963, %v4965
    %v4979 = vsel %vm1668, %v4965, %v4967
    %v4980 = vsel %vm1668, %v4967, %v4969
    %v4981 = vsel %vm1668, %v4969, %v4971
    %v4982 = vsel %vm1668, %v4971, %v4973
    %v4983 = vsel %vm1668, %v4973, %v4975
    %v4992 = vsel %vm1276, %v4983, 0
    %4994 = vmatprep.subr.bf16.mxu0 %v2988
    %4995 = vmatpush1.bf16.msra.mxu0 %v2987
    %4996 = vmatprep.subr.bf16.mxu0 %v2985
    %4997 = vmatpush1.bf16.msra.mxu0 %v2984
    %4998 = vmatprep.subr.bf16.mxu0 %v2982
    %4999 = vmatpush1.bf16.msra.mxu0 %v2981
    %5000 = vmatprep.subr.bf16.mxu0 %v2979
    %5001 = vmatpush1.bf16.msra.mxu0 %v2978
    %5002 = vmatprep.subr.bf16.mxu0 %v2976
    %5003 = vmatpush1.bf16.msra.mxu0 %v2975
    %5004 = vmatprep.subr.bf16.mxu0 %v2973
    %5005 = vmatpush1.bf16.msra.mxu0 %v2972
    %5006 = vmatprep.subr.bf16.mxu0 %v2970
    %5007 = vmatpush1.bf16.msra.mxu0 %v2969
    %5008 = vmatprep.subr.bf16.mxu0 %v2967
    %5009 = vmatpush1.bf16.msra.mxu0 %v2966
    %5010 = vmatprep.subr.bf16.mxu0 %v3012
    %5011 = vmatpush2.bf16.msra.mxu0 %v3011
    %5012 = vmatprep.subr.bf16.mxu0 %v3009
    %5013 = vmatpush2.bf16.msra.mxu0 %v3008
    %5014 = vmatprep.subr.bf16.mxu0 %v3006
    %5015 = vmatpush2.bf16.msra.mxu0 %v3005
    %5016 = vmatprep.subr.bf16.mxu0 %v3003
    %5017 = vmatpush2.bf16.msra.mxu0 %v3002
    %5018 = vmatprep.subr.bf16.mxu0 %v3000
    %5019 = vmatpush2.bf16.msra.mxu0 %v2999
    %5020 = vmatprep.subr.bf16.mxu0 %v2997
    %5021 = vmatpush2.bf16.msra.mxu0 %v2996
    %5022 = vmatprep.subr.bf16.mxu0 %v2994
    %5023 = vmatpush2.bf16.msra.mxu0 %v2993
    %5024 = vmatprep.subr.bf16.mxu0 %v2991
    %5025 = vmatpush2.bf16.msra.mxu0 %v2990
    %5026 = vmatprep.mubr.bf16.mxu0 %v4977
    %5027 = vmatmul.mubr.bf16.gmra.mxu0 %v4976
    %v5028 = vpop.f32.mrf.mxu0
    %v5029 = vadd.f32 %v2324, %v5028
    %v5030 = vpop.f32.mrf.mxu0
    %v5031 = vadd.f32 %v2328, %v5030
    %v5032 = vpop.f32.mrf.mxu0
    %v5033 = vpop.f32.mrf.mxu0
    %5034 = vdwg.mxu0
    %5035 = vmatprep.subr.bf16.mxu0 %v3036
    %5036 = vmatpush1.bf16.msra.mxu0 %v3035
    %5037 = vmatprep.subr.bf16.mxu0 %v3033
    %5038 = vmatpush1.bf16.msra.mxu0 %v3032
    %5039 = vmatprep.subr.bf16.mxu0 %v3030
    %5040 = vmatpush1.bf16.msra.mxu0 %v3029
    %5041 = vmatprep.subr.bf16.mxu0 %v3027
    %5042 = vmatpush1.bf16.msra.mxu0 %v3026
    %5043 = vmatprep.subr.bf16.mxu0 %v3024
    %5044 = vmatpush1.bf16.msra.mxu0 %v3023
    %5045 = vmatprep.subr.bf16.mxu0 %v3021
    %5046 = vmatpush1.bf16.msra.mxu0 %v3020
    %5047 = vmatprep.subr.bf16.mxu0 %v3018
    %5048 = vmatpush1.bf16.msra.mxu0 %v3017
    %5049 = vmatprep.subr.bf16.mxu0 %v3015
    %5050 = vmatpush1.bf16.msra.mxu0 %v3014
    %5051 = vmatprep.subr.bf16.mxu0 %v3060
    %5052 = vmatpush2.bf16.msra.mxu0 %v3059
    %5053 = vmatprep.subr.bf16.mxu0 %v3057
    %5054 = vmatpush2.bf16.msra.mxu0 %v3056
    %5055 = vmatprep.subr.bf16.mxu0 %v3054
    %5056 = vmatpush2.bf16.msra.mxu0 %v3053
    %5057 = vmatprep.subr.bf16.mxu0 %v3051
    %5058 = vmatpush2.bf16.msra.mxu0 %v3050
    %5059 = vmatprep.subr.bf16.mxu0 %v3048
    %5060 = vmatpush2.bf16.msra.mxu0 %v3047
    %5061 = vmatprep.subr.bf16.mxu0 %v3045
    %5062 = vmatpush2.bf16.msra.mxu0 %v3044
    %5063 = vmatprep.subr.bf16.mxu0 %v3042
    %5064 = vmatpush2.bf16.msra.mxu0 %v3041
    %5065 = vmatprep.subr.bf16.mxu0 %v3039
    %5066 = vmatpush2.bf16.msra.mxu0 %v3038
    %5067 = vmatprep.mubr.bf16.mxu0 %v4979
    %5068 = vmatmul.mubr.bf16.gmra.mxu0 %v4978
    %v5069 = vpop.f32.mrf.mxu0
    %v5070 = vadd.f32 %v5029, %v5069
    %v5071 = vpop.f32.mrf.mxu0
    %v5072 = vadd.f32 %v5031, %v5071
    %v5073 = vpop.f32.mrf.mxu0
    %v5074 = vpop.f32.mrf.mxu0
    %5075 = vdwg.mxu0
    %5076 = vmatprep.subr.bf16.mxu0 %v3084
    %5077 = vmatpush1.bf16.msra.mxu0 %v3083
    %5078 = vmatprep.subr.bf16.mxu0 %v3081
    %5079 = vmatpush1.bf16.msra.mxu0 %v3080
    %5080 = vmatprep.subr.bf16.mxu0 %v3078
    %5081 = vmatpush1.bf16.msra.mxu0 %v3077
    %5082 = vmatprep.subr.bf16.mxu0 %v3075
    %5083 = vmatpush1.bf16.msra.mxu0 %v3074
    %5084 = vmatprep.subr.bf16.mxu0 %v3072
    %5085 = vmatpush1.bf16.msra.mxu0 %v3071
    %5086 = vmatprep.subr.bf16.mxu0 %v3069
    %5087 = vmatpush1.bf16.msra.mxu0 %v3068
    %5088 = vmatprep.subr.bf16.mxu0 %v3066
    %5089 = vmatpush1.bf16.msra.mxu0 %v3065
    %5090 = vmatprep.subr.bf16.mxu0 %v3063
    %5091 = vmatpush1.bf16.msra.mxu0 %v3062
    %5092 = vmatprep.subr.bf16.mxu0 %v3108
    %5093 = vmatpush2.bf16.msra.mxu0 %v3107
    %5094 = vmatprep.subr.bf16.mxu0 %v3105
    %5095 = vmatpush2.bf16.msra.mxu0 %v3104
    %5096 = vmatprep.subr.bf16.mxu0 %v3102
    %5097 = vmatpush2.bf16.msra.mxu0 %v3101
    %5098 = vmatprep.subr.bf16.mxu0 %v3099
    %5099 = vmatpush2.bf16.msra.mxu0 %v3098
    %5100 = vmatprep.subr.bf16.mxu0 %v3096
    %5101 = vmatpush2.bf16.msra.mxu0 %v3095
    %5102 = vmatprep.subr.bf16.mxu0 %v3093
    %5103 = vmatpush2.bf16.msra.mxu0 %v3092
    %5104 = vmatprep.subr.bf16.mxu0 %v3090
    %5105 = vmatpush2.bf16.msra.mxu0 %v3089
    %5106 = vmatprep.subr.bf16.mxu0 %v3087
    %5107 = vmatpush2.bf16.msra.mxu0 %v3086
    %5108 = vmatprep.mubr.bf16.mxu0 %v4981
    %5109 = vmatmul.mubr.bf16.gmra.mxu0 %v4980
    %v5110 = vpop.f32.mrf.mxu0
    %v5111 = vadd.f32 %v5070, %v5110
    %v5112 = vpop.f32.mrf.mxu0
    %v5113 = vadd.f32 %v5072, %v5112
    %v5114 = vpop.f32.mrf.mxu0
    %v5115 = vpop.f32.mrf.mxu0
    %5116 = vdwg.mxu0
    %5117 = vmatprep.subr.bf16.mxu0 %v3132
    %5118 = vmatpush1.bf16.msra.mxu0 %v3131
    %5119 = vmatprep.subr.bf16.mxu0 %v3129
    %5120 = vmatpush1.bf16.msra.mxu0 %v3128
    %5121 = vmatprep.subr.bf16.mxu0 %v3126
    %5122 = vmatpush1.bf16.msra.mxu0 %v3125
    %5123 = vmatprep.subr.bf16.mxu0 %v3123
    %5124 = vmatpush1.bf16.msra.mxu0 %v3122
    %5125 = vmatprep.subr.bf16.mxu0 %v3120
    %5126 = vmatpush1.bf16.msra.mxu0 %v3119
    %5127 = vmatprep.subr.bf16.mxu0 %v3117
    %5128 = vmatpush1.bf16.msra.mxu0 %v3116
    %5129 = vmatprep.subr.bf16.mxu0 %v3114
    %5130 = vmatpush1.bf16.msra.mxu0 %v3113
    %5131 = vmatprep.subr.bf16.mxu0 %v3111
    %5132 = vmatpush1.bf16.msra.mxu0 %v3110
    %5133 = vmatprep.subr.bf16.mxu0 0
    %5134 = vmatpush2.bf16.msra.mxu0 0
    %5135 = vmatprep.subr.bf16.mxu0 %v3153
    %5136 = vmatpush2.bf16.msra.mxu0 %v3152
    %5137 = vmatprep.subr.bf16.mxu0 %v3150
    %5138 = vmatpush2.bf16.msra.mxu0 %v3149
    %5139 = vmatprep.subr.bf16.mxu0 %v3147
    %5140 = vmatpush2.bf16.msra.mxu0 %v3146
    %5141 = vmatprep.subr.bf16.mxu0 %v3144
    %5142 = vmatpush2.bf16.msra.mxu0 %v3143
    %5143 = vmatprep.subr.bf16.mxu0 %v3141
    %5144 = vmatpush2.bf16.msra.mxu0 %v3140
    %5145 = vmatprep.subr.bf16.mxu0 %v3138
    %5146 = vmatpush2.bf16.msra.mxu0 %v3137
    %5147 = vmatprep.subr.bf16.mxu0 %v3135
    %5148 = vmatpush2.bf16.msra.mxu0 %v3134
    %5149 = vmatprep.mubr.bf16.mxu0 %v4992
    %5150 = vmatmul.mubr.bf16.gmra.mxu0 %v4982
    %v5151 = vpop.f32.mrf.mxu0
    %v5152 = vadd.f32 %v5111, %v5151
    %v5153 = vpop.f32.mrf.mxu0
    %v5154 = vadd.f32 %v5113, %v5153
    %v5155 = vpop.f32.mrf.mxu0
    %v5156 = vpop.f32.mrf.mxu0
    %5157 = vdwg.mxu0
    %5158 = vmatprep.subr.bf16.mxu0 0
    %5159 = vmatpush1.bf16.msra.mxu0 %v2989
    %5160 = vmatprep.subr.bf16.mxu0 0
    %5161 = vmatpush1.bf16.msra.mxu0 %v2986
    %5162 = vmatprep.subr.bf16.mxu0 0
    %5163 = vmatpush1.bf16.msra.mxu0 %v2983
    %5164 = vmatprep.subr.bf16.mxu0 0
    %5165 = vmatpush1.bf16.msra.mxu0 %v2980
    %5166 = vmatprep.subr.bf16.mxu0 0
    %5167 = vmatpush1.bf16.msra.mxu0 %v2977
    %5168 = vmatprep.subr.bf16.mxu0 0
    %5169 = vmatpush1.bf16.msra.mxu0 %v2974
    %5170 = vmatprep.subr.bf16.mxu0 0
    %5171 = vmatpush1.bf16.msra.mxu0 %v2971
    %5172 = vmatprep.subr.bf16.mxu0 0
    %5173 = vmatpush1.bf16.msra.mxu0 %v2968
    %5174 = vmatprep.subr.bf16.mxu0 0
    %5175 = vmatpush2.bf16.msra.mxu0 %v3013
    %5176 = vmatprep.subr.bf16.mxu0 0
    %5177 = vmatpush2.bf16.msra.mxu0 %v3010
    %5178 = vmatprep.subr.bf16.mxu0 0
    %5179 = vmatpush2.bf16.msra.mxu0 %v3007
    %5180 = vmatprep.subr.bf16.mxu0 0
    %5181 = vmatpush2.bf16.msra.mxu0 %v3004
    %5182 = vmatprep.subr.bf16.mxu0 0
    %5183 = vmatpush2.bf16.msra.mxu0 %v3001
    %5184 = vmatprep.subr.bf16.mxu0 0
    %5185 = vmatpush2.bf16.msra.mxu0 %v2998
    %5186 = vmatprep.subr.bf16.mxu0 0
    %5187 = vmatpush2.bf16.msra.mxu0 %v2995
    %5188 = vmatprep.subr.bf16.mxu0 0
    %5189 = vmatpush2.bf16.msra.mxu0 %v2992
    %5190 = vmatprep.mubr.bf16.mxu0 %v4977
    %5191 = vmatmul.mubr.bf16.gmra.mxu0 %v4976
    %v5192 = vpop.f32.mrf.mxu0
    %v5193 = vadd.f32 %v2332, %v5192
    %v5194 = vpop.f32.mrf.mxu0
    %v5195 = vpop.f32.mrf.mxu0
    %v5196 = vpop.f32.mrf.mxu0
    %5197 = vdwg.mxu0
    %5198 = vmatprep.subr.bf16.mxu0 0
    %5199 = vmatpush1.bf16.msra.mxu0 %v3037
    %5200 = vmatprep.subr.bf16.mxu0 0
    %5201 = vmatpush1.bf16.msra.mxu0 %v3034
    %5202 = vmatprep.subr.bf16.mxu0 0
    %5203 = vmatpush1.bf16.msra.mxu0 %v3031
    %5204 = vmatprep.subr.bf16.mxu0 0
    %5205 = vmatpush1.bf16.msra.mxu0 %v3028
    %5206 = vmatprep.subr.bf16.mxu0 0
    %5207 = vmatpush1.bf16.msra.mxu0 %v3025
    %5208 = vmatprep.subr.bf16.mxu0 0
    %5209 = vmatpush1.bf16.msra.mxu0 %v3022
    %5210 = vmatprep.subr.bf16.mxu0 0
    %5211 = vmatpush1.bf16.msra.mxu0 %v3019
    %5212 = vmatprep.subr.bf16.mxu0 0
    %5213 = vmatpush1.bf16.msra.mxu0 %v3016
    %5214 = vmatprep.subr.bf16.mxu0 0
    %5215 = vmatpush2.bf16.msra.mxu0 %v3061
    %5216 = vmatprep.subr.bf16.mxu0 0
    %5217 = vmatpush2.bf16.msra.mxu0 %v3058
    %5218 = vmatprep.subr.bf16.mxu0 0
    %5219 = vmatpush2.bf16.msra.mxu0 %v3055
    %5220 = vmatprep.subr.bf16.mxu0 0
    %5221 = vmatpush2.bf16.msra.mxu0 %v3052
    %5222 = vmatprep.subr.bf16.mxu0 0
    %5223 = vmatpush2.bf16.msra.mxu0 %v3049
    %5224 = vmatprep.subr.bf16.mxu0 0
    %5225 = vmatpush2.bf16.msra.mxu0 %v3046
    %5226 = vmatprep.subr.bf16.mxu0 0
    %5227 = vmatpush2.bf16.msra.mxu0 %v3043
    %5228 = vmatprep.subr.bf16.mxu0 0
    %5229 = vmatpush2.bf16.msra.mxu0 %v3040
    %5230 = vmatprep.mubr.bf16.mxu0 %v4979
    %5231 = vmatmul.mubr.bf16.gmra.mxu0 %v4978
    %v5232 = vpop.f32.mrf.mxu0
    %v5233 = vadd.f32 %v5193, %v5232
    %v5234 = vpop.f32.mrf.mxu0
    %v5235 = vpop.f32.mrf.mxu0
    %v5236 = vpop.f32.mrf.mxu0
    %5237 = vdwg.mxu0
    %5238 = vmatprep.subr.bf16.mxu0 0
    %5239 = vmatpush1.bf16.msra.mxu0 %v3085
    %5240 = vmatprep.subr.bf16.mxu0 0
    %5241 = vmatpush1.bf16.msra.mxu0 %v3082
    %5242 = vmatprep.subr.bf16.mxu0 0
    %5243 = vmatpush1.bf16.msra.mxu0 %v3079
    %5244 = vmatprep.subr.bf16.mxu0 0
    %5245 = vmatpush1.bf16.msra.mxu0 %v3076
    %5246 = vmatprep.subr.bf16.mxu0 0
    %5247 = vmatpush1.bf16.msra.mxu0 %v3073
    %5248 = vmatprep.subr.bf16.mxu0 0
    %5249 = vmatpush1.bf16.msra.mxu0 %v3070
    %5250 = vmatprep.subr.bf16.mxu0 0
    %5251 = vmatpush1.bf16.msra.mxu0 %v3067
    %5252 = vmatprep.subr.bf16.mxu0 0
    %5253 = vmatpush1.bf16.msra.mxu0 %v3064
    %5254 = vmatprep.subr.bf16.mxu0 0
    %5255 = vmatpush2.bf16.msra.mxu0 %v3109
    %5256 = vmatprep.subr.bf16.mxu0 0
    %5257 = vmatpush2.bf16.msra.mxu0 %v3106
    %5258 = vmatprep.subr.bf16.mxu0 0
    %5259 = vmatpush2.bf16.msra.mxu0 %v3103
    %5260 = vmatprep.subr.bf16.mxu0 0
    %5261 = vmatpush2.bf16.msra.mxu0 %v3100
    %5262 = vmatprep.subr.bf16.mxu0 0
    %5263 = vmatpush2.bf16.msra.mxu0 %v3097
    %5264 = vmatprep.subr.bf16.mxu0 0
    %5265 = vmatpush2.bf16.msra.mxu0 %v3094
    %5266 = vmatprep.subr.bf16.mxu0 0
    %5267 = vmatpush2.bf16.msra.mxu0 %v3091
    %5268 = vmatprep.subr.bf16.mxu0 0
    %5269 = vmatpush2.bf16.msra.mxu0 %v3088
    %5270 = vmatprep.mubr.bf16.mxu0 %v4981
    %5271 = vmatmul.mubr.bf16.gmra.mxu0 %v4980
    %v5272 = vpop.f32.mrf.mxu0
    %v5273 = vadd.f32 %v5233, %v5272
    %v5274 = vpop.f32.mrf.mxu0
    %v5275 = vpop.f32.mrf.mxu0
    %v5276 = vpop.f32.mrf.mxu0
    %5277 = vdwg.mxu0
    %5278 = vmatprep.subr.bf16.mxu0 0
    %5279 = vmatpush1.bf16.msra.mxu0 %v3133
    %5280 = vmatprep.subr.bf16.mxu0 0
    %5281 = vmatpush1.bf16.msra.mxu0 %v3130
    %5282 = vmatprep.subr.bf16.mxu0 0
    %5283 = vmatpush1.bf16.msra.mxu0 %v3127
    %5284 = vmatprep.subr.bf16.mxu0 0
    %5285 = vmatpush1.bf16.msra.mxu0 %v3124
    %5286 = vmatprep.subr.bf16.mxu0 0
    %5287 = vmatpush1.bf16.msra.mxu0 %v3121
    %5288 = vmatprep.subr.bf16.mxu0 0
    %5289 = vmatpush1.bf16.msra.mxu0 %v3118
    %5290 = vmatprep.subr.bf16.mxu0 0
    %5291 = vmatpush1.bf16.msra.mxu0 %v3115
    %5292 = vmatprep.subr.bf16.mxu0 0
    %5293 = vmatpush1.bf16.msra.mxu0 %v3112
    %5294 = vmatprep.subr.bf16.mxu0 0
    %5295 = vmatpush2.bf16.msra.mxu0 0
    %5296 = vmatprep.subr.bf16.mxu0 0
    %5297 = vmatpush2.bf16.msra.mxu0 %v3154
    %5298 = vmatprep.subr.bf16.mxu0 0
    %5299 = vmatpush2.bf16.msra.mxu0 %v3151
    %5300 = vmatprep.subr.bf16.mxu0 0
    %5301 = vmatpush2.bf16.msra.mxu0 %v3148
    %5302 = vmatprep.subr.bf16.mxu0 0
    %5303 = vmatpush2.bf16.msra.mxu0 %v3145
    %5304 = vmatprep.subr.bf16.mxu0 0
    %5305 = vmatpush2.bf16.msra.mxu0 %v3142
    %5306 = vmatprep.subr.bf16.mxu0 0
    %5307 = vmatpush2.bf16.msra.mxu0 %v3139
    %5308 = vmatprep.subr.bf16.mxu0 0
    %5309 = vmatpush2.bf16.msra.mxu0 %v3136
    %5310 = vmatprep.mubr.bf16.mxu0 %v4992
    %5311 = vmatmul.mubr.bf16.gmra.mxu0 %v4982
    %v5312 = vpop.f32.mrf.mxu0
    %v5313 = vadd.f32 %v5273, %v5312
    %v5314 = vpop.f32.mrf.mxu0
    %v5315 = vpop.f32.mrf.mxu0
    %v5316 = vpop.f32.mrf.mxu0
    %5317 = vdwg.mxu0
    %v5318 = vmax.f32 %v5152, 0.0
    %v5319 = vmax.f32 %v5154, 0.0
    %v5320 = vmax.f32 %v5313, 0.0
    %5323 = vrot.lane.b32.xlu0 %v5319, 96
    %v5324 = vpop.permute.xlu0 %5323
    %5325 = vrot.lane.b32.xlu0 %v5320, 96
    %v5326 = vpop.permute.xlu0 %5325
    %v5327 = vsel %vm2041, %v5324, %v5326
    %v5330 = vadd.f32 %v5318, %v5327
    %v5331 = vadd.f32 %v5319, %v5326
    %v5332 = vmul.f32 %v5330, 0.5
    %v5333 = vmul.f32 %v5331, 0.5
    %5334 = vst [vmem:[#allocation3 + $0x28] sm:$0xff] %v5332
    %5335 = vst.msk [vmem:[#allocation3 + $0x30] sm:$0xff] %vm1018, %v5333
    %v5336 = vld [vmem:[#allocation3] sm:$0xff]
    %v5337 = vld [vmem:[#allocation3 + $0x8] sm:$0xff]
    %v5338 = vld [vmem:[#allocation3 + $0x10] sm:$0xff]
    %v5339 = vld [vmem:[#allocation3 + $0x18] sm:$0xff]
    %v5340 = vld [vmem:[#allocation3 + $0x20] sm:$0xff]
    %v5341 = vld [vmem:[#allocation3 + $0x28] sm:$0xff]
    %v5342 = vld [vmem:[#allocation3 + $0x30] sm:$0xff]
    %v5343 = vpack.c.bf16 %v5336, %v5336
    %v5344 = vpack.c.bf16 %v5337, %v5337
    %v5345 = vpack.c.bf16 %v5338, %v5338
    %v5346 = vpack.c.bf16 %v5339, %v5339
    %v5347 = vpack.c.bf16 %v5340, %v5340
    %v5348 = vpack.c.bf16 %v5341, %v5341
    %v5349 = vpack.c.bf16 %v5342, %v5342
    %v5350 = vld [vmem:[%s5] sm:$0xf]
    %v5351 = vld [vmem:[%s5 + $0x4] sm:$0xf]
    %v5352 = vld [vmem:[%s5 + $0x8] sm:$0xf]
    %v5353 = vld [vmem:[%s5 + $0xc] sm:$0xf]
    %v5354 = vld [vmem:[%s5 + $0x10] sm:$0xf]
    %v5355 = vld [vmem:[%s5 + $0x14] sm:$0xf]
    %v5356 = vld [vmem:[%s5 + $0x18] sm:$0xf]
    %v5357 = vld [vmem:[%s5 + $0x1c] sm:$0xf]
    %v5358 = vld [vmem:[%s5 + $0x20] sm:$0xf]
    %v5359 = vld [vmem:[%s5 + $0x24] sm:$0xf]
    %v5360 = vld [vmem:[%s5 + $0x28] sm:$0xf]
    %v5361 = vld [vmem:[%s5 + $0x2c] sm:$0xf]
    %v5362 = vld [vmem:[%s5 + $0x30] sm:$0xf]
    %v5363 = vld [vmem:[%s5 + $0x34] sm:$0xf]
    %v5364 = vld [vmem:[%s5 + $0x38] sm:$0xf]
    %v5365 = vld [vmem:[%s5 + $0x3c] sm:$0xf]
    %v5366 = vld [vmem:[%s5 + $0x40] sm:$0xf]
    %v5367 = vld [vmem:[%s5 + $0x44] sm:$0xf]
    %v5368 = vld [vmem:[%s5 + $0x48] sm:$0xf]
    %v5369 = vld [vmem:[%s5 + $0x4c] sm:$0xf]
    %v5370 = vld [vmem:[%s5 + $0x50] sm:$0xf]
    %v5371 = vld [vmem:[%s5 + $0x54] sm:$0xf]
    %v5372 = vld [vmem:[%s5 + $0x58] sm:$0xf]
    %v5373 = vld [vmem:[%s5 + $0x5c] sm:$0xf]
    %v5374 = vld [vmem:[%s5 + $0x60] sm:$0xf]
    %v5375 = vld [vmem:[%s5 + $0x64] sm:$0xf]
    %v5376 = vld [vmem:[%s5 + $0x68] sm:$0xf]
    %v5377 = vld [vmem:[%s5 + $0x6c] sm:$0xf]
    %v5378 = vld [vmem:[%s5 + $0x70] sm:$0xf]
    %v5379 = vld [vmem:[%s5 + $0x74] sm:$0xf]
    %v5380 = vld [vmem:[%s5 + $0x78] sm:$0xf]
    %v5381 = vld [vmem:[%s5 + $0x7c] sm:$0xf]
    %v5382 = vld [vmem:[%s5 + $0x80] sm:$0xf]
    %v5383 = vld [vmem:[%s5 + $0x84] sm:$0xf]
    %v5384 = vld [vmem:[%s5 + $0x88] sm:$0xf]
    %v5385 = vld [vmem:[%s5 + $0x8c] sm:$0xf]
    %v5386 = vld [vmem:[%s5 + $0x90] sm:$0xf]
    %v5387 = vld [vmem:[%s5 + $0x94] sm:$0xf]
    %v5388 = vld [vmem:[%s5 + $0x98] sm:$0xf]
    %v5389 = vld [vmem:[%s5 + $0x9c] sm:$0xf]
    %v5390 = vld [vmem:[%s5 + $0xa0] sm:$0xf]
    %v5391 = vld [vmem:[%s5 + $0xa4] sm:$0xf]
    %v5392 = vld [vmem:[%s5 + $0xa8] sm:$0xf]
    %v5393 = vld [vmem:[%s5 + $0xac] sm:$0xf]
    %v5394 = vld [vmem:[%s5 + $0xb0] sm:$0xf]
    %v5395 = vld [vmem:[%s5 + $0xb4] sm:$0xf]
    %v5396 = vld [vmem:[%s5 + $0xb8] sm:$0xf]
    %v5397 = vld [vmem:[%s5 + $0xbc] sm:$0xf]
    %v5398 = vld [vmem:[%s5 + $0xc0] sm:$0xf]
    %v5399 = vld [vmem:[%s5 + $0xc4] sm:$0xf]
    %v5400 = vld [vmem:[%s5 + $0xc8] sm:$0xf]
    %v5401 = vld [vmem:[%s5 + $0xcc] sm:$0xf]
    %v5402 = vld [vmem:[%s5 + $0xd0] sm:$0xf]
    %v5403 = vld [vmem:[%s5 + $0xd4] sm:$0xf]
    %v5404 = vld [vmem:[%s5 + $0xd8] sm:$0xf]
    %v5405 = vld [vmem:[%s5 + $0xdc] sm:$0xf]
    %v5406 = vld [vmem:[%s5 + $0xe0] sm:$0xf]
    %v5407 = vld [vmem:[%s5 + $0xe4] sm:$0xf]
    %v5408 = vld [vmem:[%s5 + $0xe8] sm:$0xf]
    %v5409 = vld [vmem:[%s5 + $0xec] sm:$0xf]
    %v5410 = vld [vmem:[%s5 + $0xf0] sm:$0xf]
    %v5411 = vld [vmem:[%s5 + $0xf4] sm:$0xf]
    %v5412 = vld [vmem:[%s5 + $0xf8] sm:$0xf]
    %v5413 = vld [vmem:[%s5 + $0xfc] sm:$0xf]
    %v5414 = vld [vmem:[%s5 + $0x100] sm:$0xf]
    %v5415 = vld [vmem:[%s5 + $0x104] sm:$0xf]
    %v5416 = vld [vmem:[%s5 + $0x108] sm:$0xf]
    %v5417 = vld [vmem:[%s5 + $0x10c] sm:$0xf]
    %v5418 = vld [vmem:[%s5 + $0x110] sm:$0xf]
    %v5419 = vld [vmem:[%s5 + $0x114] sm:$0xf]
    %v5420 = vld [vmem:[%s5 + $0x118] sm:$0xf]
    %v5421 = vld [vmem:[%s5 + $0x11c] sm:$0xf]
    %v5422 = vld [vmem:[%s5 + $0x120] sm:$0xf]
    %v5423 = vld [vmem:[%s5 + $0x124] sm:$0xf]
    %v5424 = vld [vmem:[%s5 + $0x128] sm:$0xf]
    %v5425 = vld [vmem:[%s5 + $0x12c] sm:$0xf]
    %v5426 = vld [vmem:[%s5 + $0x130] sm:$0xf]
    %v5427 = vld [vmem:[%s5 + $0x134] sm:$0xf]
    %v5428 = vld [vmem:[%s5 + $0x138] sm:$0xf]
    %v5429 = vld [vmem:[%s5 + $0x13c] sm:$0xf]
    %v5430 = vld [vmem:[%s5 + $0x140] sm:$0xf]
    %v5431 = vld [vmem:[%s5 + $0x144] sm:$0xf]
    %v5432 = vld [vmem:[%s5 + $0x148] sm:$0xf]
    %v5433 = vld [vmem:[%s5 + $0x14c] sm:$0xf]
    %v5434 = vld [vmem:[%s5 + $0x150] sm:$0xf]
    %v5435 = vld [vmem:[%s5 + $0x154] sm:$0xf]
    %v5436 = vld [vmem:[%s5 + $0x158] sm:$0xf]
    %v5437 = vld [vmem:[%s5 + $0x15c] sm:$0xf]
    %v5438 = vld [vmem:[%s5 + $0x160] sm:$0xf]
    %v5439 = vld [vmem:[%s5 + $0x164] sm:$0xf]
    %v5440 = vld [vmem:[%s5 + $0x168] sm:$0xf]
    %v5441 = vld [vmem:[%s5 + $0x16c] sm:$0xf]
    %v5442 = vld [vmem:[%s5 + $0x170] sm:$0xf]
    %v5443 = vld [vmem:[%s5 + $0x174] sm:$0xf]
    %v5444 = vld [vmem:[%s5 + $0x178] sm:$0xf]
    %v5445 = vld [vmem:[%s5 + $0x17c] sm:$0xf]
    %v5446 = vld [vmem:[%s5 + $0x180] sm:$0xf]
    %v5447 = vld [vmem:[%s5 + $0x184] sm:$0xf]
    %v5448 = vld [vmem:[%s5 + $0x188] sm:$0xf]
    %v5449 = vld [vmem:[%s5 + $0x18c] sm:$0xf]
    %v5450 = vld [vmem:[%s6] sm:$0x1]
    %v5452 = vlaneseq
    %v5453 = vshrl.u32 %v5452, 7
    %v5454 = vsub.s32 0, %v5453
    %v5455 = vrot.slane %v5450, %v5454
    %v5557 = vunpack.c.l.b16 %v5350
    %v5558 = vunpack.c.l.b16 %v5351
    %v5559 = vunpack.c.l.b16 %v5352
    %v5560 = vunpack.c.l.b16 %v5353
    %v5561 = vunpack.c.l.b16 %v5354
    %v5562 = vunpack.c.l.b16 %v5355
    %v5563 = vunpack.c.l.b16 %v5356
    %v5564 = vunpack.c.l.b16 %v5357
    %v5565 = vunpack.c.l.b16 %v5358
    %v5566 = vunpack.c.l.b16 %v5359
    %v5567 = vunpack.c.l.b16 %v5360
    %v5568 = vunpack.c.l.b16 %v5361
    %v5569 = vunpack.c.l.b16 %v5362
    %v5570 = vunpack.c.l.b16 %v5363
    %v5571 = vunpack.c.l.b16 %v5364
    %v5572 = vunpack.c.l.b16 %v5365
    %v5573 = vunpack.c.l.b16 %v5366
    %v5574 = vunpack.c.l.b16 %v5367
    %v5575 = vunpack.c.l.b16 %v5368
    %v5576 = vunpack.c.l.b16 %v5369
    %v5577 = vunpack.c.l.b16 %v5370
    %v5578 = vunpack.c.l.b16 %v5371
    %v5579 = vunpack.c.l.b16 %v5372
    %v5580 = vunpack.c.l.b16 %v5373
    %v5581 = vunpack.c.l.b16 %v5374
    %v5582 = vunpack.c.l.b16 %v5375
    %v5583 = vunpack.c.l.b16 %v5376
    %v5584 = vunpack.c.l.b16 %v5377
    %v5585 = vunpack.c.l.b16 %v5378
    %v5586 = vunpack.c.l.b16 %v5379
    %v5587 = vunpack.c.l.b16 %v5380
    %v5588 = vunpack.c.l.b16 %v5381
    %v5589 = vunpack.c.l.b16 %v5382
    %v5590 = vunpack.c.l.b16 %v5383
    %v5591 = vunpack.c.l.b16 %v5384
    %v5592 = vunpack.c.l.b16 %v5385
    %v5593 = vunpack.c.l.b16 %v5386
    %v5594 = vunpack.c.l.b16 %v5387
    %v5595 = vunpack.c.l.b16 %v5388
    %v5596 = vunpack.c.l.b16 %v5389
    %v5597 = vunpack.c.l.b16 %v5390
    %v5598 = vunpack.c.l.b16 %v5391
    %v5599 = vunpack.c.l.b16 %v5392
    %v5600 = vunpack.c.l.b16 %v5393
    %v5601 = vunpack.c.l.b16 %v5394
    %v5602 = vunpack.c.l.b16 %v5395
    %v5603 = vunpack.c.l.b16 %v5396
    %v5604 = vunpack.c.l.b16 %v5397
    %v5605 = vunpack.c.l.b16 %v5398
    %v5606 = vunpack.c.l.b16 %v5399
    %v5607 = vunpack.c.l.b16 %v5400
    %v5608 = vunpack.c.l.b16 %v5401
    %v5609 = vunpack.c.l.b16 %v5402
    %v5610 = vunpack.c.l.b16 %v5403
    %v5611 = vunpack.c.l.b16 %v5404
    %v5612 = vunpack.c.l.b16 %v5405
    %v5613 = vunpack.c.l.b16 %v5406
    %v5614 = vunpack.c.l.b16 %v5407
    %v5615 = vunpack.c.l.b16 %v5408
    %v5616 = vunpack.c.l.b16 %v5409
    %v5617 = vunpack.c.l.b16 %v5410
    %v5618 = vunpack.c.l.b16 %v5411
    %v5619 = vunpack.c.l.b16 %v5412
    %v5620 = vunpack.c.l.b16 %v5413
    %v5621 = vunpack.c.l.b16 %v5414
    %v5622 = vunpack.c.l.b16 %v5415
    %v5623 = vunpack.c.l.b16 %v5416
    %v5624 = vunpack.c.l.b16 %v5417
    %v5625 = vunpack.c.l.b16 %v5418
    %v5626 = vunpack.c.l.b16 %v5419
    %v5627 = vunpack.c.l.b16 %v5420
    %v5628 = vunpack.c.l.b16 %v5421
    %v5629 = vunpack.c.l.b16 %v5422
    %v5630 = vunpack.c.l.b16 %v5423
    %v5631 = vunpack.c.l.b16 %v5424
    %v5632 = vunpack.c.l.b16 %v5425
    %v5633 = vunpack.c.l.b16 %v5426
    %v5634 = vunpack.c.l.b16 %v5427
    %v5635 = vunpack.c.l.b16 %v5428
    %v5636 = vunpack.c.l.b16 %v5429
    %v5637 = vunpack.c.l.b16 %v5430
    %v5638 = vunpack.c.l.b16 %v5431
    %v5639 = vunpack.c.l.b16 %v5432
    %v5640 = vunpack.c.l.b16 %v5433
    %v5641 = vunpack.c.l.b16 %v5434
    %v5642 = vunpack.c.l.b16 %v5435
    %v5643 = vunpack.c.l.b16 %v5436
    %v5644 = vunpack.c.l.b16 %v5437
    %v5645 = vunpack.c.l.b16 %v5438
    %v5646 = vunpack.c.l.b16 %v5439
    %v5647 = vunpack.c.l.b16 %v5440
    %v5648 = vunpack.c.l.b16 %v5441
    %v5649 = vunpack.c.l.b16 %v5442
    %v5650 = vunpack.c.l.b16 %v5443
    %v5651 = vunpack.c.l.b16 %v5444
    %v5652 = vunpack.c.l.b16 %v5445
    %v5653 = vunpack.c.l.b16 %v5446
    %v5654 = vunpack.c.l.b16 %v5447
    %v5655 = vunpack.c.l.b16 %v5448
    %v5656 = vunpack.c.l.b16 %v5449
    %v5657 = vpack.c.b16 %v5558, %v5557
    %v5658 = vpack.c.b16 %v5560, %v5559
    %v5659 = vpack.c.b16 %v5562, %v5561
    %v5660 = vpack.c.b16 %v5564, %v5563
    %v5661 = vpack.c.b16 %v5566, %v5565
    %v5662 = vpack.c.b16 %v5568, %v5567
    %v5663 = vpack.c.b16 %v5570, %v5569
    %v5664 = vpack.c.b16 %v5572, %v5571
    %v5665 = vpack.c.b16 %v5574, %v5573
    %v5666 = vpack.c.b16 %v5576, %v5575
    %v5667 = vpack.c.b16 %v5578, %v5577
    %v5668 = vpack.c.b16 %v5580, %v5579
    %v5669 = vpack.c.b16 %v5582, %v5581
    %v5670 = vpack.c.b16 %v5584, %v5583
    %v5671 = vpack.c.b16 %v5586, %v5585
    %v5672 = vpack.c.b16 %v5588, %v5587
    %v5673 = vpack.c.b16 %v5590, %v5589
    %v5674 = vpack.c.b16 %v5592, %v5591
    %v5675 = vpack.c.b16 %v5594, %v5593
    %v5676 = vpack.c.b16 %v5596, %v5595
    %v5677 = vpack.c.b16 %v5598, %v5597
    %v5678 = vpack.c.b16 %v5600, %v5599
    %v5679 = vpack.c.b16 %v5602, %v5601
    %v5680 = vpack.c.b16 %v5604, %v5603
    %v5681 = vpack.c.b16 %v5606, %v5605
    %v5682 = vpack.c.b16 %v5608, %v5607
    %v5683 = vpack.c.b16 %v5610, %v5609
    %v5684 = vpack.c.b16 %v5612, %v5611
    %v5685 = vpack.c.b16 %v5614, %v5613
    %v5686 = vpack.c.b16 %v5616, %v5615
    %v5687 = vpack.c.b16 %v5618, %v5617
    %v5688 = vpack.c.b16 %v5620, %v5619
    %v5689 = vpack.c.b16 %v5622, %v5621
    %v5690 = vpack.c.b16 %v5624, %v5623
    %v5691 = vpack.c.b16 %v5626, %v5625
    %v5692 = vpack.c.b16 %v5628, %v5627
    %v5693 = vpack.c.b16 %v5630, %v5629
    %v5694 = vpack.c.b16 %v5632, %v5631
    %v5695 = vpack.c.b16 %v5634, %v5633
    %v5696 = vpack.c.b16 %v5636, %v5635
    %v5697 = vpack.c.b16 %v5638, %v5637
    %v5698 = vpack.c.b16 %v5640, %v5639
    %v5699 = vpack.c.b16 %v5642, %v5641
    %v5700 = vpack.c.b16 %v5644, %v5643
    %v5701 = vpack.c.b16 %v5646, %v5645
    %v5702 = vpack.c.b16 %v5648, %v5647
    %v5703 = vpack.c.b16 %v5650, %v5649
    %v5704 = vpack.c.b16 %v5652, %v5651
    %v5705 = vpack.c.b16 %v5654, %v5653
    %v5706 = vpack.c.b16 %v5656, %v5655
    %v5758 = vsel %vm1018, %v5349, 0
    %5760 = vmatprep.subr.bf16.mxu0 0
    %5761 = vmatpush1.bf16.msra.mxu0 %v5664
    %5762 = vmatprep.subr.bf16.mxu0 0
    %5763 = vmatpush1.bf16.msra.mxu0 %v5663
    %5764 = vmatprep.subr.bf16.mxu0 0
    %5765 = vmatpush1.bf16.msra.mxu0 %v5662
    %5766 = vmatprep.subr.bf16.mxu0 0
    %5767 = vmatpush1.bf16.msra.mxu0 %v5661
    %5768 = vmatprep.subr.bf16.mxu0 0
    %5769 = vmatpush1.bf16.msra.mxu0 %v5660
    %5770 = vmatprep.subr.bf16.mxu0 0
    %5771 = vmatpush1.bf16.msra.mxu0 %v5659
    %5772 = vmatprep.subr.bf16.mxu0 0
    %5773 = vmatpush1.bf16.msra.mxu0 %v5658
    %5774 = vmatprep.subr.bf16.mxu0 0
    %5775 = vmatpush1.bf16.msra.mxu0 %v5657
    %5776 = vmatprep.subr.bf16.mxu0 0
    %5777 = vmatpush2.bf16.msra.mxu0 %v5672
    %5778 = vmatprep.subr.bf16.mxu0 0
    %5779 = vmatpush2.bf16.msra.mxu0 %v5671
    %5780 = vmatprep.subr.bf16.mxu0 0
    %5781 = vmatpush2.bf16.msra.mxu0 %v5670
    %5782 = vmatprep.subr.bf16.mxu0 0
    %5783 = vmatpush2.bf16.msra.mxu0 %v5669
    %5784 = vmatprep.subr.bf16.mxu0 0
    %5785 = vmatpush2.bf16.msra.mxu0 %v5668
    %5786 = vmatprep.subr.bf16.mxu0 0
    %5787 = vmatpush2.bf16.msra.mxu0 %v5667
    %5788 = vmatprep.subr.bf16.mxu0 0
    %5789 = vmatpush2.bf16.msra.mxu0 %v5666
    %5790 = vmatprep.subr.bf16.mxu0 0
    %5791 = vmatpush2.bf16.msra.mxu0 %v5665
    %5792 = vmatprep.mubr.bf16.mxu0 %v5344
    %5793 = vmatmul.mubr.bf16.gmra.mxu0 %v5343
    %v5794 = vpop.f32.mrf.mxu0
    %v5795 = vadd.f32 %v5455, %v5794
    %v5796 = vpop.f32.mrf.mxu0
    %v5797 = vpop.f32.mrf.mxu0
    %v5798 = vpop.f32.mrf.mxu0
    %5799 = vdwg.mxu0
    %5800 = vmatprep.subr.bf16.mxu0 0
    %5801 = vmatpush1.bf16.msra.mxu0 %v5680
    %5802 = vmatprep.subr.bf16.mxu0 0
    %5803 = vmatpush1.bf16.msra.mxu0 %v5679
    %5804 = vmatprep.subr.bf16.mxu0 0
    %5805 = vmatpush1.bf16.msra.mxu0 %v5678
    %5806 = vmatprep.subr.bf16.mxu0 0
    %5807 = vmatpush1.bf16.msra.mxu0 %v5677
    %5808 = vmatprep.subr.bf16.mxu0 0
    %5809 = vmatpush1.bf16.msra.mxu0 %v5676
    %5810 = vmatprep.subr.bf16.mxu0 0
    %5811 = vmatpush1.bf16.msra.mxu0 %v5675
    %5812 = vmatprep.subr.bf16.mxu0 0
    %5813 = vmatpush1.bf16.msra.mxu0 %v5674
    %5814 = vmatprep.subr.bf16.mxu0 0
    %5815 = vmatpush1.bf16.msra.mxu0 %v5673
    %5816 = vmatprep.subr.bf16.mxu0 0
    %5817 = vmatpush2.bf16.msra.mxu0 %v5688
    %5818 = vmatprep.subr.bf16.mxu0 0
    %5819 = vmatpush2.bf16.msra.mxu0 %v5687
    %5820 = vmatprep.subr.bf16.mxu0 0
    %5821 = vmatpush2.bf16.msra.mxu0 %v5686
    %5822 = vmatprep.subr.bf16.mxu0 0
    %5823 = vmatpush2.bf16.msra.mxu0 %v5685
    %5824 = vmatprep.subr.bf16.mxu0 0
    %5825 = vmatpush2.bf16.msra.mxu0 %v5684
    %5826 = vmatprep.subr.bf16.mxu0 0
    %5827 = vmatpush2.bf16.msra.mxu0 %v5683
    %5828 = vmatprep.subr.bf16.mxu0 0
    %5829 = vmatpush2.bf16.msra.mxu0 %v5682
    %5830 = vmatprep.subr.bf16.mxu0 0
    %5831 = vmatpush2.bf16.msra.mxu0 %v5681
    %5832 = vmatprep.mubr.bf16.mxu0 %v5346
    %5833 = vmatmul.mubr.bf16.gmra.mxu0 %v5345
    %v5834 = vpop.f32.mrf.mxu0
    %v5835 = vadd.f32 %v5795, %v5834
    %v5836 = vpop.f32.mrf.mxu0
    %v5837 = vpop.f32.mrf.mxu0
    %v5838 = vpop.f32.mrf.mxu0
    %5839 = vdwg.mxu0
    %5840 = vmatprep.subr.bf16.mxu0 0
    %5841 = vmatpush1.bf16.msra.mxu0 %v5696
    %5842 = vmatprep.subr.bf16.mxu0 0
    %5843 = vmatpush1.bf16.msra.mxu0 %v5695
    %5844 = vmatprep.subr.bf16.mxu0 0
    %5845 = vmatpush1.bf16.msra.mxu0 %v5694
    %5846 = vmatprep.subr.bf16.mxu0 0
    %5847 = vmatpush1.bf16.msra.mxu0 %v5693
    %5848 = vmatprep.subr.bf16.mxu0 0
    %5849 = vmatpush1.bf16.msra.mxu0 %v5692
    %5850 = vmatprep.subr.bf16.mxu0 0
    %5851 = vmatpush1.bf16.msra.mxu0 %v5691
    %5852 = vmatprep.subr.bf16.mxu0 0
    %5853 = vmatpush1.bf16.msra.mxu0 %v5690
    %5854 = vmatprep.subr.bf16.mxu0 0
    %5855 = vmatpush1.bf16.msra.mxu0 %v5689
    %5856 = vmatprep.subr.bf16.mxu0 0
    %5857 = vmatpush2.bf16.msra.mxu0 %v5704
    %5858 = vmatprep.subr.bf16.mxu0 0
    %5859 = vmatpush2.bf16.msra.mxu0 %v5703
    %5860 = vmatprep.subr.bf16.mxu0 0
    %5861 = vmatpush2.bf16.msra.mxu0 %v5702
    %5862 = vmatprep.subr.bf16.mxu0 0
    %5863 = vmatpush2.bf16.msra.mxu0 %v5701
    %5864 = vmatprep.subr.bf16.mxu0 0
    %5865 = vmatpush2.bf16.msra.mxu0 %v5700
    %5866 = vmatprep.subr.bf16.mxu0 0
    %5867 = vmatpush2.bf16.msra.mxu0 %v5699
    %5868 = vmatprep.subr.bf16.mxu0 0
    %5869 = vmatpush2.bf16.msra.mxu0 %v5698
    %5870 = vmatprep.subr.bf16.mxu0 0
    %5871 = vmatpush2.bf16.msra.mxu0 %v5697
    %5872 = vmatprep.mubr.bf16.mxu0 %v5348
    %5873 = vmatmul.mubr.bf16.gmra.mxu0 %v5347
    %v5874 = vpop.f32.mrf.mxu0
    %v5875 = vadd.f32 %v5835, %v5874
    %v5876 = vpop.f32.mrf.mxu0
    %v5877 = vpop.f32.mrf.mxu0
    %v5878 = vpop.f32.mrf.mxu0
    %5879 = vdwg.mxu0
    %5880 = vmatprep.subr.bf16.mxu0 0
    %5881 = vmatpush1.bf16.msra.mxu0 0
    %5882 = vmatprep.subr.bf16.mxu0 0
    %5883 = vmatpush1.bf16.msra.mxu0 0
    %5884 = vmatprep.subr.bf16.mxu0 0
    %5885 = vmatpush1.bf16.msra.mxu0 0
    %5886 = vmatprep.subr.bf16.mxu0 0
    %5887 = vmatpush1.bf16.msra.mxu0 0
    %5888 = vmatprep.subr.bf16.mxu0 0
    %5889 = vmatpush1.bf16.msra.mxu0 0
    %5890 = vmatprep.subr.bf16.mxu0 0
    %5891 = vmatpush1.bf16.msra.mxu0 0
    %5892 = vmatprep.subr.bf16.mxu0 0
    %5893 = vmatpush1.bf16.msra.mxu0 %v5706
    %5894 = vmatprep.subr.bf16.mxu0 0
    %5895 = vmatpush1.bf16.msra.mxu0 %v5705
    %5896 = vmatprep.subr.bf16.mxu0 0
    %5897 = vmatpush2.bf16.msra.mxu0 0
    %5898 = vmatprep.subr.bf16.mxu0 0
    %5899 = vmatpush2.bf16.msra.mxu0 0
    %5900 = vmatprep.subr.bf16.mxu0 0
    %5901 = vmatpush2.bf16.msra.mxu0 0
    %5902 = vmatprep.subr.bf16.mxu0 0
    %5903 = vmatpush2.bf16.msra.mxu0 0
    %5904 = vmatprep.subr.bf16.mxu0 0
    %5905 = vmatpush2.bf16.msra.mxu0 0
    %5906 = vmatprep.subr.bf16.mxu0 0
    %5907 = vmatpush2.bf16.msra.mxu0 0
    %5908 = vmatprep.subr.bf16.mxu0 0
    %5909 = vmatpush2.bf16.msra.mxu0 0
    %5910 = vmatprep.subr.bf16.mxu0 0
    %5911 = vmatpush2.bf16.msra.mxu0 0
    %5912 = vmatprep.mubr.bf16.mxu0 0
    %5913 = vmatmul.mubr.bf16.gmra.mxu0 %v5758
    %v5914 = vpop.f32.mrf.mxu0
    %v5915 = vadd.f32 %v5875, %v5914
    %v5916 = vpop.f32.mrf.mxu0
    %v5917 = vpop.f32.mrf.mxu0
    %v5918 = vpop.f32.mrf.mxu0
    %5919 = vdwg.mxu0
    %v5920 = vxor.u32 %v5915, 2147483648
    %v5921 = vmul.f32 %v5920, 1.442695
    %v5922 = vpow.pop %v5921
    %v5923 = vadd.f32 %v5922, 1.0
    %v5924 = vrcp.pop %v5923
    %v5925 = vmul.f32 1.0, %v5924
    %v5926 = vpack.c.bf16 %v5925, %v5925
    %v5927 = vld [vmem:[%s7] sm:$0xf]
    %v5928 = vld [vmem:[%s7 + $0x4] sm:$0xf]
    %v5929 = vld [vmem:[%s7 + $0x8] sm:$0xf]
    %v5930 = vld [vmem:[%s7 + $0xc] sm:$0xf]
    %v5931 = vld [vmem:[%s7 + $0x10] sm:$0xf]
    %v5932 = vld [vmem:[%s7 + $0x14] sm:$0xf]
    %v5933 = vld [vmem:[%s7 + $0x18] sm:$0xf]
    %v5934 = vld [vmem:[%s7 + $0x1c] sm:$0xf]
    %v5935 = vld [vmem:[%s7 + $0x20] sm:$0xf]
    %v5936 = vld [vmem:[%s7 + $0x24] sm:$0xf]
    %v5937 = vld [vmem:[%s7 + $0x28] sm:$0xf]
    %v5938 = vld [vmem:[%s7 + $0x2c] sm:$0xf]
    %v5939 = vld [vmem:[%s7 + $0x30] sm:$0xf]
    %v5940 = vld [vmem:[%s7 + $0x34] sm:$0xf]
    %v5941 = vld [vmem:[%s7 + $0x38] sm:$0xf]
    %v5942 = vld [vmem:[%s8] sm:$0x1]
    %v5944 = vlaneseq
    %v5945 = vshrl.u32 %v5944, 7
    %v5946 = vsub.s32 0, %v5945
    %v5947 = vrot.slane %v5942, %v5946
    %v5964 = vunpack.c.l.b16 %v5927
    %v5965 = vunpack.c.l.b16 %v5928
    %v5966 = vunpack.c.l.b16 %v5929
    %v5967 = vunpack.c.l.b16 %v5930
    %v5968 = vunpack.c.l.b16 %v5931
    %v5969 = vunpack.c.l.b16 %v5932
    %v5970 = vunpack.c.l.b16 %v5933
    %v5971 = vunpack.c.l.b16 %v5934
    %v5972 = vunpack.c.l.b16 %v5935
    %v5973 = vunpack.c.l.b16 %v5936
    %v5974 = vunpack.c.l.b16 %v5937
    %v5975 = vunpack.c.l.b16 %v5938
    %v5976 = vunpack.c.l.b16 %v5939
    %v5977 = vunpack.c.l.b16 %v5940
    %v5978 = vunpack.c.l.b16 %v5941
    %v5979 = vpack.c.b16 %v5965, %v5964
    %v5980 = vpack.c.b16 %v5967, %v5966
    %v5981 = vpack.c.b16 %v5969, %v5968
    %v5982 = vpack.c.b16 %v5971, %v5970
    %v5983 = vpack.c.b16 %v5973, %v5972
    %v5984 = vpack.c.b16 %v5975, %v5974
    %v5985 = vpack.c.b16 %v5977, %v5976
    %v5986 = vpack.c.b16 %v5978, %v5978
    %v5995 = vsel %vm884, %v5926, 0
    %v5998 = vsel %vm533, %v5986, 0
    %6000 = vmatprep.subr.bf16.mxu0 0
    %6001 = vmatpush1.bf16.msra.mxu0 %v5998
    %6002 = vmatprep.subr.bf16.mxu0 0
    %6003 = vmatpush1.bf16.msra.mxu0 %v5985
    %6004 = vmatprep.subr.bf16.mxu0 0
    %6005 = vmatpush1.bf16.msra.mxu0 %v5984
    %6006 = vmatprep.subr.bf16.mxu0 0
    %6007 = vmatpush1.bf16.msra.mxu0 %v5983
    %6008 = vmatprep.subr.bf16.mxu0 0
    %6009 = vmatpush1.bf16.msra.mxu0 %v5982
    %6010 = vmatprep.subr.bf16.mxu0 0
    %6011 = vmatpush1.bf16.msra.mxu0 %v5981
    %6012 = vmatprep.subr.bf16.mxu0 0
    %6013 = vmatpush1.bf16.msra.mxu0 %v5980
    %6014 = vmatprep.subr.bf16.mxu0 0
    %6015 = vmatpush1.bf16.msra.mxu0 %v5979
    %6016 = vmatprep.subr.bf16.mxu0 0
    %6017 = vmatpush2.bf16.msra.mxu0 0
    %6018 = vmatprep.subr.bf16.mxu0 0
    %6019 = vmatpush2.bf16.msra.mxu0 0
    %6020 = vmatprep.subr.bf16.mxu0 0
    %6021 = vmatpush2.bf16.msra.mxu0 0
    %6022 = vmatprep.subr.bf16.mxu0 0
    %6023 = vmatpush2.bf16.msra.mxu0 0
    %6024 = vmatprep.subr.bf16.mxu0 0
    %6025 = vmatpush2.bf16.msra.mxu0 0
    %6026 = vmatprep.subr.bf16.mxu0 0
    %6027 = vmatpush2.bf16.msra.mxu0 0
    %6028 = vmatprep.subr.bf16.mxu0 0
    %6029 = vmatpush2.bf16.msra.mxu0 0
    %6030 = vmatprep.subr.bf16.mxu0 0
    %6031 = vmatpush2.bf16.msra.mxu0 0
    %6032 = vmatprep.mubr.bf16.mxu0 0
    %6033 = vmatmul.mubr.bf16.gmra.mxu0 %v5995
    %v6034 = vpop.f32.mrf.mxu0
    %v6035 = vadd.f32 %v5947, %v6034
    %v6036 = vpop.f32.mrf.mxu0
    %v6037 = vpop.f32.mrf.mxu0
    %v6038 = vpop.f32.mrf.mxu0
    %6039 = vdwg.mxu0
    %v6040 = vxor.u32 %v6035, 2147483648
    %v6041 = vmul.f32 %v6040, 1.442695
    %v6042 = vpow.pop %v6041
    %v6043 = vadd.f32 %v6042, 1.0
    %v6044 = vrcp.pop %v6043
    %v6045 = vmul.f32 1.0, %v6044
    %v6046 = vpack.c.bf16 %v6045, %v6045
    %v6047 = vld [vmem:[%s9] sm:$0xf]
    %v6048 = vld [vmem:[%s9 + $0x4] sm:$0xf]
    %v6049 = vld [vmem:[%s9 + $0x8] sm:$0xf]
    %v6050 = vld [vmem:[%s9 + $0xc] sm:$0xf]
    %v6051 = vld [vmem:[%s9 + $0x10] sm:$0xf]
    %v6052 = vld [vmem:[%s9 + $0x14] sm:$0xf]
    %v6053 = vld [vmem:[%s9 + $0x18] sm:$0xf]
    %v6054 = vld [vmem:[%s9 + $0x1c] sm:$0xf]
    %v6055 = vld [vmem:[%s9 + $0x20] sm:$0xf]
    %v6056 = vld [vmem:[%s9 + $0x24] sm:$0xf]
    %v6057 = vld [vmem:[%s9 + $0x28] sm:$0x3]
    %v6058 = vld [vmem:[%s10] sm:$0x1]
    %v6060 = vlaneseq
    %v6061 = vshrl.u32 %v6060, 7
    %v6062 = vsub.s32 0, %v6061
    %v6063 = vrot.slane %v6058, %v6062
    %v6076 = vunpack.c.l.b16 %v6047
    %v6077 = vunpack.c.l.b16 %v6048
    %v6078 = vunpack.c.l.b16 %v6049
    %v6079 = vunpack.c.l.b16 %v6050
    %v6080 = vunpack.c.l.b16 %v6051
    %v6081 = vunpack.c.l.b16 %v6052
    %v6082 = vunpack.c.l.b16 %v6053
    %v6083 = vunpack.c.l.b16 %v6054
    %v6084 = vunpack.c.l.b16 %v6055
    %v6085 = vunpack.c.l.b16 %v6056
    %v6086 = vunpack.c.l.b16 %v6057
    %v6087 = vpack.c.b16 %v6077, %v6076
    %v6088 = vpack.c.b16 %v6079, %v6078
    %v6089 = vpack.c.b16 %v6081, %v6080
    %v6090 = vpack.c.b16 %v6083, %v6082
    %v6091 = vpack.c.b16 %v6085, %v6084
    %v6092 = vpack.c.b16 %v6086, %v6086
    %vm6098 = vcmask 687104
    %v6100 = vsel %vm6098, %v6046, 0
    %vm6102 = vcmask 1041408
    %v6104 = vsel %vm6102, %v6092, 0
    %6106 = vmatprep.subr.bf16.mxu0 0
    %6107 = vmatpush1.bf16.msra.mxu0 0
    %6108 = vmatprep.subr.bf16.mxu0 0
    %6109 = vmatpush1.bf16.msra.mxu0 0
    %6110 = vmatprep.subr.bf16.mxu0 0
    %6111 = vmatpush1.bf16.msra.mxu0 %v6104
    %6112 = vmatprep.subr.bf16.mxu0 0
    %6113 = vmatpush1.bf16.msra.mxu0 %v6091
    %6114 = vmatprep.subr.bf16.mxu0 0
    %6115 = vmatpush1.bf16.msra.mxu0 %v6090
    %6116 = vmatprep.subr.bf16.mxu0 0
    %6117 = vmatpush1.bf16.msra.mxu0 %v6089
    %6118 = vmatprep.subr.bf16.mxu0 0
    %6119 = vmatpush1.bf16.msra.mxu0 %v6088
    %6120 = vmatprep.subr.bf16.mxu0 0
    %6121 = vmatpush1.bf16.msra.mxu0 %v6087
    %6122 = vmatprep.subr.bf16.mxu0 0
    %6123 = vmatpush2.bf16.msra.mxu0 0
    %6124 = vmatprep.subr.bf16.mxu0 0
    %6125 = vmatpush2.bf16.msra.mxu0 0
    %6126 = vmatprep.subr.bf16.mxu0 0
    %6127 = vmatpush2.bf16.msra.mxu0 0
    %6128 = vmatprep.subr.bf16.mxu0 0
    %6129 = vmatpush2.bf16.msra.mxu0 0
    %6130 = vmatprep.subr.bf16.mxu0 0
    %6131 = vmatpush2.bf16.msra.mxu0 0
    %6132 = vmatprep.subr.bf16.mxu0 0
    %6133 = vmatpush2.bf16.msra.mxu0 0
    %6134 = vmatprep.subr.bf16.mxu0 0
    %6135 = vmatpush2.bf16.msra.mxu0 0
    %6136 = vmatprep.subr.bf16.mxu0 0
    %6137 = vmatpush2.bf16.msra.mxu0 0
    %6138 = vmatprep.mubr.bf16.mxu0 0
    %6139 = vmatmul.mubr.bf16.gmra.mxu0 %v6100
    %v6140 = vpop.f32.mrf.mxu0
    %v6141 = vadd.f32 %v6063, %v6140
    %v6142 = vpop.f32.mrf.mxu0
    %v6143 = vpop.f32.mrf.mxu0
    %v6144 = vpop.f32.mrf.mxu0
    %6145 = vdwg.mxu0
    %vm6146 = vcmask 80896
    %6147 = vst.msk [vmem:[#allocation4] sm:$0xff] %vm6146, %v6141
    // Predicated region
    $region46: #{lenet_forward_impl.1} parent=1 // pred_check
      _
    $region47: #{lenet_forward_impl.1} parent=1 // pred_check_branch
      %6149 = sbr.rel (0) target = $region49
    $region48: #{lenet_forward_impl.1} parent=1 // pred_region
      %s6151 = ssub.s32 128, 128
      %6152 = vsyncadd [#allocation5], %s6151
      %s6154 = sshll.u32 [#allocation4], 4
      %s6155 = int_to_ptr.vmem [resolvable:$true] %s6154
      %6157 = dma.vmem_to_hbm [thread:$0]  %s6155, 128, %s11, [#allocation5]
    $region49: #{lenet_forward_impl.1} parent=1 // pred_fallthru
      _
    // Predicated region
    $region50: #{lenet_forward_impl.1} parent=1 // pred_check
      _
    $region51: #{lenet_forward_impl.1} parent=1 // pred_check_branch
      %6159 = sbr.rel (0) target = $region53
    $region52: #{lenet_forward_impl.1} parent=1 // pred_region
      %6160 = dma.done [#allocation5], 128
    $region53: #{lenet_forward_impl.1} parent=1 // pred_fallthru
      _
    %6161 = vsyncpa [#allocation5], 1

</llo_original>
